<compile_context>
chip_gen: v7x
topology: tpu7x:2x2x1
jax: 0.10.0
libtpu: 0.0.40
codegen_flags: <defaults>
</compile_context>

<pallas_src>
import jax
import jax.numpy as jnp
from jax import lax
from jax.experimental import pallas as pl
from jax.experimental.pallas import tpu as pltpu

HIDDEN = 768     # BERT pooler_output width  (Linear(768, 512) in ProbNet)
H1 = 512
H2 = 256
NUM_CLASS = 4
GAMMA = 2.0      # FocalLoss(gamma=2)  (hard-coded as an explicit square below)

META_LANES = 8                 # [prob_hi, prob_lo, label, 0...] appended to qv (bf16)
IN_W = HIDDEN + META_LANES     # fused input slab width (776)
W_ROWS = HIDDEN + H1           # fused bf16 weight slab: [w1p ; w2p | w2c] -> (1280, 512)
TILE_MAX = 512                 # ~10 MiB live VMEM at 512 rows -> fits 32 MiB scoped limit


def _round_up(x, m):
    return (x + m - 1) // m * m


def _choose_tile_b(B):
    """>=2 balanced tiles when possible (feeds both v7x TCs), tiles as large as
    TILE_MAX to amortize the ~0.35 us per-grid-step overhead."""
    b16 = _round_up(B, 16)
    if b16 <= 16:
        return 16
    half = _round_up((b16 + 1) // 2, 16)
    return min(TILE_MAX, half)


# ---------------------------------------------------------------------------
# Parameter packing (wrapper side)
# ---------------------------------------------------------------------------

def _pack_weight_slab(params):
    """bf16 slab: rows [0:768) = w1p (768,512); rows [768:1280) = [w2p | w2c]."""
    w1p = jnp.asarray(params["w1p"], jnp.float32).astype(jnp.bfloat16)      # (768, 512)
    w2p = jnp.asarray(params["w2p"], jnp.float32).astype(jnp.bfloat16)      # (512, 256)
    w2c = jnp.asarray(params["w2c"], jnp.float32).astype(jnp.bfloat16)      # (512, 256)
    bottom = jnp.concatenate([w2p, w2c], axis=1)                            # (512, 512)
    return jnp.concatenate([w1p, bottom], axis=0)                           # (1280, 512)


def _pack_small_slab(params, dataset_weights, num_class):
    """f32 (8 + round_up(C,8), 512) slab holding every small parameter (one DMA).

    row 0: b1p (512)                  row 1: b1c (512)
    row 2: w1c flattened (512)        row 3: [b2p(256) | b2c(256)]
    row 4: [w3p(256) | 0]             row 5: [b3c pad128 | class_w pad128 | b3p | 0]
    rows 8..8+C-1: w3c^T rows (256) padded to 512;   remaining rows zero.
    """
    C = num_class
    small_rows = 8 + _round_up(C, 8)
    f32 = jnp.float32

    def pad1d(v, n):
        v = jnp.asarray(v, f32).reshape(-1)
        return jnp.concatenate([v, jnp.zeros((n - v.shape[0],), f32)])

    rows = jnp.stack([
        jnp.asarray(params["b1p"], f32).reshape(H1),
        jnp.asarray(params["b1c"], f32).reshape(H1),
        jnp.asarray(params["w1c"], f32).reshape(H1),
        jnp.concatenate([jnp.asarray(params["b2p"], f32).reshape(H2),
                         jnp.asarray(params["b2c"], f32).reshape(H2)]),
        pad1d(params["w3p"], H1),
        jnp.concatenate([pad1d(params["b3c"], 128),
                         pad1d(dataset_weights, 128),
                         pad1d(params["b3p"], H1 - 256)]),
    ], axis=0)                                                              # (6, 512)

    w3c_t = jnp.asarray(params["w3c"], f32).T                               # (C, 256)
    w3c_rows = jnp.concatenate([w3c_t, jnp.zeros((C, H1 - H2), f32)], axis=1)

    pieces = [rows, jnp.zeros((2, H1), f32), w3c_rows]       # w3c^T starts at row 8
    tail = small_rows - 8 - C
    if tail:
        pieces.append(jnp.zeros((tail, H1), f32))
    return jnp.concatenate(pieces, axis=0)                                  # (small_rows, 512)


# ---------------------------------------------------------------------------
# Init (PyTorch nn.Linear style, uniform +/- 1/sqrt(fan_in))
# ---------------------------------------------------------------------------

def init_params(key, num_class=NUM_CLASS):
    def linear(k, fan_in, fan_out):
        kw, kb = jax.random.split(k)
        bound = 1.0 / float(fan_in) ** 0.5
        w = jax.random.uniform(kw, (fan_in, fan_out), jnp.float32, -bound, bound)
        b = jax.random.uniform(kb, (fan_out,), jnp.float32, -bound, bound)
        return w, b

    ks = jax.random.split(key, 6)
    p = {}
    p["w1p"], p["b1p"] = linear(ks[0], HIDDEN, H1)    # ProbNet Linear(768, 512)
    p["w2p"], p["b2p"] = linear(ks[1], H1, H2)        # ProbNet Linear(512, 256)
    p["w3p"], p["b3p"] = linear(ks[2], H2, 1)         # ProbNet Linear(256, 1)
    p["w1c"], p["b1c"] = linear(ks[3], 1, H1)         # ClassifyNet Linear(1, 512)
    p["w2c"], p["b2c"] = linear(ks[4], H1, H2)        # ClassifyNet Linear(512, 256)
    p["w3c"], p["b3c"] = linear(ks[5], H2, num_class) # ClassifyNet Linear(256, num_class)
    return p


# ---------------------------------------------------------------------------
# Pure-JAX reference (forward semantics of the PyTorch module)
# ---------------------------------------------------------------------------

def reference_forward(query_vector, prob_label, label, dataset_weights, params):
    f32 = jnp.float32
    qv = query_vector.astype(f32)
    h1 = jax.nn.relu(qv @ params["w1p"] + params["b1p"])
    h2 = jax.nn.relu(h1 @ params["w2p"] + params["b2p"])
    mse_logits = jax.nn.sigmoid(h2 @ params["w3p"] + params["b3p"])          # (B, 1)
    mse_loss = jnp.mean((mse_logits[:, 0] - prob_label.astype(f32)) ** 2)

    c1 = jax.nn.relu(mse_logits @ params["w1c"] + params["b1c"])
    c2 = jax.nn.relu(c1 @ params["w2c"] + params["b2c"])
    probs = jax.nn.softmax(c2 @ params["w3c"] + params["b3c"], axis=-1)      # (B, C)

    C = probs.shape[-1]
    one_hot = jax.nn.one_hot(label, C, dtype=f32)
    p_t = jnp.sum(probs * one_hot, axis=-1)
    w_t = jnp.sum(dataset_weights.astype(f32) * one_hot, axis=-1)
    cross_loss = jnp.mean(-w_t * (1.0 - p_t) ** 2 * jnp.log(p_t))
    return probs, mse_logits, cross_loss, mse_loss


# ---------------------------------------------------------------------------
# Forward (Pallas)
# ---------------------------------------------------------------------------

def bert_for_classify(query_vector, prob_label, label, dataset_weights, params,
                      tile_b=None):
    # TODO(synk): the pretrained BertModel (query_encoder) has no in-script Pallas
    # equivalent; `query_vector` stands in for its pooler_output [B, 768].
    B = int(query_vector.shape[0])
    C = int(dataset_weights.shape[-1])
    assert 1 <= C <= 128, "small-slab lane packing assumes C <= 128"
    OUT_ROWS = _round_up(C + 3, 8)                   # probs | sigmoid | focal | mse partials

    if tile_b is None:
        tile_b = _choose_tile_b(B)
    tile_b = _round_up(tile_b, 16)                   # bf16 sublane packing
    num_tiles = pl.cdiv(B, tile_b)
    B_pad = num_tiles * tile_b

    # ---- fused input slab: qv (bf16) + [prob_hi, prob_lo, label] meta lanes --
    f32 = jnp.float32
    qv_bf16 = query_vector.astype(jnp.bfloat16)                              # (B, 768)
    prob_f = prob_label.reshape(B, 1).astype(f32)
    prob_hi = prob_f.astype(jnp.bfloat16)
    prob_lo = (prob_f - prob_hi.astype(f32)).astype(jnp.bfloat16)            # hi+lo ~ f32-exact
    label_bf = label.reshape(B, 1).astype(f32).astype(jnp.bfloat16)          # exact for class ids
    meta = jnp.concatenate(
        [prob_hi, prob_lo, label_bf,
         jnp.zeros((B, META_LANES - 3), jnp.bfloat16)], axis=1)              # (B, 8)
    x = jnp.concatenate([qv_bf16, meta], axis=1)                             # (B, 776) bf16
    x = jnp.pad(x, ((0, B_pad - B), (0, 0)))                                 # (B_pad, 776)

    w_slab = _pack_weight_slab(params)                                       # (1280, 512) bf16
    s_slab = _pack_small_slab(params, dataset_weights, C)                    # (small_rows, 512) f32
    small_rows = int(s_slab.shape[0])

    # ---- kernel ------------------------------------------------------------
    def kernel(x_ref, w_ref, s_ref, out_ref):
        # static slices of the fused small-parameter slab (all tile-aligned)
        b1p = s_ref[0:1, :]                              # (1, 512)
        b1c = s_ref[1:2, :]                              # (1, 512)
        w1c = s_ref[2:3, :]                              # (1, 512)  ClassifyNet Linear(1,512) weight
        b2p = s_ref[3:4, 0:H2]                           # (1, 256)
        b2c = s_ref[3:4, H2:2 * H2]                      # (1, 256)
        w3p = s_ref[4:5, 0:H2]                           # (1, 256)  ProbNet Linear(256,1) weight^T
        b3c = s_ref[5:6, 0:C]                            # (1, C)
        cw = s_ref[5:6, 128:128 + C]                     # (1, C)    focal class weights
        b3p = s_ref[5:6, 256:257]                        # (1, 1)
        w3c_t = s_ref[8:8 + C, 0:H2]                     # (C, 256)  == w3c.T

        # fused bf16 weight slab
        w1p = w_ref[0:HIDDEN, :]                         # (768, 512) bf16
        w2p = w_ref[HIDDEN:W_ROWS, 0:H2]                 # (512, 256) bf16
        w2c = w_ref[HIDDEN:W_ROWS, H2:2 * H2]            # (512, 256) bf16

        qv = x_ref[:, 0:HIDDEN]                          # (T, 768) bf16
        prob_lab = (x_ref[:, HIDDEN:HIDDEN + 1].astype(jnp.float32)
                    + x_ref[:, HIDDEN + 1:HIDDEN + 2].astype(jnp.float32))   # (T, 1)
        label_i = x_ref[:, HIDDEN + 2:HIDDEN + 3].astype(jnp.float32).astype(jnp.int32)

        # ---- ProbNet: Linear(768,512)+ReLU -> Linear(512,256)+ReLU -> Linear(256,1) -> Sigmoid
        h1 = jnp.maximum(
            jnp.dot(qv, w1p, preferred_element_type=jnp.float32) + b1p, 0.0)           # (T, 512) f32
        h2 = jnp.maximum(
            jnp.dot(h1.astype(jnp.bfloat16), w2p,
                    preferred_element_type=jnp.float32) + b2p, 0.0)                    # (T, 256) f32
        # 256->1 projection: lane reduce (XLU), keep off the MXU.
        z = jnp.sum(h2 * w3p, axis=-1, keepdims=True) + b3p                            # (T, 1)
        mse_logits = jax.nn.sigmoid(z)                                                 # (T, 1) f32

        # valid-row mask for the padded batch tail
        row = pl.program_id(0) * tile_b + lax.broadcasted_iota(jnp.int32, (tile_b, 1), 0)
        valid = (row < B).astype(jnp.float32)                                          # (T, 1)

        # ---- MSELoss(mse_logits.squeeze(1), prob_label): partial sum (mean in wrapper)
        diff = mse_logits - prob_lab
        mse_partial = jnp.sum(diff * diff * valid, keepdims=True)                      # (1, 1)

        # ---- ClassifyNet: Linear(1,512)+ReLU -> Linear(512,256)+ReLU -> Linear(256,C) -> Softmax
        # (T,1) @ (1,512) degenerates to a broadcast multiply (VPU), keep off the MXU.
        c1 = jnp.maximum(mse_logits * w1c + b1c, 0.0)                                  # (T, 512)
        c2 = jnp.maximum(
            jnp.dot(c1.astype(jnp.bfloat16), w2c,
                    preferred_element_type=jnp.float32) + b2c, 0.0)                    # (T, 256)
        zc = lax.dot_general(c2, w3c_t, (((1,), (1,)), ((), ())),
                             preferred_element_type=jnp.float32) + b3c                 # (T, C)

        # stable softmax (divide on the EUP) + focal loss from exact log-softmax
        m = jnp.max(zc, axis=-1, keepdims=True)
        zs = zc - m
        e = jnp.exp(zs)
        se = jnp.sum(e, axis=-1, keepdims=True)
        probs = e * pl.reciprocal(se, approx=True)                                     # softmax(dim=-1)

        iota_c = lax.broadcasted_iota(jnp.int32, (tile_b, C), 1)
        one_hot = (iota_c == label_i).astype(jnp.float32)                              # (T, C)
        logp = zs - jnp.log(se)                                                        # log-softmax
        logp_t = jnp.sum(logp * one_hot, axis=-1, keepdims=True)                       # (T, 1)
        p_t = jnp.exp(logp_t)
        w_t = jnp.sum(cw * one_hot, axis=-1, keepdims=True)
        # TODO(synk): FocalLoss source not in the module; standard alpha-weighted form
        # -w[y] * (1 - p_y)^gamma * log(p_y), gamma=2, mean reduction over the batch.
        focal = -w_t * (1.0 - p_t) * (1.0 - p_t) * logp_t
        focal_partial = jnp.sum(focal * valid, keepdims=True)                          # (1, 1)

        # ---- transposed, lane-dense output slab (OUT_ROWS, T): batch on lanes,
        # 32 B/row of writeback instead of 512 B/row.
        cols = [probs,                                                                 # rows [0:C)
                mse_logits,                                                            # row  C
                jnp.broadcast_to(focal_partial, (tile_b, 1)),                          # row  C+1
                jnp.broadcast_to(mse_partial, (tile_b, 1))]                            # row  C+2
        pad_cols = OUT_ROWS - (C + 3)
        if pad_cols:
            cols.append(jnp.zeros((tile_b, pad_cols), jnp.float32))
        res = jnp.concatenate(cols, axis=-1)                                           # (T, OUT_ROWS)
        out_ref[...] = res.T                                                           # (OUT_ROWS, T)

    def _build(single_buffer_weights):
        # Resident weight slabs (constant index_map): request 1 buffer instead of
        # the default double-buffer to free ~1.3 MiB of VMEM per core.
        if single_buffer_weights:
            w_spec = pl.BlockSpec((W_ROWS, H1), lambda i: (0, 0),
                                  pipeline_mode=pl.Buffered(1))
            s_spec = pl.BlockSpec((small_rows, H1), lambda i: (0, 0),
                                  pipeline_mode=pl.Buffered(1))
        else:
            w_spec = pl.BlockSpec((W_ROWS, H1), lambda i: (0, 0))
            s_spec = pl.BlockSpec((small_rows, H1), lambda i: (0, 0))
        return pl.pallas_call(
            kernel,
            out_shape=jax.ShapeDtypeStruct((num_tiles, OUT_ROWS, tile_b), jnp.float32),
            grid=(num_tiles,),
            in_specs=[
                pl.BlockSpec((tile_b, IN_W), lambda i: (i, 0)),   # fused qv+meta tile (bf16)
                w_spec,                                           # fused bf16 weights (resident)
                s_spec,                                           # fused small params (resident)
            ],
            out_specs=pl.BlockSpec((None, OUT_ROWS, tile_b), lambda i: (i, 0, 0)),
            compiler_params=pltpu.CompilerParams(
                dimension_semantics=("parallel",),                # 2 TCs on v7x; no-op v5e/v6e
                vmem_limit_bytes=32 * 1024 * 1024,                # raise v5e 16 MiB default
            ),
        )

    try:
        out = _build(True)(x, w_slab, s_slab)
    except Exception:
        # pl.Buffered(1) not supported on this jax/libtpu build -> fall back to
        # default double-buffered resident weights (correctness unchanged).
        out = _build(False)(x, w_slab, s_slab)

    # ---- wrapper-side unpack / tiny reductions -----------------------------
    per_row = out.transpose(0, 2, 1).reshape(B_pad, OUT_ROWS)
    classify_logits = per_row[:B, :C]                             # softmax probs (B, C)
    mse_logits = per_row[:B, C:C + 1]                             # (B, 1)
    cross_loss = jnp.sum(out[:, C + 1, 0]) / float(B)             # mean focal loss
    mse_loss = jnp.sum(out[:, C + 2, 0]) / float(B)               # mean squared error
    return classify_logits, mse_logits, cross_loss, mse_loss


if __name__ == "__main__":
    def run_case(B, key):
        kp, kq, kpr, kl, kw = jax.random.split(key, 5)
        params = init_params(kp, NUM_CLASS)
        # query_vector plays the role of BERT pooler_output for a batch of B queries.
        query_vector = jax.random.normal(kq, (B, HIDDEN), jnp.float32)
        prob_label = jax.random.uniform(kpr, (B,), jnp.float32)
        label = jax.random.randint(kl, (B,), 0, NUM_CLASS, jnp.int32)
        dataset_weights = jax.random.uniform(kw, (NUM_CLASS,), jnp.float32, 0.5, 1.5)

        outs = bert_for_classify(query_vector, prob_label, label, dataset_weights, params)
        outs = jax.block_until_ready(outs)
        classify_logits, mse_logits, cross_loss, mse_loss = outs

        assert classify_logits.shape == (B, NUM_CLASS)
        assert mse_logits.shape == (B, 1)
        assert cross_loss.shape == () and mse_loss.shape == ()
        assert bool(jnp.isfinite(cross_loss)) and bool(jnp.isfinite(mse_loss))

        # pure-JAX reference check (loose tolerances: bf16 matmul operands in-kernel)
        rcl, rml, rcloss, rmloss = reference_forward(
            query_vector, prob_label, label, dataset_weights, params)
        assert bool(jnp.allclose(classify_logits, rcl, atol=2e-2, rtol=5e-2))
        assert bool(jnp.allclose(mse_logits, rml, atol=2e-2, rtol=5e-2))
        assert bool(jnp.allclose(cross_loss, rcloss, atol=2e-2, rtol=5e-2))
        assert bool(jnp.allclose(mse_loss, rmloss, atol=2e-2, rtol=5e-2))

    key = jax.random.PRNGKey(0)
    k1, k2 = jax.random.split(key)
    run_case(8, k1)    # single-tile path
    run_case(40, k2)   # multi-tile path (2 grid steps, padded tail masked)
    print("KERNEL_OK")
</pallas_src>

<mosaic_0001>
module attributes {stable_mosaic.version = 11 : i64} {
  func.func @kernel(%arg0: i32, %arg1: memref<16x776xbf16, #tpu.memory_space<vmem>>, %arg2: memref<1280x512xbf16, #tpu.memory_space<vmem>>, %arg3: memref<16x512xf32, #tpu.memory_space<vmem>>, %arg4: memref<1x8x16xf32, #tpu.memory_space<vmem>>) attributes {dimension_semantics = [#tpu.dimension_semantics<parallel>], iteration_bounds = array<i64: 1>, scalar_prefetch = 0 : i64, scratch_operands = 0 : i64, tpu.core_type = #tpu.core_type<tc>, window_params = [{transform_indices = @transform_0, window_bounds = array<i64: 16, 776>}, {pipeline_mode = #tpu.pipeline_mode<synchronous>, transform_indices = @transform_1, window_bounds = array<i64: 1280, 512>}, {pipeline_mode = #tpu.pipeline_mode<synchronous>, transform_indices = @transform_2, window_bounds = array<i64: 16, 512>}, {transform_indices = @transform_3, window_bounds = array<i64: 1, 8, 16>}]} {
    %c0 = arith.constant 0 : index
    %c0_0 = arith.constant 0 : index
    %0 = vector.load %arg3[%c0, %c0_0] : memref<16x512xf32, #tpu.memory_space<vmem>>, vector<1x512xf32>
    %c1 = arith.constant 1 : index
    %c0_1 = arith.constant 0 : index
    %1 = vector.load %arg3[%c1, %c0_1] : memref<16x512xf32, #tpu.memory_space<vmem>>, vector<1x512xf32>
    %c2 = arith.constant 2 : index
    %c0_2 = arith.constant 0 : index
    %2 = vector.load %arg3[%c2, %c0_2] : memref<16x512xf32, #tpu.memory_space<vmem>>, vector<1x512xf32>
    %c3 = arith.constant 3 : index
    %c0_3 = arith.constant 0 : index
    %3 = vector.load %arg3[%c3, %c0_3] : memref<16x512xf32, #tpu.memory_space<vmem>>, vector<1x256xf32>
    %c3_4 = arith.constant 3 : index
    %c256 = arith.constant 256 : index
    %4 = vector.load %arg3[%c3_4, %c256] : memref<16x512xf32, #tpu.memory_space<vmem>>, vector<1x256xf32>
    %c4 = arith.constant 4 : index
    %c0_5 = arith.constant 0 : index
    %5 = vector.load %arg3[%c4, %c0_5] : memref<16x512xf32, #tpu.memory_space<vmem>>, vector<1x256xf32>
    %c5 = arith.constant 5 : index
    %c0_6 = arith.constant 0 : index
    %6 = vector.load %arg3[%c5, %c0_6] : memref<16x512xf32, #tpu.memory_space<vmem>>, vector<1x4xf32>
    %c5_7 = arith.constant 5 : index
    %c128 = arith.constant 128 : index
    %7 = vector.load %arg3[%c5_7, %c128] : memref<16x512xf32, #tpu.memory_space<vmem>>, vector<1x4xf32>
    %c5_8 = arith.constant 5 : index
    %c256_9 = arith.constant 256 : index
    %8 = vector.load %arg3[%c5_8, %c256_9] : memref<16x512xf32, #tpu.memory_space<vmem>>, vector<1x1xf32>
    %c8 = arith.constant 8 : index
    %c0_10 = arith.constant 0 : index
    %9 = vector.load %arg3[%c8, %c0_10] : memref<16x512xf32, #tpu.memory_space<vmem>>, vector<4x256xf32>
    %c0_11 = arith.constant 0 : index
    %c0_12 = arith.constant 0 : index
    %10 = vector.load %arg2[%c0_11, %c0_12] : memref<1280x512xbf16, #tpu.memory_space<vmem>>, vector<768x512xbf16>
    %c768 = arith.constant 768 : index
    %c0_13 = arith.constant 0 : index
    %11 = vector.load %arg2[%c768, %c0_13] : memref<1280x512xbf16, #tpu.memory_space<vmem>>, vector<512x256xbf16>
    %c768_14 = arith.constant 768 : index
    %c256_15 = arith.constant 256 : index
    %12 = vector.load %arg2[%c768_14, %c256_15] : memref<1280x512xbf16, #tpu.memory_space<vmem>>, vector<512x256xbf16>
    %c0_16 = arith.constant 0 : index
    %c0_17 = arith.constant 0 : index
    %13 = vector.load %arg1[%c0_16, %c0_17] : memref<16x776xbf16, #tpu.memory_space<vmem>>, vector<16x768xbf16>
    %c0_18 = arith.constant 0 : index
    %c768_19 = arith.constant 768 : index
    %14 = vector.load %arg1[%c0_18, %c768_19] : memref<16x776xbf16, #tpu.memory_space<vmem>>, vector<16x1xbf16>
    %15 = arith.extf %14 : vector<16x1xbf16> to vector<16x1xf32>
    %c0_20 = arith.constant 0 : index
    %c769 = arith.constant 769 : index
    %16 = vector.load %arg1[%c0_20, %c769] : memref<16x776xbf16, #tpu.memory_space<vmem>>, vector<16x1xbf16>
    %17 = arith.extf %16 : vector<16x1xbf16> to vector<16x1xf32>
    %18 = arith.addf %15, %17 : vector<16x1xf32>
    %c0_21 = arith.constant 0 : index
    %c770 = arith.constant 770 : index
    %19 = vector.load %arg1[%c0_21, %c770] : memref<16x776xbf16, #tpu.memory_space<vmem>>, vector<16x1xbf16>
    %20 = arith.extf %19 : vector<16x1xbf16> to vector<16x1xf32>
    %21 = arith.fptosi %20 : vector<16x1xf32> to vector<16x1xi32>
    %cst = arith.constant dense<0.000000e+00> : vector<16x512xf32>
    %22 = tpu.matmul %13, %10, %cst {dimension_numbers = #tpu.dot_dimension_numbers<[1], [0], [0], [1], [0, 0, 1, 1], [], []>} : vector<16x768xbf16>, vector<768x512xbf16>, vector<16x512xf32> -> vector<16x512xf32>
    %23 = vector.broadcast %0 : vector<1x512xf32> to vector<16x512xf32>
    %24 = arith.addf %22, %23 : vector<16x512xf32>
    %cst_22 = arith.constant 0.000000e+00 : f32
    %25 = vector.broadcast %cst_22 : f32 to vector<16x512xf32>
    %26 = arith.maximumf %24, %25 : vector<16x512xf32>
    %27 = arith.truncf %26 : vector<16x512xf32> to vector<16x512xbf16>
    %cst_23 = arith.constant dense<0.000000e+00> : vector<16x256xf32>
    %28 = tpu.matmul %27, %11, %cst_23 {dimension_numbers = #tpu.dot_dimension_numbers<[1], [0], [0], [1], [0, 0, 1, 1], [], []>} : vector<16x512xbf16>, vector<512x256xbf16>, vector<16x256xf32> -> vector<16x256xf32>
    %29 = vector.broadcast %3 : vector<1x256xf32> to vector<16x256xf32>
    %30 = arith.addf %28, %29 : vector<16x256xf32>
    %cst_24 = arith.constant 0.000000e+00 : f32
    %31 = vector.broadcast %cst_24 : f32 to vector<16x256xf32>
    %32 = arith.maximumf %30, %31 : vector<16x256xf32>
    %33 = vector.broadcast %5 : vector<1x256xf32> to vector<16x256xf32>
    %34 = arith.mulf %32, %33 : vector<16x256xf32>
    %cst_25 = arith.constant dense<0.000000e+00> : vector<16xf32>
    %35 = vector.multi_reduction <add>, %34, %cst_25 [1] : vector<16x256xf32> to vector<16xf32>
    %36 = vector.shape_cast %35 : vector<16xf32> to vector<16x1xf32>
    %37 = vector.broadcast %8 : vector<1x1xf32> to vector<16x1xf32>
    %38 = arith.addf %36, %37 : vector<16x1xf32>
    %39 = arith.negf %38 : vector<16x1xf32>
    %40 = math.exp %39 : vector<16x1xf32>
    %cst_26 = arith.constant 1.000000e+00 : f32
    %41 = vector.broadcast %cst_26 : f32 to vector<16x1xf32>
    %42 = arith.addf %41, %40 : vector<16x1xf32>
    %43 = arith.divf %41, %42 : vector<16x1xf32>
    %c16_i32 = arith.constant 16 : i32
    %44 = arith.muli %arg0, %c16_i32 : i32
    %45 = tpu.iota {dimensions = array<i32: 0>} : vector<16x1xi32>
    %46 = vector.broadcast %44 : i32 to vector<16x1xi32>
    %47 = arith.addi %46, %45 : vector<16x1xi32>
    %c8_i32 = arith.constant 8 : i32
    %48 = vector.broadcast %c8_i32 : i32 to vector<16x1xi32>
    %49 = arith.cmpi slt, %47, %48 : vector<16x1xi32>
    %50 = arith.extui %49 : vector<16x1xi1> to vector<16x1xi32>
    %51 = arith.sitofp %50 : vector<16x1xi32> to vector<16x1xf32>
    %52 = arith.subf %43, %18 : vector<16x1xf32>
    %53 = arith.mulf %52, %52 : vector<16x1xf32>
    %54 = arith.mulf %53, %51 : vector<16x1xf32>
    %55 = vector.shape_cast %54 : vector<16x1xf32> to vector<1x16x1xf32>
    %cst_27 = arith.constant dense<0.000000e+00> : vector<1xf32>
    %56 = vector.multi_reduction <add>, %55, %cst_27 [1, 2] : vector<1x16x1xf32> to vector<1xf32>
    %57 = vector.shape_cast %56 : vector<1xf32> to vector<1x1x1xf32>
    %58 = vector.extract %57[0, 0, 0] : f32 from vector<1x1x1xf32>
    %59 = vector.broadcast %58 : f32 to vector<1x1xf32>
    %60 = vector.broadcast %43 : vector<16x1xf32> to vector<16x512xf32>
    %61 = vector.broadcast %2 : vector<1x512xf32> to vector<16x512xf32>
    %62 = arith.mulf %60, %61 : vector<16x512xf32>
    %63 = vector.broadcast %1 : vector<1x512xf32> to vector<16x512xf32>
    %64 = arith.addf %62, %63 : vector<16x512xf32>
    %cst_28 = arith.constant 0.000000e+00 : f32
    %65 = vector.broadcast %cst_28 : f32 to vector<16x512xf32>
    %66 = arith.maximumf %64, %65 : vector<16x512xf32>
    %67 = arith.truncf %66 : vector<16x512xf32> to vector<16x512xbf16>
    %cst_29 = arith.constant dense<0.000000e+00> : vector<16x256xf32>
    %68 = tpu.matmul %67, %12, %cst_29 {dimension_numbers = #tpu.dot_dimension_numbers<[1], [0], [0], [1], [0, 0, 1, 1], [], []>} : vector<16x512xbf16>, vector<512x256xbf16>, vector<16x256xf32> -> vector<16x256xf32>
    %69 = vector.broadcast %4 : vector<1x256xf32> to vector<16x256xf32>
    %70 = arith.addf %68, %69 : vector<16x256xf32>
    %cst_30 = arith.constant 0.000000e+00 : f32
    %71 = vector.broadcast %cst_30 : f32 to vector<16x256xf32>
    %72 = arith.maximumf %70, %71 : vector<16x256xf32>
    %cst_31 = arith.constant dense<0.000000e+00> : vector<16x4xf32>
    %73 = tpu.matmul %72, %9, %cst_31 {dimension_numbers = #tpu.dot_dimension_numbers<[1], [1], [0], [0], [0, 0, 1, 0], [], []>} : vector<16x256xf32>, vector<4x256xf32>, vector<16x4xf32> -> vector<16x4xf32>
    %74 = vector.broadcast %6 : vector<1x4xf32> to vector<16x4xf32>
    %75 = arith.addf %73, %74 : vector<16x4xf32>
    %cst_32 = arith.constant dense<0xFF800000> : vector<16xf32>
    %76 = vector.multi_reduction <maximumf>, %75, %cst_32 [1] : vector<16x4xf32> to vector<16xf32>
    %77 = vector.shape_cast %76 : vector<16xf32> to vector<16x1xf32>
    %78 = vector.broadcast %77 : vector<16x1xf32> to vector<16x4xf32>
    %79 = arith.subf %75, %78 : vector<16x4xf32>
    %80 = math.exp %79 : vector<16x4xf32>
    %cst_33 = arith.constant dense<0.000000e+00> : vector<16xf32>
    %81 = vector.multi_reduction <add>, %80, %cst_33 [1] : vector<16x4xf32> to vector<16xf32>
    %82 = vector.shape_cast %81 : vector<16xf32> to vector<16x1xf32>
    %83 = tpu.reciprocal %82 {approx = true} : vector<16x1xf32> -> vector<16x1xf32>
    %84 = vector.broadcast %83 : vector<16x1xf32> to vector<16x4xf32>
    %85 = arith.mulf %80, %84 : vector<16x4xf32>
    %86 = tpu.iota {dimensions = array<i32: 1>} : vector<16x4xi32>
    %87 = vector.broadcast %21 : vector<16x1xi32> to vector<16x4xi32>
    %88 = arith.cmpi eq, %86, %87 : vector<16x4xi32>
    %89 = arith.extui %88 : vector<16x4xi1> to vector<16x4xi32>
    %90 = arith.sitofp %89 : vector<16x4xi32> to vector<16x4xf32>
    %91 = math.log %82 : vector<16x1xf32>
    %92 = vector.broadcast %91 : vector<16x1xf32> to vector<16x4xf32>
    %93 = arith.subf %79, %92 : vector<16x4xf32>
    %94 = arith.mulf %93, %90 : vector<16x4xf32>
    %cst_34 = arith.constant dense<0.000000e+00> : vector<16xf32>
    %95 = vector.multi_reduction <add>, %94, %cst_34 [1] : vector<16x4xf32> to vector<16xf32>
    %96 = vector.shape_cast %95 : vector<16xf32> to vector<16x1xf32>
    %97 = math.exp %96 : vector<16x1xf32>
    %98 = vector.broadcast %7 : vector<1x4xf32> to vector<16x4xf32>
    %99 = arith.mulf %98, %90 : vector<16x4xf32>
    %cst_35 = arith.constant dense<0.000000e+00> : vector<16xf32>
    %100 = vector.multi_reduction <add>, %99, %cst_35 [1] : vector<16x4xf32> to vector<16xf32>
    %101 = vector.shape_cast %100 : vector<16xf32> to vector<16x1xf32>
    %cst_36 = arith.constant 0.000000e+00 : f32
    %102 = vector.broadcast %cst_36 : f32 to vector<16x1xf32>
    %103 = arith.subf %102, %101 : vector<16x1xf32>
    %cst_37 = arith.constant 1.000000e+00 : f32
    %104 = vector.broadcast %cst_37 : f32 to vector<16x1xf32>
    %105 = arith.subf %104, %97 : vector<16x1xf32>
    %106 = arith.mulf %103, %105 : vector<16x1xf32>
    %cst_38 = arith.constant 1.000000e+00 : f32
    %107 = vector.broadcast %cst_38 : f32 to vector<16x1xf32>
    %108 = arith.subf %107, %97 : vector<16x1xf32>
    %109 = arith.mulf %106, %108 : vector<16x1xf32>
    %110 = arith.mulf %109, %96 : vector<16x1xf32>
    %111 = arith.mulf %110, %51 : vector<16x1xf32>
    %112 = vector.shape_cast %111 : vector<16x1xf32> to vector<1x16x1xf32>
    %cst_39 = arith.constant dense<0.000000e+00> : vector<1xf32>
    %113 = vector.multi_reduction <add>, %112, %cst_39 [1, 2] : vector<1x16x1xf32> to vector<1xf32>
    %114 = vector.shape_cast %113 : vector<1xf32> to vector<1x1x1xf32>
    %115 = vector.extract %114[0, 0, 0] : f32 from vector<1x1x1xf32>
    %116 = vector.broadcast %115 : f32 to vector<1x1xf32>
    %117 = vector.shape_cast %116 : vector<1x1xf32> to vector<1x1xf32>
    %118 = vector.broadcast %117 : vector<1x1xf32> to vector<16x1xf32>
    %119 = vector.shape_cast %59 : vector<1x1xf32> to vector<1x1xf32>
    %120 = vector.broadcast %119 : vector<1x1xf32> to vector<16x1xf32>
    %cst_40 = arith.constant 0.000000e+00 : f32
    %121 = vector.broadcast %cst_40 : f32 to vector<16x1xf32>
    %122 = tpu.concatenate %85, %43, %118, %120, %121 in 1 : vector<16x4xf32>, vector<16x1xf32>, vector<16x1xf32>, vector<16x1xf32>, vector<16x1xf32> -> vector<16x8xf32>
    %123 = tpu.transpose %122, [1, 0] : vector<16x8xf32> -> vector<8x16xf32>
    %c0_41 = arith.constant 0 : index
    %c0_42 = arith.constant 0 : index
    %c0_43 = arith.constant 0 : index
    %124 = vector.load %arg4[%c0_41, %c0_42, %c0_43] : memref<1x8x16xf32, #tpu.memory_space<vmem>>, vector<1x8x16xf32>
    %125 = vector.shape_cast %124 : vector<1x8x16xf32> to vector<8x16xf32>
    %126 = vector.shape_cast %123 : vector<8x16xf32> to vector<1x8x16xf32>
    tpu.vector_store %arg4[%c0_41, %c0_42, %c0_43], %126 {strides = array<i32>} : memref<1x8x16xf32, #tpu.memory_space<vmem>>, vector<1x8x16xf32>,
    return
  }
  func.func @transform_0(%arg0: i32) -> (i32, i32) {
    %c0_i32 = arith.constant 0 : i32
    %c0_i32_0 = arith.constant 0 : i32
    return %arg0, %c0_i32 : i32, i32
  }
  func.func @transform_1(%arg0: i32) -> (i32, i32) {
    %c0_i32 = arith.constant 0 : i32
    %c0_i32_0 = arith.constant 0 : i32
    %c0_i32_1 = arith.constant 0 : i32
    return %c0_i32, %c0_i32_0 : i32, i32
  }
  func.func @transform_2(%arg0: i32) -> (i32, i32) {
    %c0_i32 = arith.constant 0 : i32
    %c0_i32_0 = arith.constant 0 : i32
    %c0_i32_1 = arith.constant 0 : i32
    return %c0_i32, %c0_i32_0 : i32, i32
  }
  func.func @transform_3(%arg0: i32) -> (i32, i32, i32) {
    %c0_i32 = arith.constant 0 : i32
    %c0_i32_0 = arith.constant 0 : i32
    %c0_i32_1 = arith.constant 0 : i32
    return %arg0, %c0_i32, %c0_i32_0 : i32, i32, i32
  }
}

module attributes {stable_mosaic.version = 11 : i64} {
  func.func @kernel(%arg0: i32, %arg1: memref<16x776xbf16, #tpu.memory_space<vmem>>, %arg2: memref<1280x512xbf16, #tpu.memory_space<vmem>>, %arg3: memref<16x512xf32, #tpu.memory_space<vmem>>, %arg4: memref<1x8x16xf32, #tpu.memory_space<vmem>>) attributes {dimension_semantics = [#tpu.dimension_semantics<parallel>], iteration_bounds = array<i64: 1>, scalar_prefetch = 0 : i64, scratch_operands = 0 : i64, tpu.core_type = #tpu.core_type<tc>, window_params = [{transform_indices = @transform_0, window_bounds = array<i64: 16, 776>}, {pipeline_mode = #tpu.pipeline_mode<synchronous>, transform_indices = @transform_1, window_bounds = array<i64: 1280, 512>}, {pipeline_mode = #tpu.pipeline_mode<synchronous>, transform_indices = @transform_2, window_bounds = array<i64: 16, 512>}, {transform_indices = @transform_3, window_bounds = array<i64: 1, 8, 16>}]} {
    %c0 = arith.constant 0 : index
    %c0_0 = arith.constant 0 : index
    %0 = vector.load %arg3[%c0, %c0_0] : memref<16x512xf32, #tpu.memory_space<vmem>>, vector<1x512xf32>
    %c1 = arith.constant 1 : index
    %c0_1 = arith.constant 0 : index
    %1 = vector.load %arg3[%c1, %c0_1] : memref<16x512xf32, #tpu.memory_space<vmem>>, vector<1x512xf32>
    %c2 = arith.constant 2 : index
    %c0_2 = arith.constant 0 : index
    %2 = vector.load %arg3[%c2, %c0_2] : memref<16x512xf32, #tpu.memory_space<vmem>>, vector<1x512xf32>
    %c3 = arith.constant 3 : index
    %c0_3 = arith.constant 0 : index
    %3 = vector.load %arg3[%c3, %c0_3] : memref<16x512xf32, #tpu.memory_space<vmem>>, vector<1x256xf32>
    %c3_4 = arith.constant 3 : index
    %c256 = arith.constant 256 : index
    %4 = vector.load %arg3[%c3_4, %c256] : memref<16x512xf32, #tpu.memory_space<vmem>>, vector<1x256xf32>
    %c4 = arith.constant 4 : index
    %c0_5 = arith.constant 0 : index
    %5 = vector.load %arg3[%c4, %c0_5] : memref<16x512xf32, #tpu.memory_space<vmem>>, vector<1x256xf32>
    %c5 = arith.constant 5 : index
    %c0_6 = arith.constant 0 : index
    %6 = vector.load %arg3[%c5, %c0_6] : memref<16x512xf32, #tpu.memory_space<vmem>>, vector<1x4xf32>
    %c5_7 = arith.constant 5 : index
    %c128 = arith.constant 128 : index
    %7 = vector.load %arg3[%c5_7, %c128] : memref<16x512xf32, #tpu.memory_space<vmem>>, vector<1x4xf32>
    %c5_8 = arith.constant 5 : index
    %c256_9 = arith.constant 256 : index
    %8 = vector.load %arg3[%c5_8, %c256_9] : memref<16x512xf32, #tpu.memory_space<vmem>>, vector<1x1xf32>
    %c8 = arith.constant 8 : index
    %c0_10 = arith.constant 0 : index
    %9 = vector.load %arg3[%c8, %c0_10] : memref<16x512xf32, #tpu.memory_space<vmem>>, vector<4x256xf32>
    %c0_11 = arith.constant 0 : index
    %c0_12 = arith.constant 0 : index
    %10 = vector.load %arg2[%c0_11, %c0_12] : memref<1280x512xbf16, #tpu.memory_space<vmem>>, vector<768x512xbf16>
    %c768 = arith.constant 768 : index
    %c0_13 = arith.constant 0 : index
    %11 = vector.load %arg2[%c768, %c0_13] : memref<1280x512xbf16, #tpu.memory_space<vmem>>, vector<512x256xbf16>
    %c768_14 = arith.constant 768 : index
    %c256_15 = arith.constant 256 : index
    %12 = vector.load %arg2[%c768_14, %c256_15] : memref<1280x512xbf16, #tpu.memory_space<vmem>>, vector<512x256xbf16>
    %c0_16 = arith.constant 0 : index
    %c0_17 = arith.constant 0 : index
    %13 = vector.load %arg1[%c0_16, %c0_17] : memref<16x776xbf16, #tpu.memory_space<vmem>>, vector<16x768xbf16>
    %c0_18 = arith.constant 0 : index
    %c768_19 = arith.constant 768 : index
    %14 = vector.load %arg1[%c0_18, %c768_19] : memref<16x776xbf16, #tpu.memory_space<vmem>>, vector<16x1xbf16>
    %15 = arith.extf %14 : vector<16x1xbf16> to vector<16x1xf32>
    %c0_20 = arith.constant 0 : index
    %c769 = arith.constant 769 : index
    %16 = vector.load %arg1[%c0_20, %c769] : memref<16x776xbf16, #tpu.memory_space<vmem>>, vector<16x1xbf16>
    %17 = arith.extf %16 : vector<16x1xbf16> to vector<16x1xf32>
    %18 = arith.addf %15, %17 : vector<16x1xf32>
    %c0_21 = arith.constant 0 : index
    %c770 = arith.constant 770 : index
    %19 = vector.load %arg1[%c0_21, %c770] : memref<16x776xbf16, #tpu.memory_space<vmem>>, vector<16x1xbf16>
    %20 = arith.extf %19 : vector<16x1xbf16> to vector<16x1xf32>
    %21 = arith.fptosi %20 : vector<16x1xf32> to vector<16x1xi32>
    %cst = arith.constant dense<0.000000e+00> : vector<16x512xf32>
    %22 = tpu.matmul %13, %10, %cst {dimension_numbers = #tpu.dot_dimension_numbers<[1], [0], [0], [1], [0, 0, 1, 1], [], []>} : vector<16x768xbf16>, vector<768x512xbf16>, vector<16x512xf32> -> vector<16x512xf32>
    %23 = vector.broadcast %0 : vector<1x512xf32> to vector<16x512xf32>
    %24 = arith.addf %22, %23 : vector<16x512xf32>
    %cst_22 = arith.constant 0.000000e+00 : f32
    %25 = vector.broadcast %cst_22 : f32 to vector<16x512xf32>
    %26 = arith.maximumf %24, %25 : vector<16x512xf32>
    %27 = arith.truncf %26 : vector<16x512xf32> to vector<16x512xbf16>
    %cst_23 = arith.constant dense<0.000000e+00> : vector<16x256xf32>
    %28 = tpu.matmul %27, %11, %cst_23 {dimension_numbers = #tpu.dot_dimension_numbers<[1], [0], [0], [1], [0, 0, 1, 1], [], []>} : vector<16x512xbf16>, vector<512x256xbf16>, vector<16x256xf32> -> vector<16x256xf32>
    %29 = vector.broadcast %3 : vector<1x256xf32> to vector<16x256xf32>
    %30 = arith.addf %28, %29 : vector<16x256xf32>
    %cst_24 = arith.constant 0.000000e+00 : f32
    %31 = vector.broadcast %cst_24 : f32 to vector<16x256xf32>
    %32 = arith.maximumf %30, %31 : vector<16x256xf32>
    %33 = vector.broadcast %5 : vector<1x256xf32> to vector<16x256xf32>
    %34 = arith.mulf %32, %33 : vector<16x256xf32>
    %cst_25 = arith.constant dense<0.000000e+00> : vector<16xf32>
    %35 = vector.multi_reduction <add>, %34, %cst_25 [1] : vector<16x256xf32> to vector<16xf32>
    %36 = vector.shape_cast %35 : vector<16xf32> to vector<16x1xf32>
    %37 = vector.broadcast %8 : vector<1x1xf32> to vector<16x1xf32>
    %38 = arith.addf %36, %37 : vector<16x1xf32>
    %39 = arith.negf %38 : vector<16x1xf32>
    %40 = math.exp %39 : vector<16x1xf32>
    %cst_26 = arith.constant 1.000000e+00 : f32
    %41 = vector.broadcast %cst_26 : f32 to vector<16x1xf32>
    %42 = arith.addf %41, %40 : vector<16x1xf32>
    %43 = arith.divf %41, %42 : vector<16x1xf32>
    %c16_i32 = arith.constant 16 : i32
    %44 = arith.muli %arg0, %c16_i32 : i32
    %45 = tpu.iota {dimensions = array<i32: 0>} : vector<16x1xi32>
    %46 = vector.broadcast %44 : i32 to vector<16x1xi32>
    %47 = arith.addi %46, %45 : vector<16x1xi32>
    %c8_i32 = arith.constant 8 : i32
    %48 = vector.broadcast %c8_i32 : i32 to vector<16x1xi32>
    %49 = arith.cmpi slt, %47, %48 : vector<16x1xi32>
    %50 = arith.extui %49 : vector<16x1xi1> to vector<16x1xi32>
    %51 = arith.sitofp %50 : vector<16x1xi32> to vector<16x1xf32>
    %52 = arith.subf %43, %18 : vector<16x1xf32>
    %53 = arith.mulf %52, %52 : vector<16x1xf32>
    %54 = arith.mulf %53, %51 : vector<16x1xf32>
    %55 = vector.shape_cast %54 : vector<16x1xf32> to vector<1x16x1xf32>
    %cst_27 = arith.constant dense<0.000000e+00> : vector<1xf32>
    %56 = vector.multi_reduction <add>, %55, %cst_27 [1, 2] : vector<1x16x1xf32> to vector<1xf32>
    %57 = vector.shape_cast %56 : vector<1xf32> to vector<1x1x1xf32>
    %58 = vector.extract %57[0, 0, 0] : f32 from vector<1x1x1xf32>
    %59 = vector.broadcast %58 : f32 to vector<1x1xf32>
    %60 = vector.broadcast %43 : vector<16x1xf32> to vector<16x512xf32>
    %61 = vector.broadcast %2 : vector<1x512xf32> to vector<16x512xf32>
    %62 = arith.mulf %60, %61 : vector<16x512xf32>
    %63 = vector.broadcast %1 : vector<1x512xf32> to vector<16x512xf32>
    %64 = arith.addf %62, %63 : vector<16x512xf32>
    %cst_28 = arith.constant 0.000000e+00 : f32
    %65 = vector.broadcast %cst_28 : f32 to vector<16x512xf32>
    %66 = arith.maximumf %64, %65 : vector<16x512xf32>
    %67 = arith.truncf %66 : vector<16x512xf32> to vector<16x512xbf16>
    %cst_29 = arith.constant dense<0.000000e+00> : vector<16x256xf32>
    %68 = tpu.matmul %67, %12, %cst_29 {dimension_numbers = #tpu.dot_dimension_numbers<[1], [0], [0], [1], [0, 0, 1, 1], [], []>} : vector<16x512xbf16>, vector<512x256xbf16>, vector<16x256xf32> -> vector<16x256xf32>
    %69 = vector.broadcast %4 : vector<1x256xf32> to vector<16x256xf32>
    %70 = arith.addf %68, %69 : vector<16x256xf32>
    %cst_30 = arith.constant 0.000000e+00 : f32
    %71 = vector.broadcast %cst_30 : f32 to vector<16x256xf32>
    %72 = arith.maximumf %70, %71 : vector<16x256xf32>
    %cst_31 = arith.constant dense<0.000000e+00> : vector<16x4xf32>
    %73 = tpu.matmul %72, %9, %cst_31 {dimension_numbers = #tpu.dot_dimension_numbers<[1], [1], [0], [0], [0, 0, 1, 0], [], []>} : vector<16x256xf32>, vector<4x256xf32>, vector<16x4xf32> -> vector<16x4xf32>
    %74 = vector.broadcast %6 : vector<1x4xf32> to vector<16x4xf32>
    %75 = arith.addf %73, %74 : vector<16x4xf32>
    %cst_32 = arith.constant dense<0xFF800000> : vector<16xf32>
    %76 = vector.multi_reduction <maximumf>, %75, %cst_32 [1] : vector<16x4xf32> to vector<16xf32>
    %77 = vector.shape_cast %76 : vector<16xf32> to vector<16x1xf32>
    %78 = vector.broadcast %77 : vector<16x1xf32> to vector<16x4xf32>
    %79 = arith.subf %75, %78 : vector<16x4xf32>
    %80 = math.exp %79 : vector<16x4xf32>
    %cst_33 = arith.constant dense<0.000000e+00> : vector<16xf32>
    %81 = vector.multi_reduction <add>, %80, %cst_33 [1] : vector<16x4xf32> to vector<16xf32>
    %82 = vector.shape_cast %81 : vector<16xf32> to vector<16x1xf32>
    %83 = tpu.reciprocal %82 {approx = true} : vector<16x1xf32> -> vector<16x1xf32>
    %84 = vector.broadcast %83 : vector<16x1xf32> to vector<16x4xf32>
    %85 = arith.mulf %80, %84 : vector<16x4xf32>
    %86 = tpu.iota {dimensions = array<i32: 1>} : vector<16x4xi32>
    %87 = vector.broadcast %21 : vector<16x1xi32> to vector<16x4xi32>
    %88 = arith.cmpi eq, %86, %87 : vector<16x4xi32>
    %89 = arith.extui %88 : vector<16x4xi1> to vector<16x4xi32>
    %90 = arith.sitofp %89 : vector<16x4xi32> to vector<16x4xf32>
    %91 = math.log %82 : vector<16x1xf32>
    %92 = vector.broadcast %91 : vector<16x1xf32> to vector<16x4xf32>
    %93 = arith.subf %79, %92 : vector<16x4xf32>
    %94 = arith.mulf %93, %90 : vector<16x4xf32>
    %cst_34 = arith.constant dense<0.000000e+00> : vector<16xf32>
    %95 = vector.multi_reduction <add>, %94, %cst_34 [1] : vector<16x4xf32> to vector<16xf32>
    %96 = vector.shape_cast %95 : vector<16xf32> to vector<16x1xf32>
    %97 = math.exp %96 : vector<16x1xf32>
    %98 = vector.broadcast %7 : vector<1x4xf32> to vector<16x4xf32>
    %99 = arith.mulf %98, %90 : vector<16x4xf32>
    %cst_35 = arith.constant dense<0.000000e+00> : vector<16xf32>
    %100 = vector.multi_reduction <add>, %99, %cst_35 [1] : vector<16x4xf32> to vector<16xf32>
    %101 = vector.shape_cast %100 : vector<16xf32> to vector<16x1xf32>
    %cst_36 = arith.constant 0.000000e+00 : f32
    %102 = vector.broadcast %cst_36 : f32 to vector<16x1xf32>
    %103 = arith.subf %102, %101 : vector<16x1xf32>
    %cst_37 = arith.constant 1.000000e+00 : f32
    %104 = vector.broadcast %cst_37 : f32 to vector<16x1xf32>
    %105 = arith.subf %104, %97 : vector<16x1xf32>
    %106 = arith.mulf %103, %105 : vector<16x1xf32>
    %cst_38 = arith.constant 1.000000e+00 : f32
    %107 = vector.broadcast %cst_38 : f32 to vector<16x1xf32>
    %108 = arith.subf %107, %97 : vector<16x1xf32>
    %109 = arith.mulf %106, %108 : vector<16x1xf32>
    %110 = arith.mulf %109, %96 : vector<16x1xf32>
    %111 = arith.mulf %110, %51 : vector<16x1xf32>
    %112 = vector.shape_cast %111 : vector<16x1xf32> to vector<1x16x1xf32>
    %cst_39 = arith.constant dense<0.000000e+00> : vector<1xf32>
    %113 = vector.multi_reduction <add>, %112, %cst_39 [1, 2] : vector<1x16x1xf32> to vector<1xf32>
    %114 = vector.shape_cast %113 : vector<1xf32> to vector<1x1x1xf32>
    %115 = vector.extract %114[0, 0, 0] : f32 from vector<1x1x1xf32>
    %116 = vector.broadcast %115 : f32 to vector<1x1xf32>
    %117 = vector.shape_cast %116 : vector<1x1xf32> to vector<1x1xf32>
    %118 = vector.broadcast %117 : vector<1x1xf32> to vector<16x1xf32>
    %119 = vector.shape_cast %59 : vector<1x1xf32> to vector<1x1xf32>
    %120 = vector.broadcast %119 : vector<1x1xf32> to vector<16x1xf32>
    %cst_40 = arith.constant 0.000000e+00 : f32
    %121 = vector.broadcast %cst_40 : f32 to vector<16x1xf32>
    %122 = tpu.concatenate %85, %43, %118, %120, %121 in 1 : vector<16x4xf32>, vector<16x1xf32>, vector<16x1xf32>, vector<16x1xf32>, vector<16x1xf32> -> vector<16x8xf32>
    %123 = tpu.transpose %122, [1, 0] : vector<16x8xf32> -> vector<8x16xf32>
    %c0_41 = arith.constant 0 : index
    %c0_42 = arith.constant 0 : index
    %c0_43 = arith.constant 0 : index
    %124 = vector.load %arg4[%c0_41, %c0_42, %c0_43] : memref<1x8x16xf32, #tpu.memory_space<vmem>>, vector<1x8x16xf32>
    %125 = vector.shape_cast %124 : vector<1x8x16xf32> to vector<8x16xf32>
    %126 = vector.shape_cast %123 : vector<8x16xf32> to vector<1x8x16xf32>
    tpu.vector_store %arg4[%c0_41, %c0_42, %c0_43], %126 {strides = array<i32>} : memref<1x8x16xf32, #tpu.memory_space<vmem>>, vector<1x8x16xf32>,
    return
  }
  func.func @transform_0(%arg0: i32) -> (i32, i32) {
    %c0_i32 = arith.constant 0 : i32
    %c0_i32_0 = arith.constant 0 : i32
    return %arg0, %c0_i32 : i32, i32
  }
  func.func @transform_1(%arg0: i32) -> (i32, i32) {
    %c0_i32 = arith.constant 0 : i32
    %c0_i32_0 = arith.constant 0 : i32
    %c0_i32_1 = arith.constant 0 : i32
    return %c0_i32, %c0_i32_0 : i32, i32
  }
  func.func @transform_2(%arg0: i32) -> (i32, i32) {
    %c0_i32 = arith.constant 0 : i32
    %c0_i32_0 = arith.constant 0 : i32
    %c0_i32_1 = arith.constant 0 : i32
    return %c0_i32, %c0_i32_0 : i32, i32
  }
  func.func @transform_3(%arg0: i32) -> (i32, i32, i32) {
    %c0_i32 = arith.constant 0 : i32
    %c0_i32_0 = arith.constant 0 : i32
    %c0_i32_1 = arith.constant 0 : i32
    return %arg0, %c0_i32, %c0_i32_0 : i32, i32, i32
  }
}

</mosaic_0001>

<llo_original>
// kernel: tpu_custom_call.1
$region0: #{tpu_custom_call.1}
  #allocation0 [shape = 'u32[]', space=smem, size = 0x4, offset = 0x4, fixed_abs, tag = 'smem constant byte address 0x4 - core index']
  #allocation1 [shape = 'u32[144,128]{1,0:T(1,128)}', space=vmem, size = 0x12000, scoped, tag = 'internal scratch']
  %s0 = inlined_call_operand.hbm [shape: bf16[16,776], index: 0, kind: input, shape index: {}]
  %s1 = inlined_call_operand.hbm [shape: bf16[1280,512], index: 1, kind: input, shape index: {}]
  %s2 = inlined_call_operand.hbm [shape: f32[16,512], index: 2, kind: input, shape index: {}]
  %s3 = inlined_call_operand.hbm [shape: f32[1,8,16], index: 3, kind: output, shape index: {}]
  %s4 = sld [smem:[#allocation0]]
  $region34: #{tpu_custom_call.1} parent=0
    _
  %s6 = ssub.s32 1, %s4
  %s7 = scalar_select 0, %s6, %s4
  $region1: #{tpu_custom_call.1} parent=0
    #allocation2 [shape = 'u8[28672]{0}', space=vmem, size = 0x7000, scoped, tag = 'input window, operand 0, single buffered']
    #allocation3 [shape = 's32[1]{0}', space=sflag, size = 0x4, scoped, tag = 'scoped memory for tpu_custom_call.1']
    #allocation4 [shape = 's32[1]{0}', space=sflag, size = 0x4, scoped, tag = 'scoped memory for tpu_custom_call.1']
    #allocation5 [shape = 'u8[1310720]{0}', space=vmem, size = 0x140000, scoped, tag = 'input window, operand 1, single buffered']
    #allocation6 [shape = 's32[1]{0}', space=sflag, size = 0x4, scoped, tag = 'scoped memory for tpu_custom_call.1']
    #allocation7 [shape = 'u8[32768]{0}', space=vmem, size = 0x8000, scoped, tag = 'input window, operand 2, single buffered']
    #allocation8 [shape = 'u8[4096]{0}', space=vmem, size = 0x1000, scoped, tag = 'output window, operand 0, single buffered']
    %8 = vsyncpa [#allocation3], 0
    %9 = vsyncpa [#allocation6], 0
    %10 = vsyncpa [#allocation4], 0
    // Predicated region
    $region2: #{tpu_custom_call.1} parent=1 // pred_check
      _
    $region3: #{tpu_custom_call.1} parent=1 // pred_check_branch
      %12 = sbr.rel (0) target = $region5
    $region4: #{tpu_custom_call.1} parent=1 // pred_region
      %s14 = ssub.s32 896, 896
      %15 = vsyncadd [#allocation3], %s14
      %s16 = sshll.u32 [#allocation2], 4
      %s17 = int_to_ptr.vmem [resolvable:$true] %s16
      %22 = dma.hbm_to_vmem [thread:$0]  %s0, 896, %s17, [#allocation3], 448, 448, 28
    $region5: #{tpu_custom_call.1} parent=1 // pred_fallthru
      _
    // Predicated region
    $region6: #{tpu_custom_call.1} parent=1 // pred_check
      _
    $region7: #{tpu_custom_call.1} parent=1 // pred_check_branch
      %24 = sbr.rel (0) target = $region9
    $region8: #{tpu_custom_call.1} parent=1 // pred_region
      %s26 = ssub.s32 40960, 40960
      %27 = vsyncadd [#allocation6], %s26
      %s28 = sshll.u32 [#allocation5], 4
      %s29 = int_to_ptr.vmem [resolvable:$true] %s28
      %34 = dma.hbm_to_vmem [thread:$0]  %s1, 40960, %s29, [#allocation6], 256, 256, 16
    $region9: #{tpu_custom_call.1} parent=1 // pred_fallthru
      _
    // Predicated region
    $region10: #{tpu_custom_call.1} parent=1 // pred_check
      _
    $region11: #{tpu_custom_call.1} parent=1 // pred_check_branch
      %36 = sbr.rel (0) target = $region13
    $region12: #{tpu_custom_call.1} parent=1 // pred_region
      %s38 = ssub.s32 1024, 1024
      %39 = vsyncadd [#allocation6], %s38
      %s40 = sshll.u32 [#allocation7], 4
      %s41 = int_to_ptr.vmem [resolvable:$true] %s40
      %46 = dma.hbm_to_vmem [thread:$0]  %s2, 1024, %s41, [#allocation6], 512, 512, 32
    $region13: #{tpu_custom_call.1} parent=1 // pred_fallthru
      _
    // Predicated region
    $region14: #{tpu_custom_call.1} parent=1 // pred_check
      _
    $region15: #{tpu_custom_call.1} parent=1 // pred_check_branch
      %48 = sbr.rel (0) target = $region17
    $region16: #{tpu_custom_call.1} parent=1 // pred_region
      %49 = dma.done [#allocation3], 896
    $region17: #{tpu_custom_call.1} parent=1 // pred_fallthru
      _
    // Predicated region
    $region18: #{tpu_custom_call.1} parent=1 // pred_check
      _
    $region19: #{tpu_custom_call.1} parent=1 // pred_check_branch
      %51 = sbr.rel (0) target = $region21
    $region20: #{tpu_custom_call.1} parent=1 // pred_region
      %52 = dma.done [#allocation6], 40960
    $region21: #{tpu_custom_call.1} parent=1 // pred_fallthru
      _
    // Predicated region
    $region22: #{tpu_custom_call.1} parent=1 // pred_check
      _
    $region23: #{tpu_custom_call.1} parent=1 // pred_check_branch
      %54 = sbr.rel (0) target = $region25
    $region24: #{tpu_custom_call.1} parent=1 // pred_region
      %55 = dma.done [#allocation6], 1024
    $region25: #{tpu_custom_call.1} parent=1 // pred_fallthru
      _
    %v56 = vld [vmem:[#allocation7] ss:$8 sm:$0xf]
    %s57 = scalar_lea.vmem [#allocation7], 1
    %v58 = vld [vmem:[%s57] ss:$8 sm:$0xf]
    %s59 = scalar_lea.vmem [#allocation7], 2
    %v60 = vld [vmem:[%s59] ss:$8 sm:$0xf]
    %s61 = scalar_lea.vmem [#allocation7], 3
    %v62 = vld [vmem:[%s61] ss:$8 sm:$0x3]
    %s63 = scalar_lea.vmem [#allocation7], 19
    %v64 = vld [vmem:[%s63] ss:$8 sm:$0x3]
    %s65 = scalar_lea.vmem [#allocation7], 4
    %v66 = vld [vmem:[%s65] ss:$8 sm:$0x3]
    %v67 = vld [vmem:[#allocation7 + $0x5] ss:$0 sm:$0xff]
    %v68 = vld [vmem:[#allocation7 + $0xd] ss:$0 sm:$0xff]
    %v69 = vld [vmem:[#allocation7 + $0x15] ss:$0 sm:$0xff]
    %v70 = vld [vmem:[#allocation7 + $0x20] sm:$0xf]
    %v71 = vld [vmem:[#allocation7 + $0x28] sm:$0xf]
    %v72 = vld [vmem:[#allocation5] sm:$0xff]
    %v73 = vld [vmem:[#allocation5 + $0x8] sm:$0xff]
    %v74 = vld [vmem:[#allocation5 + $0x10] sm:$0xff]
    %v75 = vld [vmem:[#allocation5 + $0x18] sm:$0xff]
    %v76 = vld [vmem:[#allocation5 + $0x20] sm:$0xff]
    %v77 = vld [vmem:[#allocation5 + $0x28] sm:$0xff]
    %v78 = vld [vmem:[#allocation5 + $0x30] sm:$0xff]
    %v79 = vld [vmem:[#allocation5 + $0x38] sm:$0xff]
    %v80 = vld [vmem:[#allocation5 + $0x40] sm:$0xff]
    %v81 = vld [vmem:[#allocation5 + $0x48] sm:$0xff]
    %v82 = vld [vmem:[#allocation5 + $0x50] sm:$0xff]
    %v83 = vld [vmem:[#allocation5 + $0x58] sm:$0xff]
    %v84 = vld [vmem:[#allocation5 + $0x60] sm:$0xff]
    %v85 = vld [vmem:[#allocation5 + $0x68] sm:$0xff]
    %v86 = vld [vmem:[#allocation5 + $0x70] sm:$0xff]
    %v87 = vld [vmem:[#allocation5 + $0x78] sm:$0xff]
    %v88 = vld [vmem:[#allocation5 + $0x80] sm:$0xff]
    %v89 = vld [vmem:[#allocation5 + $0x88] sm:$0xff]
    %v90 = vld [vmem:[#allocation5 + $0x90] sm:$0xff]
    %v91 = vld [vmem:[#allocation5 + $0x98] sm:$0xff]
    %v92 = vld [vmem:[#allocation5 + $0xa0] sm:$0xff]
    %v93 = vld [vmem:[#allocation5 + $0xa8] sm:$0xff]
    %v94 = vld [vmem:[#allocation5 + $0xb0] sm:$0xff]
    %v95 = vld [vmem:[#allocation5 + $0xb8] sm:$0xff]
    %v96 = vld [vmem:[#allocation5 + $0xc0] sm:$0xff]
    %v97 = vld [vmem:[#allocation5 + $0xc8] sm:$0xff]
    %v98 = vld [vmem:[#allocation5 + $0xd0] sm:$0xff]
    %v99 = vld [vmem:[#allocation5 + $0xd8] sm:$0xff]
    %v100 = vld [vmem:[#allocation5 + $0xe0] sm:$0xff]
    %v101 = vld [vmem:[#allocation5 + $0xe8] sm:$0xff]
    %v102 = vld [vmem:[#allocation5 + $0xf0] sm:$0xff]
    %v103 = vld [vmem:[#allocation5 + $0xf8] sm:$0xff]
    %v104 = vld [vmem:[#allocation5 + $0x100] sm:$0xff]
    %v105 = vld [vmem:[#allocation5 + $0x108] sm:$0xff]
    %v106 = vld [vmem:[#allocation5 + $0x110] sm:$0xff]
    %v107 = vld [vmem:[#allocation5 + $0x118] sm:$0xff]
    %v108 = vld [vmem:[#allocation5 + $0x120] sm:$0xff]
    %v109 = vld [vmem:[#allocation5 + $0x128] sm:$0xff]
    %v110 = vld [vmem:[#allocation5 + $0x130] sm:$0xff]
    %v111 = vld [vmem:[#allocation5 + $0x138] sm:$0xff]
    %v112 = vld [vmem:[#allocation5 + $0x140] sm:$0xff]
    %v113 = vld [vmem:[#allocation5 + $0x148] sm:$0xff]
    %v114 = vld [vmem:[#allocation5 + $0x150] sm:$0xff]
    %v115 = vld [vmem:[#allocation5 + $0x158] sm:$0xff]
    %v116 = vld [vmem:[#allocation5 + $0x160] sm:$0xff]
    %v117 = vld [vmem:[#allocation5 + $0x168] sm:$0xff]
    %v118 = vld [vmem:[#allocation5 + $0x170] sm:$0xff]
    %v119 = vld [vmem:[#allocation5 + $0x178] sm:$0xff]
    %v120 = vld [vmem:[#allocation5 + $0x180] sm:$0xff]
    %v121 = vld [vmem:[#allocation5 + $0x188] sm:$0xff]
    %v122 = vld [vmem:[#allocation5 + $0x190] sm:$0xff]
    %v123 = vld [vmem:[#allocation5 + $0x198] sm:$0xff]
    %v124 = vld [vmem:[#allocation5 + $0x1a0] sm:$0xff]
    %v125 = vld [vmem:[#allocation5 + $0x1a8] sm:$0xff]
    %v126 = vld [vmem:[#allocation5 + $0x1b0] sm:$0xff]
    %v127 = vld [vmem:[#allocation5 + $0x1b8] sm:$0xff]
    %v128 = vld [vmem:[#allocation5 + $0x1c0] sm:$0xff]
    %v129 = vld [vmem:[#allocation5 + $0x1c8] sm:$0xff]
    %v130 = vld [vmem:[#allocation5 + $0x1d0] sm:$0xff]
    %v131 = vld [vmem:[#allocation5 + $0x1d8] sm:$0xff]
    %v132 = vld [vmem:[#allocation5 + $0x1e0] sm:$0xff]
    %v133 = vld [vmem:[#allocation5 + $0x1e8] sm:$0xff]
    %v134 = vld [vmem:[#allocation5 + $0x1f0] sm:$0xff]
    %v135 = vld [vmem:[#allocation5 + $0x1f8] sm:$0xff]
    %v136 = vld [vmem:[#allocation5 + $0x200] sm:$0xff]
    %v137 = vld [vmem:[#allocation5 + $0x208] sm:$0xff]
    %v138 = vld [vmem:[#allocation5 + $0x210] sm:$0xff]
    %v139 = vld [vmem:[#allocation5 + $0x218] sm:$0xff]
    %v140 = vld [vmem:[#allocation5 + $0x220] sm:$0xff]
    %v141 = vld [vmem:[#allocation5 + $0x228] sm:$0xff]
    %v142 = vld [vmem:[#allocation5 + $0x230] sm:$0xff]
    %v143 = vld [vmem:[#allocation5 + $0x238] sm:$0xff]
    %v144 = vld [vmem:[#allocation5 + $0x240] sm:$0xff]
    %v145 = vld [vmem:[#allocation5 + $0x248] sm:$0xff]
    %v146 = vld [vmem:[#allocation5 + $0x250] sm:$0xff]
    %v147 = vld [vmem:[#allocation5 + $0x258] sm:$0xff]
    %v148 = vld [vmem:[#allocation5 + $0x260] sm:$0xff]
    %v149 = vld [vmem:[#allocation5 + $0x268] sm:$0xff]
    %v150 = vld [vmem:[#allocation5 + $0x270] sm:$0xff]
    %v151 = vld [vmem:[#allocation5 + $0x278] sm:$0xff]
    %v152 = vld [vmem:[#allocation5 + $0x280] sm:$0xff]
    %v153 = vld [vmem:[#allocation5 + $0x288] sm:$0xff]
    %v154 = vld [vmem:[#allocation5 + $0x290] sm:$0xff]
    %v155 = vld [vmem:[#allocation5 + $0x298] sm:$0xff]
    %v156 = vld [vmem:[#allocation5 + $0x2a0] sm:$0xff]
    %v157 = vld [vmem:[#allocation5 + $0x2a8] sm:$0xff]
    %v158 = vld [vmem:[#allocation5 + $0x2b0] sm:$0xff]
    %v159 = vld [vmem:[#allocation5 + $0x2b8] sm:$0xff]
    %v160 = vld [vmem:[#allocation5 + $0x2c0] sm:$0xff]
    %v161 = vld [vmem:[#allocation5 + $0x2c8] sm:$0xff]
    %v162 = vld [vmem:[#allocation5 + $0x2d0] sm:$0xff]
    %v163 = vld [vmem:[#allocation5 + $0x2d8] sm:$0xff]
    %v164 = vld [vmem:[#allocation5 + $0x2e0] sm:$0xff]
    %v165 = vld [vmem:[#allocation5 + $0x2e8] sm:$0xff]
    %v166 = vld [vmem:[#allocation5 + $0x2f0] sm:$0xff]
    %v167 = vld [vmem:[#allocation5 + $0x2f8] sm:$0xff]
    %v168 = vld [vmem:[#allocation5 + $0x300] sm:$0xff]
    %v169 = vld [vmem:[#allocation5 + $0x308] sm:$0xff]
    %v170 = vld [vmem:[#allocation5 + $0x310] sm:$0xff]
    %v171 = vld [vmem:[#allocation5 + $0x318] sm:$0xff]
    %v172 = vld [vmem:[#allocation5 + $0x320] sm:$0xff]
    %v173 = vld [vmem:[#allocation5 + $0x328] sm:$0xff]
    %v174 = vld [vmem:[#allocation5 + $0x330] sm:$0xff]
    %v175 = vld [vmem:[#allocation5 + $0x338] sm:$0xff]
    %v176 = vld [vmem:[#allocation5 + $0x340] sm:$0xff]
    %v177 = vld [vmem:[#allocation5 + $0x348] sm:$0xff]
    %v178 = vld [vmem:[#allocation5 + $0x350] sm:$0xff]
    %v179 = vld [vmem:[#allocation5 + $0x358] sm:$0xff]
    %v180 = vld [vmem:[#allocation5 + $0x360] sm:$0xff]
    %v181 = vld [vmem:[#allocation5 + $0x368] sm:$0xff]
    %v182 = vld [vmem:[#allocation5 + $0x370] sm:$0xff]
    %v183 = vld [vmem:[#allocation5 + $0x378] sm:$0xff]
    %v184 = vld [vmem:[#allocation5 + $0x380] sm:$0xff]
    %v185 = vld [vmem:[#allocation5 + $0x388] sm:$0xff]
    %v186 = vld [vmem:[#allocation5 + $0x390] sm:$0xff]
    %v187 = vld [vmem:[#allocation5 + $0x398] sm:$0xff]
    %v188 = vld [vmem:[#allocation5 + $0x3a0] sm:$0xff]
    %v189 = vld [vmem:[#allocation5 + $0x3a8] sm:$0xff]
    %v190 = vld [vmem:[#allocation5 + $0x3b0] sm:$0xff]
    %v191 = vld [vmem:[#allocation5 + $0x3b8] sm:$0xff]
    %v192 = vld [vmem:[#allocation5 + $0x3c0] sm:$0xff]
    %v193 = vld [vmem:[#allocation5 + $0x3c8] sm:$0xff]
    %v194 = vld [vmem:[#allocation5 + $0x3d0] sm:$0xff]
    %v195 = vld [vmem:[#allocation5 + $0x3d8] sm:$0xff]
    %v196 = vld [vmem:[#allocation5 + $0x3e0] sm:$0xff]
    %v197 = vld [vmem:[#allocation5 + $0x3e8] sm:$0xff]
    %v198 = vld [vmem:[#allocation5 + $0x3f0] sm:$0xff]
    %v199 = vld [vmem:[#allocation5 + $0x3f8] sm:$0xff]
    %v200 = vld [vmem:[#allocation5 + $0x400] sm:$0xff]
    %v201 = vld [vmem:[#allocation5 + $0x408] sm:$0xff]
    %v202 = vld [vmem:[#allocation5 + $0x410] sm:$0xff]
    %v203 = vld [vmem:[#allocation5 + $0x418] sm:$0xff]
    %v204 = vld [vmem:[#allocation5 + $0x420] sm:$0xff]
    %v205 = vld [vmem:[#allocation5 + $0x428] sm:$0xff]
    %v206 = vld [vmem:[#allocation5 + $0x430] sm:$0xff]
    %v207 = vld [vmem:[#allocation5 + $0x438] sm:$0xff]
    %v208 = vld [vmem:[#allocation5 + $0x440] sm:$0xff]
    %v209 = vld [vmem:[#allocation5 + $0x448] sm:$0xff]
    %v210 = vld [vmem:[#allocation5 + $0x450] sm:$0xff]
    %v211 = vld [vmem:[#allocation5 + $0x458] sm:$0xff]
    %v212 = vld [vmem:[#allocation5 + $0x460] sm:$0xff]
    %v213 = vld [vmem:[#allocation5 + $0x468] sm:$0xff]
    %v214 = vld [vmem:[#allocation5 + $0x470] sm:$0xff]
    %v215 = vld [vmem:[#allocation5 + $0x478] sm:$0xff]
    %v216 = vld [vmem:[#allocation5 + $0x480] sm:$0xff]
    %v217 = vld [vmem:[#allocation5 + $0x488] sm:$0xff]
    %v218 = vld [vmem:[#allocation5 + $0x490] sm:$0xff]
    %v219 = vld [vmem:[#allocation5 + $0x498] sm:$0xff]
    %v220 = vld [vmem:[#allocation5 + $0x4a0] sm:$0xff]
    %v221 = vld [vmem:[#allocation5 + $0x4a8] sm:$0xff]
    %v222 = vld [vmem:[#allocation5 + $0x4b0] sm:$0xff]
    %v223 = vld [vmem:[#allocation5 + $0x4b8] sm:$0xff]
    %v224 = vld [vmem:[#allocation5 + $0x4c0] sm:$0xff]
    %v225 = vld [vmem:[#allocation5 + $0x4c8] sm:$0xff]
    %v226 = vld [vmem:[#allocation5 + $0x4d0] sm:$0xff]
    %v227 = vld [vmem:[#allocation5 + $0x4d8] sm:$0xff]
    %v228 = vld [vmem:[#allocation5 + $0x4e0] sm:$0xff]
    %v229 = vld [vmem:[#allocation5 + $0x4e8] sm:$0xff]
    %v230 = vld [vmem:[#allocation5 + $0x4f0] sm:$0xff]
    %v231 = vld [vmem:[#allocation5 + $0x4f8] sm:$0xff]
    %v232 = vld [vmem:[#allocation5 + $0x500] sm:$0xff]
    %v233 = vld [vmem:[#allocation5 + $0x508] sm:$0xff]
    %v234 = vld [vmem:[#allocation5 + $0x510] sm:$0xff]
    %v235 = vld [vmem:[#allocation5 + $0x518] sm:$0xff]
    %v236 = vld [vmem:[#allocation5 + $0x520] sm:$0xff]
    %v237 = vld [vmem:[#allocation5 + $0x528] sm:$0xff]
    %v238 = vld [vmem:[#allocation5 + $0x530] sm:$0xff]
    %v239 = vld [vmem:[#allocation5 + $0x538] sm:$0xff]
    %v240 = vld [vmem:[#allocation5 + $0x540] sm:$0xff]
    %v241 = vld [vmem:[#allocation5 + $0x548] sm:$0xff]
    %v242 = vld [vmem:[#allocation5 + $0x550] sm:$0xff]
    %v243 = vld [vmem:[#allocation5 + $0x558] sm:$0xff]
    %v244 = vld [vmem:[#allocation5 + $0x560] sm:$0xff]
    %v245 = vld [vmem:[#allocation5 + $0x568] sm:$0xff]
    %v246 = vld [vmem:[#allocation5 + $0x570] sm:$0xff]
    %v247 = vld [vmem:[#allocation5 + $0x578] sm:$0xff]
    %v248 = vld [vmem:[#allocation5 + $0x580] sm:$0xff]
    %v249 = vld [vmem:[#allocation5 + $0x588] sm:$0xff]
    %v250 = vld [vmem:[#allocation5 + $0x590] sm:$0xff]
    %v251 = vld [vmem:[#allocation5 + $0x598] sm:$0xff]
    %v252 = vld [vmem:[#allocation5 + $0x5a0] sm:$0xff]
    %v253 = vld [vmem:[#allocation5 + $0x5a8] sm:$0xff]
    %v254 = vld [vmem:[#allocation5 + $0x5b0] sm:$0xff]
    %v255 = vld [vmem:[#allocation5 + $0x5b8] sm:$0xff]
    %v256 = vld [vmem:[#allocation5 + $0x5c0] sm:$0xff]
    %v257 = vld [vmem:[#allocation5 + $0x5c8] sm:$0xff]
    %v258 = vld [vmem:[#allocation5 + $0x5d0] sm:$0xff]
    %v259 = vld [vmem:[#allocation5 + $0x5d8] sm:$0xff]
    %v260 = vld [vmem:[#allocation5 + $0x5e0] sm:$0xff]
    %v261 = vld [vmem:[#allocation5 + $0x5e8] sm:$0xff]
    %v262 = vld [vmem:[#allocation5 + $0x5f0] sm:$0xff]
    %v263 = vld [vmem:[#allocation5 + $0x5f8] sm:$0xff]
    %v264 = vld [vmem:[#allocation5 + $0x600] sm:$0xff]
    %v265 = vld [vmem:[#allocation5 + $0x610] sm:$0xff]
    %v266 = vld [vmem:[#allocation5 + $0x620] sm:$0xff]
    %v267 = vld [vmem:[#allocation5 + $0x630] sm:$0xff]
    %v268 = vld [vmem:[#allocation5 + $0x640] sm:$0xff]
    %v269 = vld [vmem:[#allocation5 + $0x650] sm:$0xff]
    %v270 = vld [vmem:[#allocation5 + $0x660] sm:$0xff]
    %v271 = vld [vmem:[#allocation5 + $0x670] sm:$0xff]
    %v272 = vld [vmem:[#allocation5 + $0x680] sm:$0xff]
    %v273 = vld [vmem:[#allocation5 + $0x690] sm:$0xff]
    %v274 = vld [vmem:[#allocation5 + $0x6a0] sm:$0xff]
    %v275 = vld [vmem:[#allocation5 + $0x6b0] sm:$0xff]
    %v276 = vld [vmem:[#allocation5 + $0x6c0] sm:$0xff]
    %v277 = vld [vmem:[#allocation5 + $0x6d0] sm:$0xff]
    %v278 = vld [vmem:[#allocation5 + $0x6e0] sm:$0xff]
    %v279 = vld [vmem:[#allocation5 + $0x6f0] sm:$0xff]
    %v280 = vld [vmem:[#allocation5 + $0x700] sm:$0xff]
    %v281 = vld [vmem:[#allocation5 + $0x710] sm:$0xff]
    %v282 = vld [vmem:[#allocation5 + $0x720] sm:$0xff]
    %v283 = vld [vmem:[#allocation5 + $0x730] sm:$0xff]
    %v284 = vld [vmem:[#allocation5 + $0x740] sm:$0xff]
    %v285 = vld [vmem:[#allocation5 + $0x750] sm:$0xff]
    %v286 = vld [vmem:[#allocation5 + $0x760] sm:$0xff]
    %v287 = vld [vmem:[#allocation5 + $0x770] sm:$0xff]
    %v288 = vld [vmem:[#allocation5 + $0x780] sm:$0xff]
    %v289 = vld [vmem:[#allocation5 + $0x790] sm:$0xff]
    %v290 = vld [vmem:[#allocation5 + $0x7a0] sm:$0xff]
    %v291 = vld [vmem:[#allocation5 + $0x7b0] sm:$0xff]
    %v292 = vld [vmem:[#allocation5 + $0x7c0] sm:$0xff]
    %v293 = vld [vmem:[#allocation5 + $0x7d0] sm:$0xff]
    %v294 = vld [vmem:[#allocation5 + $0x7e0] sm:$0xff]
    %v295 = vld [vmem:[#allocation5 + $0x7f0] sm:$0xff]
    %v296 = vld [vmem:[#allocation5 + $0x800] sm:$0xff]
    %v297 = vld [vmem:[#allocation5 + $0x810] sm:$0xff]
    %v298 = vld [vmem:[#allocation5 + $0x820] sm:$0xff]
    %v299 = vld [vmem:[#allocation5 + $0x830] sm:$0xff]
    %v300 = vld [vmem:[#allocation5 + $0x840] sm:$0xff]
    %v301 = vld [vmem:[#allocation5 + $0x850] sm:$0xff]
    %v302 = vld [vmem:[#allocation5 + $0x860] sm:$0xff]
    %v303 = vld [vmem:[#allocation5 + $0x870] sm:$0xff]
    %v304 = vld [vmem:[#allocation5 + $0x880] sm:$0xff]
    %v305 = vld [vmem:[#allocation5 + $0x890] sm:$0xff]
    %v306 = vld [vmem:[#allocation5 + $0x8a0] sm:$0xff]
    %v307 = vld [vmem:[#allocation5 + $0x8b0] sm:$0xff]
    %v308 = vld [vmem:[#allocation5 + $0x8c0] sm:$0xff]
    %v309 = vld [vmem:[#allocation5 + $0x8d0] sm:$0xff]
    %v310 = vld [vmem:[#allocation5 + $0x8e0] sm:$0xff]
    %v311 = vld [vmem:[#allocation5 + $0x8f0] sm:$0xff]
    %v312 = vld [vmem:[#allocation5 + $0x900] sm:$0xff]
    %v313 = vld [vmem:[#allocation5 + $0x910] sm:$0xff]
    %v314 = vld [vmem:[#allocation5 + $0x920] sm:$0xff]
    %v315 = vld [vmem:[#allocation5 + $0x930] sm:$0xff]
    %v316 = vld [vmem:[#allocation5 + $0x940] sm:$0xff]
    %v317 = vld [vmem:[#allocation5 + $0x950] sm:$0xff]
    %v318 = vld [vmem:[#allocation5 + $0x960] sm:$0xff]
    %v319 = vld [vmem:[#allocation5 + $0x970] sm:$0xff]
    %v320 = vld [vmem:[#allocation5 + $0x980] sm:$0xff]
    %v321 = vld [vmem:[#allocation5 + $0x990] sm:$0xff]
    %v322 = vld [vmem:[#allocation5 + $0x9a0] sm:$0xff]
    %v323 = vld [vmem:[#allocation5 + $0x9b0] sm:$0xff]
    %v324 = vld [vmem:[#allocation5 + $0x9c0] sm:$0xff]
    %v325 = vld [vmem:[#allocation5 + $0x9d0] sm:$0xff]
    %v326 = vld [vmem:[#allocation5 + $0x9e0] sm:$0xff]
    %v327 = vld [vmem:[#allocation5 + $0x9f0] sm:$0xff]
    %v328 = vld [vmem:[#allocation5 + $0x608] sm:$0xff]
    %v329 = vld [vmem:[#allocation5 + $0x618] sm:$0xff]
    %v330 = vld [vmem:[#allocation5 + $0x628] sm:$0xff]
    %v331 = vld [vmem:[#allocation5 + $0x638] sm:$0xff]
    %v332 = vld [vmem:[#allocation5 + $0x648] sm:$0xff]
    %v333 = vld [vmem:[#allocation5 + $0x658] sm:$0xff]
    %v334 = vld [vmem:[#allocation5 + $0x668] sm:$0xff]
    %v335 = vld [vmem:[#allocation5 + $0x678] sm:$0xff]
    %v336 = vld [vmem:[#allocation5 + $0x688] sm:$0xff]
    %v337 = vld [vmem:[#allocation5 + $0x698] sm:$0xff]
    %v338 = vld [vmem:[#allocation5 + $0x6a8] sm:$0xff]
    %v339 = vld [vmem:[#allocation5 + $0x6b8] sm:$0xff]
    %v340 = vld [vmem:[#allocation5 + $0x6c8] sm:$0xff]
    %v341 = vld [vmem:[#allocation5 + $0x6d8] sm:$0xff]
    %v342 = vld [vmem:[#allocation5 + $0x6e8] sm:$0xff]
    %v343 = vld [vmem:[#allocation5 + $0x6f8] sm:$0xff]
    %v344 = vld [vmem:[#allocation5 + $0x708] sm:$0xff]
    %v345 = vld [vmem:[#allocation5 + $0x718] sm:$0xff]
    %v346 = vld [vmem:[#allocation5 + $0x728] sm:$0xff]
    %v347 = vld [vmem:[#allocation5 + $0x738] sm:$0xff]
    %v348 = vld [vmem:[#allocation5 + $0x748] sm:$0xff]
    %v349 = vld [vmem:[#allocation5 + $0x758] sm:$0xff]
    %v350 = vld [vmem:[#allocation5 + $0x768] sm:$0xff]
    %v351 = vld [vmem:[#allocation5 + $0x778] sm:$0xff]
    %v352 = vld [vmem:[#allocation5 + $0x788] sm:$0xff]
    %v353 = vld [vmem:[#allocation5 + $0x798] sm:$0xff]
    %v354 = vld [vmem:[#allocation5 + $0x7a8] sm:$0xff]
    %v355 = vld [vmem:[#allocation5 + $0x7b8] sm:$0xff]
    %v356 = vld [vmem:[#allocation5 + $0x7c8] sm:$0xff]
    %v357 = vld [vmem:[#allocation5 + $0x7d8] sm:$0xff]
    %v358 = vld [vmem:[#allocation5 + $0x7e8] sm:$0xff]
    %v359 = vld [vmem:[#allocation5 + $0x7f8] sm:$0xff]
    %v360 = vld [vmem:[#allocation5 + $0x808] sm:$0xff]
    %v361 = vld [vmem:[#allocation5 + $0x818] sm:$0xff]
    %v362 = vld [vmem:[#allocation5 + $0x828] sm:$0xff]
    %v363 = vld [vmem:[#allocation5 + $0x838] sm:$0xff]
    %v364 = vld [vmem:[#allocation5 + $0x848] sm:$0xff]
    %v365 = vld [vmem:[#allocation5 + $0x858] sm:$0xff]
    %v366 = vld [vmem:[#allocation5 + $0x868] sm:$0xff]
    %v367 = vld [vmem:[#allocation5 + $0x878] sm:$0xff]
    %v368 = vld [vmem:[#allocation5 + $0x888] sm:$0xff]
    %v369 = vld [vmem:[#allocation5 + $0x898] sm:$0xff]
    %v370 = vld [vmem:[#allocation5 + $0x8a8] sm:$0xff]
    %v371 = vld [vmem:[#allocation5 + $0x8b8] sm:$0xff]
    %v372 = vld [vmem:[#allocation5 + $0x8c8] sm:$0xff]
    %v373 = vld [vmem:[#allocation5 + $0x8d8] sm:$0xff]
    %v374 = vld [vmem:[#allocation5 + $0x8e8] sm:$0xff]
    %v375 = vld [vmem:[#allocation5 + $0x8f8] sm:$0xff]
    %v376 = vld [vmem:[#allocation5 + $0x908] sm:$0xff]
    %v377 = vld [vmem:[#allocation5 + $0x918] sm:$0xff]
    %v378 = vld [vmem:[#allocation5 + $0x928] sm:$0xff]
    %v379 = vld [vmem:[#allocation5 + $0x938] sm:$0xff]
    %v380 = vld [vmem:[#allocation5 + $0x948] sm:$0xff]
    %v381 = vld [vmem:[#allocation5 + $0x958] sm:$0xff]
    %v382 = vld [vmem:[#allocation5 + $0x968] sm:$0xff]
    %v383 = vld [vmem:[#allocation5 + $0x978] sm:$0xff]
    %v384 = vld [vmem:[#allocation5 + $0x988] sm:$0xff]
    %v385 = vld [vmem:[#allocation5 + $0x998] sm:$0xff]
    %v386 = vld [vmem:[#allocation5 + $0x9a8] sm:$0xff]
    %v387 = vld [vmem:[#allocation5 + $0x9b8] sm:$0xff]
    %v388 = vld [vmem:[#allocation5 + $0x9c8] sm:$0xff]
    %v389 = vld [vmem:[#allocation5 + $0x9d8] sm:$0xff]
    %v390 = vld [vmem:[#allocation5 + $0x9e8] sm:$0xff]
    %v391 = vld [vmem:[#allocation5 + $0x9f8] sm:$0xff]
    %v392 = vld [vmem:[#allocation2] sm:$0xff]
    %v393 = vld [vmem:[#allocation2 + $0x8] sm:$0xff]
    %v394 = vld [vmem:[#allocation2 + $0x10] sm:$0xff]
    %v395 = vld [vmem:[#allocation2 + $0x1c] sm:$0xff]
    %v396 = vld [vmem:[#allocation2 + $0x24] sm:$0xff]
    %v397 = vld [vmem:[#allocation2 + $0x2c] sm:$0xff]
    %v398 = vld [vmem:[#allocation2 + $0x18] sm:$0xf]
    %v399 = vld [vmem:[#allocation2 + $0x34] sm:$0xf]
    %v400 = vunpack.c.l.bf16 %v398
    %v401 = vunpack.c.l.bf16 %v399
    %404 = vrot.lane.b32.xlu0 %v400, 127
    %v405 = vpop.permute.xlu0 %404
    %406 = vrot.lane.b32.xlu0 %v401, 127
    %v407 = vpop.permute.xlu0 %406
    %v410 = vadd.f32 %v400, %v405
    %v411 = vadd.f32 %v401, %v407
    %v412 = vcvt.f32.s32.to.zero.pseudo %v400
    %v413 = vcvt.f32.s32.to.zero.pseudo %v401
    %v415 = vlaneseq
    %v416 = vshrl.u32 %v415, 7
    %v417 = vsub.s32 0, %v416
    %v418 = vrot.slane %v56, %v417
    %v419 = vlaneseq
    %v420 = vshrl.u32 %v419, 7
    %v421 = vsub.s32 1, %v420
    %v422 = vrot.slane %v56, %v421
    %v423 = vlaneseq
    %v424 = vshrl.u32 %v423, 7
    %v425 = vsub.s32 2, %v424
    %v426 = vrot.slane %v56, %v425
    %v427 = vlaneseq
    %v428 = vshrl.u32 %v427, 7
    %v429 = vsub.s32 3, %v428
    %v430 = vrot.slane %v56, %v429
    %v441 = vunpack.c.l.b16 %v392
    %v442 = vunpack.c.h.b16 %v392
    %v443 = vunpack.c.l.b16 %v393
    %v444 = vunpack.c.h.b16 %v393
    %v445 = vunpack.c.l.b16 %v394
    %v446 = vunpack.c.h.b16 %v394
    %v447 = vunpack.c.l.b16 %v395
    %v448 = vunpack.c.h.b16 %v395
    %v449 = vunpack.c.l.b16 %v396
    %v450 = vunpack.c.h.b16 %v396
    %v451 = vunpack.c.l.b16 %v397
    %v452 = vunpack.c.h.b16 %v397
    %v453 = vpack.c.b16 %v447, %v441
    %v454 = vpack.c.b16 %v448, %v442
    %v455 = vpack.c.b16 %v449, %v443
    %v456 = vpack.c.b16 %v450, %v444
    %v457 = vpack.c.b16 %v451, %v445
    %v458 = vpack.c.b16 %v452, %v446
    %v657 = vunpack.c.l.b16 %v72
    %v658 = vunpack.c.h.b16 %v72
    %v659 = vunpack.c.l.b16 %v73
    %v660 = vunpack.c.h.b16 %v73
    %v661 = vunpack.c.l.b16 %v74
    %v662 = vunpack.c.h.b16 %v74
    %v663 = vunpack.c.l.b16 %v75
    %v664 = vunpack.c.h.b16 %v75
    %v665 = vunpack.c.l.b16 %v76
    %v666 = vunpack.c.h.b16 %v76
    %v667 = vunpack.c.l.b16 %v77
    %v668 = vunpack.c.h.b16 %v77
    %v669 = vunpack.c.l.b16 %v78
    %v670 = vunpack.c.h.b16 %v78
    %v671 = vunpack.c.l.b16 %v79
    %v672 = vunpack.c.h.b16 %v79
    %v673 = vunpack.c.l.b16 %v80
    %v674 = vunpack.c.h.b16 %v80
    %v675 = vunpack.c.l.b16 %v81
    %v676 = vunpack.c.h.b16 %v81
    %v677 = vunpack.c.l.b16 %v82
    %v678 = vunpack.c.h.b16 %v82
    %v679 = vunpack.c.l.b16 %v83
    %v680 = vunpack.c.h.b16 %v83
    %v681 = vunpack.c.l.b16 %v84
    %v682 = vunpack.c.h.b16 %v84
    %v683 = vunpack.c.l.b16 %v85
    %v684 = vunpack.c.h.b16 %v85
    %v685 = vunpack.c.l.b16 %v86
    %v686 = vunpack.c.h.b16 %v86
    %v687 = vunpack.c.l.b16 %v87
    %v688 = vunpack.c.h.b16 %v87
    %v689 = vunpack.c.l.b16 %v88
    %v690 = vunpack.c.h.b16 %v88
    %v691 = vunpack.c.l.b16 %v89
    %v692 = vunpack.c.h.b16 %v89
    %v693 = vunpack.c.l.b16 %v90
    %v694 = vunpack.c.h.b16 %v90
    %v695 = vunpack.c.l.b16 %v91
    %v696 = vunpack.c.h.b16 %v91
    %v697 = vunpack.c.l.b16 %v92
    %v698 = vunpack.c.h.b16 %v92
    %v699 = vunpack.c.l.b16 %v93
    %v700 = vunpack.c.h.b16 %v93
    %v701 = vunpack.c.l.b16 %v94
    %v702 = vunpack.c.h.b16 %v94
    %v703 = vunpack.c.l.b16 %v95
    %v704 = vunpack.c.h.b16 %v95
    %v705 = vunpack.c.l.b16 %v96
    %v706 = vunpack.c.h.b16 %v96
    %v707 = vunpack.c.l.b16 %v97
    %v708 = vunpack.c.h.b16 %v97
    %v709 = vunpack.c.l.b16 %v98
    %v710 = vunpack.c.h.b16 %v98
    %v711 = vunpack.c.l.b16 %v99
    %v712 = vunpack.c.h.b16 %v99
    %v713 = vunpack.c.l.b16 %v100
    %v714 = vunpack.c.h.b16 %v100
    %v715 = vunpack.c.l.b16 %v101
    %v716 = vunpack.c.h.b16 %v101
    %v717 = vunpack.c.l.b16 %v102
    %v718 = vunpack.c.h.b16 %v102
    %v719 = vunpack.c.l.b16 %v103
    %v720 = vunpack.c.h.b16 %v103
    %v721 = vunpack.c.l.b16 %v104
    %v722 = vunpack.c.h.b16 %v104
    %v723 = vunpack.c.l.b16 %v105
    %v724 = vunpack.c.h.b16 %v105
    %v725 = vunpack.c.l.b16 %v106
    %v726 = vunpack.c.h.b16 %v106
    %v727 = vunpack.c.l.b16 %v107
    %v728 = vunpack.c.h.b16 %v107
    %v729 = vunpack.c.l.b16 %v108
    %v730 = vunpack.c.h.b16 %v108
    %v731 = vunpack.c.l.b16 %v109
    %v732 = vunpack.c.h.b16 %v109
    %v733 = vunpack.c.l.b16 %v110
    %v734 = vunpack.c.h.b16 %v110
    %v735 = vunpack.c.l.b16 %v111
    %v736 = vunpack.c.h.b16 %v111
    %v737 = vunpack.c.l.b16 %v112
    %v738 = vunpack.c.h.b16 %v112
    %v739 = vunpack.c.l.b16 %v113
    %v740 = vunpack.c.h.b16 %v113
    %v741 = vunpack.c.l.b16 %v114
    %v742 = vunpack.c.h.b16 %v114
    %v743 = vunpack.c.l.b16 %v115
    %v744 = vunpack.c.h.b16 %v115
    %v745 = vunpack.c.l.b16 %v116
    %v746 = vunpack.c.h.b16 %v116
    %v747 = vunpack.c.l.b16 %v117
    %v748 = vunpack.c.h.b16 %v117
    %v749 = vunpack.c.l.b16 %v118
    %v750 = vunpack.c.h.b16 %v118
    %v751 = vunpack.c.l.b16 %v119
    %v752 = vunpack.c.h.b16 %v119
    %v753 = vunpack.c.l.b16 %v120
    %v754 = vunpack.c.h.b16 %v120
    %v755 = vunpack.c.l.b16 %v121
    %v756 = vunpack.c.h.b16 %v121
    %v757 = vunpack.c.l.b16 %v122
    %v758 = vunpack.c.h.b16 %v122
    %v759 = vunpack.c.l.b16 %v123
    %v760 = vunpack.c.h.b16 %v123
    %v761 = vunpack.c.l.b16 %v124
    %v762 = vunpack.c.h.b16 %v124
    %v763 = vunpack.c.l.b16 %v125
    %v764 = vunpack.c.h.b16 %v125
    %v765 = vunpack.c.l.b16 %v126
    %v766 = vunpack.c.h.b16 %v126
    %v767 = vunpack.c.l.b16 %v127
    %v768 = vunpack.c.h.b16 %v127
    %v769 = vunpack.c.l.b16 %v128
    %v770 = vunpack.c.h.b16 %v128
    %v771 = vunpack.c.l.b16 %v129
    %v772 = vunpack.c.h.b16 %v129
    %v773 = vunpack.c.l.b16 %v130
    %v774 = vunpack.c.h.b16 %v130
    %v775 = vunpack.c.l.b16 %v131
    %v776 = vunpack.c.h.b16 %v131
    %v777 = vunpack.c.l.b16 %v132
    %v778 = vunpack.c.h.b16 %v132
    %v779 = vunpack.c.l.b16 %v133
    %v780 = vunpack.c.h.b16 %v133
    %v781 = vunpack.c.l.b16 %v134
    %v782 = vunpack.c.h.b16 %v134
    %v783 = vunpack.c.l.b16 %v135
    %v784 = vunpack.c.h.b16 %v135
    %v785 = vunpack.c.l.b16 %v136
    %v786 = vunpack.c.h.b16 %v136
    %v787 = vunpack.c.l.b16 %v137
    %v788 = vunpack.c.h.b16 %v137
    %v789 = vunpack.c.l.b16 %v138
    %v790 = vunpack.c.h.b16 %v138
    %v791 = vunpack.c.l.b16 %v139
    %v792 = vunpack.c.h.b16 %v139
    %v793 = vunpack.c.l.b16 %v140
    %v794 = vunpack.c.h.b16 %v140
    %v795 = vunpack.c.l.b16 %v141
    %v796 = vunpack.c.h.b16 %v141
    %v797 = vunpack.c.l.b16 %v142
    %v798 = vunpack.c.h.b16 %v142
    %v799 = vunpack.c.l.b16 %v143
    %v800 = vunpack.c.h.b16 %v143
    %v801 = vunpack.c.l.b16 %v144
    %v802 = vunpack.c.h.b16 %v144
    %v803 = vunpack.c.l.b16 %v145
    %v804 = vunpack.c.h.b16 %v145
    %v805 = vunpack.c.l.b16 %v146
    %v806 = vunpack.c.h.b16 %v146
    %v807 = vunpack.c.l.b16 %v147
    %v808 = vunpack.c.h.b16 %v147
    %v809 = vunpack.c.l.b16 %v148
    %v810 = vunpack.c.h.b16 %v148
    %v811 = vunpack.c.l.b16 %v149
    %v812 = vunpack.c.h.b16 %v149
    %v813 = vunpack.c.l.b16 %v150
    %v814 = vunpack.c.h.b16 %v150
    %v815 = vunpack.c.l.b16 %v151
    %v816 = vunpack.c.h.b16 %v151
    %v817 = vunpack.c.l.b16 %v152
    %v818 = vunpack.c.h.b16 %v152
    %v819 = vunpack.c.l.b16 %v153
    %v820 = vunpack.c.h.b16 %v153
    %v821 = vunpack.c.l.b16 %v154
    %v822 = vunpack.c.h.b16 %v154
    %v823 = vunpack.c.l.b16 %v155
    %v824 = vunpack.c.h.b16 %v155
    %v825 = vunpack.c.l.b16 %v156
    %v826 = vunpack.c.h.b16 %v156
    %v827 = vunpack.c.l.b16 %v157
    %v828 = vunpack.c.h.b16 %v157
    %v829 = vunpack.c.l.b16 %v158
    %v830 = vunpack.c.h.b16 %v158
    %v831 = vunpack.c.l.b16 %v159
    %v832 = vunpack.c.h.b16 %v159
    %v833 = vunpack.c.l.b16 %v160
    %v834 = vunpack.c.h.b16 %v160
    %v835 = vunpack.c.l.b16 %v161
    %v836 = vunpack.c.h.b16 %v161
    %v837 = vunpack.c.l.b16 %v162
    %v838 = vunpack.c.h.b16 %v162
    %v839 = vunpack.c.l.b16 %v163
    %v840 = vunpack.c.h.b16 %v163
    %v841 = vunpack.c.l.b16 %v164
    %v842 = vunpack.c.h.b16 %v164
    %v843 = vunpack.c.l.b16 %v165
    %v844 = vunpack.c.h.b16 %v165
    %v845 = vunpack.c.l.b16 %v166
    %v846 = vunpack.c.h.b16 %v166
    %v847 = vunpack.c.l.b16 %v167
    %v848 = vunpack.c.h.b16 %v167
    %v849 = vunpack.c.l.b16 %v168
    %v850 = vunpack.c.h.b16 %v168
    %v851 = vunpack.c.l.b16 %v169
    %v852 = vunpack.c.h.b16 %v169
    %v853 = vunpack.c.l.b16 %v170
    %v854 = vunpack.c.h.b16 %v170
    %v855 = vunpack.c.l.b16 %v171
    %v856 = vunpack.c.h.b16 %v171
    %v857 = vunpack.c.l.b16 %v172
    %v858 = vunpack.c.h.b16 %v172
    %v859 = vunpack.c.l.b16 %v173
    %v860 = vunpack.c.h.b16 %v173
    %v861 = vunpack.c.l.b16 %v174
    %v862 = vunpack.c.h.b16 %v174
    %v863 = vunpack.c.l.b16 %v175
    %v864 = vunpack.c.h.b16 %v175
    %v865 = vunpack.c.l.b16 %v176
    %v866 = vunpack.c.h.b16 %v176
    %v867 = vunpack.c.l.b16 %v177
    %v868 = vunpack.c.h.b16 %v177
    %v869 = vunpack.c.l.b16 %v178
    %v870 = vunpack.c.h.b16 %v178
    %v871 = vunpack.c.l.b16 %v179
    %v872 = vunpack.c.h.b16 %v179
    %v873 = vunpack.c.l.b16 %v180
    %v874 = vunpack.c.h.b16 %v180
    %v875 = vunpack.c.l.b16 %v181
    %v876 = vunpack.c.h.b16 %v181
    %v877 = vunpack.c.l.b16 %v182
    %v878 = vunpack.c.h.b16 %v182
    %v879 = vunpack.c.l.b16 %v183
    %v880 = vunpack.c.h.b16 %v183
    %v881 = vunpack.c.l.b16 %v184
    %v882 = vunpack.c.h.b16 %v184
    %v883 = vunpack.c.l.b16 %v185
    %v884 = vunpack.c.h.b16 %v185
    %v885 = vunpack.c.l.b16 %v186
    %v886 = vunpack.c.h.b16 %v186
    %v887 = vunpack.c.l.b16 %v187
    %v888 = vunpack.c.h.b16 %v187
    %v889 = vunpack.c.l.b16 %v188
    %v890 = vunpack.c.h.b16 %v188
    %v891 = vunpack.c.l.b16 %v189
    %v892 = vunpack.c.h.b16 %v189
    %v893 = vunpack.c.l.b16 %v190
    %v894 = vunpack.c.h.b16 %v190
    %v895 = vunpack.c.l.b16 %v191
    %v896 = vunpack.c.h.b16 %v191
    %v897 = vunpack.c.l.b16 %v192
    %v898 = vunpack.c.h.b16 %v192
    %v899 = vunpack.c.l.b16 %v193
    %v900 = vunpack.c.h.b16 %v193
    %v901 = vunpack.c.l.b16 %v194
    %v902 = vunpack.c.h.b16 %v194
    %v903 = vunpack.c.l.b16 %v195
    %v904 = vunpack.c.h.b16 %v195
    %v905 = vunpack.c.l.b16 %v196
    %v906 = vunpack.c.h.b16 %v196
    %v907 = vunpack.c.l.b16 %v197
    %v908 = vunpack.c.h.b16 %v197
    %v909 = vunpack.c.l.b16 %v198
    %v910 = vunpack.c.h.b16 %v198
    %v911 = vunpack.c.l.b16 %v199
    %v912 = vunpack.c.h.b16 %v199
    %v913 = vunpack.c.l.b16 %v200
    %v914 = vunpack.c.h.b16 %v200
    %v915 = vunpack.c.l.b16 %v201
    %v916 = vunpack.c.h.b16 %v201
    %v917 = vunpack.c.l.b16 %v202
    %v918 = vunpack.c.h.b16 %v202
    %v919 = vunpack.c.l.b16 %v203
    %v920 = vunpack.c.h.b16 %v203
    %v921 = vunpack.c.l.b16 %v204
    %v922 = vunpack.c.h.b16 %v204
    %v923 = vunpack.c.l.b16 %v205
    %v924 = vunpack.c.h.b16 %v205
    %v925 = vunpack.c.l.b16 %v206
    %v926 = vunpack.c.h.b16 %v206
    %v927 = vunpack.c.l.b16 %v207
    %v928 = vunpack.c.h.b16 %v207
    %v929 = vunpack.c.l.b16 %v208
    %v930 = vunpack.c.h.b16 %v208
    %v931 = vunpack.c.l.b16 %v209
    %v932 = vunpack.c.h.b16 %v209
    %v933 = vunpack.c.l.b16 %v210
    %v934 = vunpack.c.h.b16 %v210
    %v935 = vunpack.c.l.b16 %v211
    %v936 = vunpack.c.h.b16 %v211
    %v937 = vunpack.c.l.b16 %v212
    %v938 = vunpack.c.h.b16 %v212
    %v939 = vunpack.c.l.b16 %v213
    %v940 = vunpack.c.h.b16 %v213
    %v941 = vunpack.c.l.b16 %v214
    %v942 = vunpack.c.h.b16 %v214
    %v943 = vunpack.c.l.b16 %v215
    %v944 = vunpack.c.h.b16 %v215
    %v945 = vunpack.c.l.b16 %v216
    %v946 = vunpack.c.h.b16 %v216
    %v947 = vunpack.c.l.b16 %v217
    %v948 = vunpack.c.h.b16 %v217
    %v949 = vunpack.c.l.b16 %v218
    %v950 = vunpack.c.h.b16 %v218
    %v951 = vunpack.c.l.b16 %v219
    %v952 = vunpack.c.h.b16 %v219
    %v953 = vunpack.c.l.b16 %v220
    %v954 = vunpack.c.h.b16 %v220
    %v955 = vunpack.c.l.b16 %v221
    %v956 = vunpack.c.h.b16 %v221
    %v957 = vunpack.c.l.b16 %v222
    %v958 = vunpack.c.h.b16 %v222
    %v959 = vunpack.c.l.b16 %v223
    %v960 = vunpack.c.h.b16 %v223
    %v961 = vunpack.c.l.b16 %v224
    %v962 = vunpack.c.h.b16 %v224
    %v963 = vunpack.c.l.b16 %v225
    %v964 = vunpack.c.h.b16 %v225
    %v965 = vunpack.c.l.b16 %v226
    %v966 = vunpack.c.h.b16 %v226
    %v967 = vunpack.c.l.b16 %v227
    %v968 = vunpack.c.h.b16 %v227
    %v969 = vunpack.c.l.b16 %v228
    %v970 = vunpack.c.h.b16 %v228
    %v971 = vunpack.c.l.b16 %v229
    %v972 = vunpack.c.h.b16 %v229
    %v973 = vunpack.c.l.b16 %v230
    %v974 = vunpack.c.h.b16 %v230
    %v975 = vunpack.c.l.b16 %v231
    %v976 = vunpack.c.h.b16 %v231
    %v977 = vunpack.c.l.b16 %v232
    %v978 = vunpack.c.h.b16 %v232
    %v979 = vunpack.c.l.b16 %v233
    %v980 = vunpack.c.h.b16 %v233
    %v981 = vunpack.c.l.b16 %v234
    %v982 = vunpack.c.h.b16 %v234
    %v983 = vunpack.c.l.b16 %v235
    %v984 = vunpack.c.h.b16 %v235
    %v985 = vunpack.c.l.b16 %v236
    %v986 = vunpack.c.h.b16 %v236
    %v987 = vunpack.c.l.b16 %v237
    %v988 = vunpack.c.h.b16 %v237
    %v989 = vunpack.c.l.b16 %v238
    %v990 = vunpack.c.h.b16 %v238
    %v991 = vunpack.c.l.b16 %v239
    %v992 = vunpack.c.h.b16 %v239
    %v993 = vunpack.c.l.b16 %v240
    %v994 = vunpack.c.h.b16 %v240
    %v995 = vunpack.c.l.b16 %v241
    %v996 = vunpack.c.h.b16 %v241
    %v997 = vunpack.c.l.b16 %v242
    %v998 = vunpack.c.h.b16 %v242
    %v999 = vunpack.c.l.b16 %v243
    %v1000 = vunpack.c.h.b16 %v243
    %v1001 = vunpack.c.l.b16 %v244
    %v1002 = vunpack.c.h.b16 %v244
    %v1003 = vunpack.c.l.b16 %v245
    %v1004 = vunpack.c.h.b16 %v245
    %v1005 = vunpack.c.l.b16 %v246
    %v1006 = vunpack.c.h.b16 %v246
    %v1007 = vunpack.c.l.b16 %v247
    %v1008 = vunpack.c.h.b16 %v247
    %v1009 = vunpack.c.l.b16 %v248
    %v1010 = vunpack.c.h.b16 %v248
    %v1011 = vunpack.c.l.b16 %v249
    %v1012 = vunpack.c.h.b16 %v249
    %v1013 = vunpack.c.l.b16 %v250
    %v1014 = vunpack.c.h.b16 %v250
    %v1015 = vunpack.c.l.b16 %v251
    %v1016 = vunpack.c.h.b16 %v251
    %v1017 = vunpack.c.l.b16 %v252
    %v1018 = vunpack.c.h.b16 %v252
    %v1019 = vunpack.c.l.b16 %v253
    %v1020 = vunpack.c.h.b16 %v253
    %v1021 = vunpack.c.l.b16 %v254
    %v1022 = vunpack.c.h.b16 %v254
    %v1023 = vunpack.c.l.b16 %v255
    %v1024 = vunpack.c.h.b16 %v255
    %v1025 = vunpack.c.l.b16 %v256
    %v1026 = vunpack.c.h.b16 %v256
    %v1027 = vunpack.c.l.b16 %v257
    %v1028 = vunpack.c.h.b16 %v257
    %v1029 = vunpack.c.l.b16 %v258
    %v1030 = vunpack.c.h.b16 %v258
    %v1031 = vunpack.c.l.b16 %v259
    %v1032 = vunpack.c.h.b16 %v259
    %v1033 = vunpack.c.l.b16 %v260
    %v1034 = vunpack.c.h.b16 %v260
    %v1035 = vunpack.c.l.b16 %v261
    %v1036 = vunpack.c.h.b16 %v261
    %v1037 = vunpack.c.l.b16 %v262
    %v1038 = vunpack.c.h.b16 %v262
    %v1039 = vunpack.c.l.b16 %v263
    %v1040 = vunpack.c.h.b16 %v263
    %v1041 = vpack.c.b16 %v661, %v657
    %v1042 = vpack.c.b16 %v662, %v658
    %v1043 = vpack.c.b16 %v663, %v659
    %v1044 = vpack.c.b16 %v664, %v660
    %v1045 = vpack.c.b16 %v669, %v665
    %v1046 = vpack.c.b16 %v670, %v666
    %v1047 = vpack.c.b16 %v671, %v667
    %v1048 = vpack.c.b16 %v672, %v668
    %v1049 = vpack.c.b16 %v677, %v673
    %v1050 = vpack.c.b16 %v678, %v674
    %v1051 = vpack.c.b16 %v679, %v675
    %v1052 = vpack.c.b16 %v680, %v676
    %v1053 = vpack.c.b16 %v685, %v681
    %v1054 = vpack.c.b16 %v686, %v682
    %v1055 = vpack.c.b16 %v687, %v683
    %v1056 = vpack.c.b16 %v688, %v684
    %v1057 = vpack.c.b16 %v693, %v689
    %v1058 = vpack.c.b16 %v694, %v690
    %v1059 = vpack.c.b16 %v695, %v691
    %v1060 = vpack.c.b16 %v696, %v692
    %v1061 = vpack.c.b16 %v701, %v697
    %v1062 = vpack.c.b16 %v702, %v698
    %v1063 = vpack.c.b16 %v703, %v699
    %v1064 = vpack.c.b16 %v704, %v700
    %v1065 = vpack.c.b16 %v709, %v705
    %v1066 = vpack.c.b16 %v710, %v706
    %v1067 = vpack.c.b16 %v711, %v707
    %v1068 = vpack.c.b16 %v712, %v708
    %v1069 = vpack.c.b16 %v717, %v713
    %v1070 = vpack.c.b16 %v718, %v714
    %v1071 = vpack.c.b16 %v719, %v715
    %v1072 = vpack.c.b16 %v720, %v716
    %v1073 = vpack.c.b16 %v725, %v721
    %v1074 = vpack.c.b16 %v726, %v722
    %v1075 = vpack.c.b16 %v727, %v723
    %v1076 = vpack.c.b16 %v728, %v724
    %v1077 = vpack.c.b16 %v733, %v729
    %v1078 = vpack.c.b16 %v734, %v730
    %v1079 = vpack.c.b16 %v735, %v731
    %v1080 = vpack.c.b16 %v736, %v732
    %v1081 = vpack.c.b16 %v741, %v737
    %v1082 = vpack.c.b16 %v742, %v738
    %v1083 = vpack.c.b16 %v743, %v739
    %v1084 = vpack.c.b16 %v744, %v740
    %v1085 = vpack.c.b16 %v749, %v745
    %v1086 = vpack.c.b16 %v750, %v746
    %v1087 = vpack.c.b16 %v751, %v747
    %v1088 = vpack.c.b16 %v752, %v748
    %v1089 = vpack.c.b16 %v757, %v753
    %v1090 = vpack.c.b16 %v758, %v754
    %v1091 = vpack.c.b16 %v759, %v755
    %v1092 = vpack.c.b16 %v760, %v756
    %v1093 = vpack.c.b16 %v765, %v761
    %v1094 = vpack.c.b16 %v766, %v762
    %v1095 = vpack.c.b16 %v767, %v763
    %v1096 = vpack.c.b16 %v768, %v764
    %v1097 = vpack.c.b16 %v773, %v769
    %v1098 = vpack.c.b16 %v774, %v770
    %v1099 = vpack.c.b16 %v775, %v771
    %v1100 = vpack.c.b16 %v776, %v772
    %v1101 = vpack.c.b16 %v781, %v777
    %v1102 = vpack.c.b16 %v782, %v778
    %v1103 = vpack.c.b16 %v783, %v779
    %v1104 = vpack.c.b16 %v784, %v780
    %v1105 = vpack.c.b16 %v789, %v785
    %v1106 = vpack.c.b16 %v790, %v786
    %v1107 = vpack.c.b16 %v791, %v787
    %v1108 = vpack.c.b16 %v792, %v788
    %v1109 = vpack.c.b16 %v797, %v793
    %v1110 = vpack.c.b16 %v798, %v794
    %v1111 = vpack.c.b16 %v799, %v795
    %v1112 = vpack.c.b16 %v800, %v796
    %v1113 = vpack.c.b16 %v805, %v801
    %v1114 = vpack.c.b16 %v806, %v802
    %v1115 = vpack.c.b16 %v807, %v803
    %v1116 = vpack.c.b16 %v808, %v804
    %v1117 = vpack.c.b16 %v813, %v809
    %v1118 = vpack.c.b16 %v814, %v810
    %v1119 = vpack.c.b16 %v815, %v811
    %v1120 = vpack.c.b16 %v816, %v812
    %v1121 = vpack.c.b16 %v821, %v817
    %v1122 = vpack.c.b16 %v822, %v818
    %v1123 = vpack.c.b16 %v823, %v819
    %v1124 = vpack.c.b16 %v824, %v820
    %v1125 = vpack.c.b16 %v829, %v825
    %v1126 = vpack.c.b16 %v830, %v826
    %v1127 = vpack.c.b16 %v831, %v827
    %v1128 = vpack.c.b16 %v832, %v828
    %v1129 = vpack.c.b16 %v837, %v833
    %v1130 = vpack.c.b16 %v838, %v834
    %v1131 = vpack.c.b16 %v839, %v835
    %v1132 = vpack.c.b16 %v840, %v836
    %v1133 = vpack.c.b16 %v845, %v841
    %v1134 = vpack.c.b16 %v846, %v842
    %v1135 = vpack.c.b16 %v847, %v843
    %v1136 = vpack.c.b16 %v848, %v844
    %v1137 = vpack.c.b16 %v853, %v849
    %v1138 = vpack.c.b16 %v854, %v850
    %v1139 = vpack.c.b16 %v855, %v851
    %v1140 = vpack.c.b16 %v856, %v852
    %v1141 = vpack.c.b16 %v861, %v857
    %v1142 = vpack.c.b16 %v862, %v858
    %v1143 = vpack.c.b16 %v863, %v859
    %v1144 = vpack.c.b16 %v864, %v860
    %v1145 = vpack.c.b16 %v869, %v865
    %v1146 = vpack.c.b16 %v870, %v866
    %v1147 = vpack.c.b16 %v871, %v867
    %v1148 = vpack.c.b16 %v872, %v868
    %v1149 = vpack.c.b16 %v877, %v873
    %v1150 = vpack.c.b16 %v878, %v874
    %v1151 = vpack.c.b16 %v879, %v875
    %v1152 = vpack.c.b16 %v880, %v876
    %v1153 = vpack.c.b16 %v885, %v881
    %v1154 = vpack.c.b16 %v886, %v882
    %v1155 = vpack.c.b16 %v887, %v883
    %v1156 = vpack.c.b16 %v888, %v884
    %v1157 = vpack.c.b16 %v893, %v889
    %v1158 = vpack.c.b16 %v894, %v890
    %v1159 = vpack.c.b16 %v895, %v891
    %v1160 = vpack.c.b16 %v896, %v892
    %v1161 = vpack.c.b16 %v901, %v897
    %v1162 = vpack.c.b16 %v902, %v898
    %v1163 = vpack.c.b16 %v903, %v899
    %v1164 = vpack.c.b16 %v904, %v900
    %v1165 = vpack.c.b16 %v909, %v905
    %v1166 = vpack.c.b16 %v910, %v906
    %v1167 = vpack.c.b16 %v911, %v907
    %v1168 = vpack.c.b16 %v912, %v908
    %v1169 = vpack.c.b16 %v917, %v913
    %v1170 = vpack.c.b16 %v918, %v914
    %v1171 = vpack.c.b16 %v919, %v915
    %v1172 = vpack.c.b16 %v920, %v916
    %v1173 = vpack.c.b16 %v925, %v921
    %v1174 = vpack.c.b16 %v926, %v922
    %v1175 = vpack.c.b16 %v927, %v923
    %v1176 = vpack.c.b16 %v928, %v924
    %v1177 = vpack.c.b16 %v933, %v929
    %v1178 = vpack.c.b16 %v934, %v930
    %v1179 = vpack.c.b16 %v935, %v931
    %v1180 = vpack.c.b16 %v936, %v932
    %v1181 = vpack.c.b16 %v941, %v937
    %v1182 = vpack.c.b16 %v942, %v938
    %v1183 = vpack.c.b16 %v943, %v939
    %v1184 = vpack.c.b16 %v944, %v940
    %v1185 = vpack.c.b16 %v949, %v945
    %v1186 = vpack.c.b16 %v950, %v946
    %v1187 = vpack.c.b16 %v951, %v947
    %v1188 = vpack.c.b16 %v952, %v948
    %v1189 = vpack.c.b16 %v957, %v953
    %v1190 = vpack.c.b16 %v958, %v954
    %v1191 = vpack.c.b16 %v959, %v955
    %v1192 = vpack.c.b16 %v960, %v956
    %v1193 = vpack.c.b16 %v965, %v961
    %v1194 = vpack.c.b16 %v966, %v962
    %v1195 = vpack.c.b16 %v967, %v963
    %v1196 = vpack.c.b16 %v968, %v964
    %v1197 = vpack.c.b16 %v973, %v969
    %v1198 = vpack.c.b16 %v974, %v970
    %v1199 = vpack.c.b16 %v975, %v971
    %v1200 = vpack.c.b16 %v976, %v972
    %v1201 = vpack.c.b16 %v981, %v977
    %v1202 = vpack.c.b16 %v982, %v978
    %v1203 = vpack.c.b16 %v983, %v979
    %v1204 = vpack.c.b16 %v984, %v980
    %v1205 = vpack.c.b16 %v989, %v985
    %v1206 = vpack.c.b16 %v990, %v986
    %v1207 = vpack.c.b16 %v991, %v987
    %v1208 = vpack.c.b16 %v992, %v988
    %v1209 = vpack.c.b16 %v997, %v993
    %v1210 = vpack.c.b16 %v998, %v994
    %v1211 = vpack.c.b16 %v999, %v995
    %v1212 = vpack.c.b16 %v1000, %v996
    %v1213 = vpack.c.b16 %v1005, %v1001
    %v1214 = vpack.c.b16 %v1006, %v1002
    %v1215 = vpack.c.b16 %v1007, %v1003
    %v1216 = vpack.c.b16 %v1008, %v1004
    %v1217 = vpack.c.b16 %v1013, %v1009
    %v1218 = vpack.c.b16 %v1014, %v1010
    %v1219 = vpack.c.b16 %v1015, %v1011
    %v1220 = vpack.c.b16 %v1016, %v1012
    %v1221 = vpack.c.b16 %v1021, %v1017
    %v1222 = vpack.c.b16 %v1022, %v1018
    %v1223 = vpack.c.b16 %v1023, %v1019
    %v1224 = vpack.c.b16 %v1024, %v1020
    %v1225 = vpack.c.b16 %v1029, %v1025
    %v1226 = vpack.c.b16 %v1030, %v1026
    %v1227 = vpack.c.b16 %v1031, %v1027
    %v1228 = vpack.c.b16 %v1032, %v1028
    %v1229 = vpack.c.b16 %v1037, %v1033
    %v1230 = vpack.c.b16 %v1038, %v1034
    %v1231 = vpack.c.b16 %v1039, %v1035
    %v1232 = vpack.c.b16 %v1040, %v1036
    %1425 = vmatprep.subr.bf16.mxu0 %v1042
    %1426 = vmatpush1.bf16.msra.mxu0 %v1041
    %1427 = vmatprep.subr.bf16.mxu0 %v1046
    %1428 = vmatpush1.bf16.msra.mxu0 %v1045
    %1429 = vmatprep.subr.bf16.mxu0 %v1050
    %1430 = vmatpush1.bf16.msra.mxu0 %v1049
    %1431 = vmatprep.subr.bf16.mxu0 %v1054
    %1432 = vmatpush1.bf16.msra.mxu0 %v1053
    %1433 = vmatprep.subr.bf16.mxu0 %v1058
    %1434 = vmatpush1.bf16.msra.mxu0 %v1057
    %1435 = vmatprep.subr.bf16.mxu0 %v1062
    %1436 = vmatpush1.bf16.msra.mxu0 %v1061
    %1437 = vmatprep.subr.bf16.mxu0 %v1066
    %1438 = vmatpush1.bf16.msra.mxu0 %v1065
    %1439 = vmatprep.subr.bf16.mxu0 %v1070
    %1440 = vmatpush1.bf16.msra.mxu0 %v1069
    %1441 = vmatprep.subr.bf16.mxu0 %v1074
    %1442 = vmatpush1.bf16.msra.mxu0 %v1073
    %1443 = vmatprep.subr.bf16.mxu0 %v1078
    %1444 = vmatpush1.bf16.msra.mxu0 %v1077
    %1445 = vmatprep.subr.bf16.mxu0 %v1082
    %1446 = vmatpush1.bf16.msra.mxu0 %v1081
    %1447 = vmatprep.subr.bf16.mxu0 %v1086
    %1448 = vmatpush1.bf16.msra.mxu0 %v1085
    %1449 = vmatprep.subr.bf16.mxu0 %v1090
    %1450 = vmatpush1.bf16.msra.mxu0 %v1089
    %1451 = vmatprep.subr.bf16.mxu0 %v1094
    %1452 = vmatpush1.bf16.msra.mxu0 %v1093
    %1453 = vmatprep.subr.bf16.mxu0 %v1098
    %1454 = vmatpush1.bf16.msra.mxu0 %v1097
    %1455 = vmatprep.subr.bf16.mxu0 %v1102
    %1456 = vmatpush1.bf16.msra.mxu0 %v1101
    %1457 = vmatprep.mubr.bf16.mxu0 %v454
    %1458 = vmatmul.mubr.bf16.gmra.mrb[0].mxu0 %v453
    %v1459 = vpop.f32.mrb[0].mxu0
    %v1460 = vadd.f32 %v418, %v1459
    %v1461 = vpop.f32.mrb[0].mxu0
    %v1462 = vadd.f32 %v422, %v1461
    %v1463 = vpop.f32.mrb[0].mxu0
    %v1464 = vadd.f32 %v418, %v1463
    %v1465 = vpop.f32.mrb[0].mxu0
    %v1466 = vadd.f32 %v422, %v1465
    %1467 = vdwg.mxu0
    %1468 = vmatprep.subr.bf16.mxu0 %v1106
    %1469 = vmatpush1.bf16.msra.mxu0 %v1105
    %1470 = vmatprep.subr.bf16.mxu0 %v1110
    %1471 = vmatpush1.bf16.msra.mxu0 %v1109
    %1472 = vmatprep.subr.bf16.mxu0 %v1114
    %1473 = vmatpush1.bf16.msra.mxu0 %v1113
    %1474 = vmatprep.subr.bf16.mxu0 %v1118
    %1475 = vmatpush1.bf16.msra.mxu0 %v1117
    %1476 = vmatprep.subr.bf16.mxu0 %v1122
    %1477 = vmatpush1.bf16.msra.mxu0 %v1121
    %1478 = vmatprep.subr.bf16.mxu0 %v1126
    %1479 = vmatpush1.bf16.msra.mxu0 %v1125
    %1480 = vmatprep.subr.bf16.mxu0 %v1130
    %1481 = vmatpush1.bf16.msra.mxu0 %v1129
    %1482 = vmatprep.subr.bf16.mxu0 %v1134
    %1483 = vmatpush1.bf16.msra.mxu0 %v1133
    %1484 = vmatprep.subr.bf16.mxu0 %v1138
    %1485 = vmatpush1.bf16.msra.mxu0 %v1137
    %1486 = vmatprep.subr.bf16.mxu0 %v1142
    %1487 = vmatpush1.bf16.msra.mxu0 %v1141
    %1488 = vmatprep.subr.bf16.mxu0 %v1146
    %1489 = vmatpush1.bf16.msra.mxu0 %v1145
    %1490 = vmatprep.subr.bf16.mxu0 %v1150
    %1491 = vmatpush1.bf16.msra.mxu0 %v1149
    %1492 = vmatprep.subr.bf16.mxu0 %v1154
    %1493 = vmatpush1.bf16.msra.mxu0 %v1153
    %1494 = vmatprep.subr.bf16.mxu0 %v1158
    %1495 = vmatpush1.bf16.msra.mxu0 %v1157
    %1496 = vmatprep.subr.bf16.mxu0 %v1162
    %1497 = vmatpush1.bf16.msra.mxu0 %v1161
    %1498 = vmatprep.subr.bf16.mxu0 %v1166
    %1499 = vmatpush1.bf16.msra.mxu0 %v1165
    %1500 = vmatprep.mubr.bf16.mxu0 %v456
    %1501 = vmatmul.mubr.bf16.gmra.mrb[0].mxu0 %v455
    %v1502 = vpop.f32.mrb[0].mxu0
    %v1503 = vadd.f32 %v1460, %v1502
    %v1504 = vpop.f32.mrb[0].mxu0
    %v1505 = vadd.f32 %v1462, %v1504
    %v1506 = vpop.f32.mrb[0].mxu0
    %v1507 = vadd.f32 %v1464, %v1506
    %v1508 = vpop.f32.mrb[0].mxu0
    %v1509 = vadd.f32 %v1466, %v1508
    %1510 = vdwg.mxu0
    %1511 = vmatprep.subr.bf16.mxu0 %v1170
    %1512 = vmatpush1.bf16.msra.mxu0 %v1169
    %1513 = vmatprep.subr.bf16.mxu0 %v1174
    %1514 = vmatpush1.bf16.msra.mxu0 %v1173
    %1515 = vmatprep.subr.bf16.mxu0 %v1178
    %1516 = vmatpush1.bf16.msra.mxu0 %v1177
    %1517 = vmatprep.subr.bf16.mxu0 %v1182
    %1518 = vmatpush1.bf16.msra.mxu0 %v1181
    %1519 = vmatprep.subr.bf16.mxu0 %v1186
    %1520 = vmatpush1.bf16.msra.mxu0 %v1185
    %1521 = vmatprep.subr.bf16.mxu0 %v1190
    %1522 = vmatpush1.bf16.msra.mxu0 %v1189
    %1523 = vmatprep.subr.bf16.mxu0 %v1194
    %1524 = vmatpush1.bf16.msra.mxu0 %v1193
    %1525 = vmatprep.subr.bf16.mxu0 %v1198
    %1526 = vmatpush1.bf16.msra.mxu0 %v1197
    %1527 = vmatprep.subr.bf16.mxu0 %v1202
    %1528 = vmatpush1.bf16.msra.mxu0 %v1201
    %1529 = vmatprep.subr.bf16.mxu0 %v1206
    %1530 = vmatpush1.bf16.msra.mxu0 %v1205
    %1531 = vmatprep.subr.bf16.mxu0 %v1210
    %1532 = vmatpush1.bf16.msra.mxu0 %v1209
    %1533 = vmatprep.subr.bf16.mxu0 %v1214
    %1534 = vmatpush1.bf16.msra.mxu0 %v1213
    %1535 = vmatprep.subr.bf16.mxu0 %v1218
    %1536 = vmatpush1.bf16.msra.mxu0 %v1217
    %1537 = vmatprep.subr.bf16.mxu0 %v1222
    %1538 = vmatpush1.bf16.msra.mxu0 %v1221
    %1539 = vmatprep.subr.bf16.mxu0 %v1226
    %1540 = vmatpush1.bf16.msra.mxu0 %v1225
    %1541 = vmatprep.subr.bf16.mxu0 %v1230
    %1542 = vmatpush1.bf16.msra.mxu0 %v1229
    %1543 = vmatprep.mubr.bf16.mxu0 %v458
    %1544 = vmatmul.mubr.bf16.gmra.mrb[0].mxu0 %v457
    %v1545 = vpop.f32.mrb[0].mxu0
    %v1546 = vadd.f32 %v1503, %v1545
    %v1547 = vpop.f32.mrb[0].mxu0
    %v1548 = vadd.f32 %v1505, %v1547
    %v1549 = vpop.f32.mrb[0].mxu0
    %v1550 = vadd.f32 %v1507, %v1549
    %v1551 = vpop.f32.mrb[0].mxu0
    %v1552 = vadd.f32 %v1509, %v1551
    %1553 = vdwg.mxu0
    %1554 = vmatprep.subr.bf16.mxu0 %v1044
    %1555 = vmatpush1.bf16.msra.mxu0 %v1043
    %1556 = vmatprep.subr.bf16.mxu0 %v1048
    %1557 = vmatpush1.bf16.msra.mxu0 %v1047
    %1558 = vmatprep.subr.bf16.mxu0 %v1052
    %1559 = vmatpush1.bf16.msra.mxu0 %v1051
    %1560 = vmatprep.subr.bf16.mxu0 %v1056
    %1561 = vmatpush1.bf16.msra.mxu0 %v1055
    %1562 = vmatprep.subr.bf16.mxu0 %v1060
    %1563 = vmatpush1.bf16.msra.mxu0 %v1059
    %1564 = vmatprep.subr.bf16.mxu0 %v1064
    %1565 = vmatpush1.bf16.msra.mxu0 %v1063
    %1566 = vmatprep.subr.bf16.mxu0 %v1068
    %1567 = vmatpush1.bf16.msra.mxu0 %v1067
    %1568 = vmatprep.subr.bf16.mxu0 %v1072
    %1569 = vmatpush1.bf16.msra.mxu0 %v1071
    %1570 = vmatprep.subr.bf16.mxu0 %v1076
    %1571 = vmatpush1.bf16.msra.mxu0 %v1075
    %1572 = vmatprep.subr.bf16.mxu0 %v1080
    %1573 = vmatpush1.bf16.msra.mxu0 %v1079
    %1574 = vmatprep.subr.bf16.mxu0 %v1084
    %1575 = vmatpush1.bf16.msra.mxu0 %v1083
    %1576 = vmatprep.subr.bf16.mxu0 %v1088
    %1577 = vmatpush1.bf16.msra.mxu0 %v1087
    %1578 = vmatprep.subr.bf16.mxu0 %v1092
    %1579 = vmatpush1.bf16.msra.mxu0 %v1091
    %1580 = vmatprep.subr.bf16.mxu0 %v1096
    %1581 = vmatpush1.bf16.msra.mxu0 %v1095
    %1582 = vmatprep.subr.bf16.mxu0 %v1100
    %1583 = vmatpush1.bf16.msra.mxu0 %v1099
    %1584 = vmatprep.subr.bf16.mxu0 %v1104
    %1585 = vmatpush1.bf16.msra.mxu0 %v1103
    %1586 = vmatprep.mubr.bf16.mxu0 %v454
    %1587 = vmatmul.mubr.bf16.gmra.mrb[0].mxu0 %v453
    %v1588 = vpop.f32.mrb[0].mxu0
    %v1589 = vadd.f32 %v426, %v1588
    %v1590 = vpop.f32.mrb[0].mxu0
    %v1591 = vadd.f32 %v430, %v1590
    %v1592 = vpop.f32.mrb[0].mxu0
    %v1593 = vadd.f32 %v426, %v1592
    %v1594 = vpop.f32.mrb[0].mxu0
    %v1595 = vadd.f32 %v430, %v1594
    %1596 = vdwg.mxu0
    %1597 = vmatprep.subr.bf16.mxu0 %v1108
    %1598 = vmatpush1.bf16.msra.mxu0 %v1107
    %1599 = vmatprep.subr.bf16.mxu0 %v1112
    %1600 = vmatpush1.bf16.msra.mxu0 %v1111
    %1601 = vmatprep.subr.bf16.mxu0 %v1116
    %1602 = vmatpush1.bf16.msra.mxu0 %v1115
    %1603 = vmatprep.subr.bf16.mxu0 %v1120
    %1604 = vmatpush1.bf16.msra.mxu0 %v1119
    %1605 = vmatprep.subr.bf16.mxu0 %v1124
    %1606 = vmatpush1.bf16.msra.mxu0 %v1123
    %1607 = vmatprep.subr.bf16.mxu0 %v1128
    %1608 = vmatpush1.bf16.msra.mxu0 %v1127
    %1609 = vmatprep.subr.bf16.mxu0 %v1132
    %1610 = vmatpush1.bf16.msra.mxu0 %v1131
    %1611 = vmatprep.subr.bf16.mxu0 %v1136
    %1612 = vmatpush1.bf16.msra.mxu0 %v1135
    %1613 = vmatprep.subr.bf16.mxu0 %v1140
    %1614 = vmatpush1.bf16.msra.mxu0 %v1139
    %1615 = vmatprep.subr.bf16.mxu0 %v1144
    %1616 = vmatpush1.bf16.msra.mxu0 %v1143
    %1617 = vmatprep.subr.bf16.mxu0 %v1148
    %1618 = vmatpush1.bf16.msra.mxu0 %v1147
    %1619 = vmatprep.subr.bf16.mxu0 %v1152
    %1620 = vmatpush1.bf16.msra.mxu0 %v1151
    %1621 = vmatprep.subr.bf16.mxu0 %v1156
    %1622 = vmatpush1.bf16.msra.mxu0 %v1155
    %1623 = vmatprep.subr.bf16.mxu0 %v1160
    %1624 = vmatpush1.bf16.msra.mxu0 %v1159
    %1625 = vmatprep.subr.bf16.mxu0 %v1164
    %1626 = vmatpush1.bf16.msra.mxu0 %v1163
    %1627 = vmatprep.subr.bf16.mxu0 %v1168
    %1628 = vmatpush1.bf16.msra.mxu0 %v1167
    %1629 = vmatprep.mubr.bf16.mxu0 %v456
    %1630 = vmatmul.mubr.bf16.gmra.mrb[0].mxu0 %v455
    %v1631 = vpop.f32.mrb[0].mxu0
    %v1632 = vadd.f32 %v1589, %v1631
    %v1633 = vpop.f32.mrb[0].mxu0
    %v1634 = vadd.f32 %v1591, %v1633
    %v1635 = vpop.f32.mrb[0].mxu0
    %v1636 = vadd.f32 %v1593, %v1635
    %v1637 = vpop.f32.mrb[0].mxu0
    %v1638 = vadd.f32 %v1595, %v1637
    %1639 = vdwg.mxu0
    %1640 = vmatprep.subr.bf16.mxu0 %v1172
    %1641 = vmatpush1.bf16.msra.mxu0 %v1171
    %1642 = vmatprep.subr.bf16.mxu0 %v1176
    %1643 = vmatpush1.bf16.msra.mxu0 %v1175
    %1644 = vmatprep.subr.bf16.mxu0 %v1180
    %1645 = vmatpush1.bf16.msra.mxu0 %v1179
    %1646 = vmatprep.subr.bf16.mxu0 %v1184
    %1647 = vmatpush1.bf16.msra.mxu0 %v1183
    %1648 = vmatprep.subr.bf16.mxu0 %v1188
    %1649 = vmatpush1.bf16.msra.mxu0 %v1187
    %1650 = vmatprep.subr.bf16.mxu0 %v1192
    %1651 = vmatpush1.bf16.msra.mxu0 %v1191
    %1652 = vmatprep.subr.bf16.mxu0 %v1196
    %1653 = vmatpush1.bf16.msra.mxu0 %v1195
    %1654 = vmatprep.subr.bf16.mxu0 %v1200
    %1655 = vmatpush1.bf16.msra.mxu0 %v1199
    %1656 = vmatprep.subr.bf16.mxu0 %v1204
    %1657 = vmatpush1.bf16.msra.mxu0 %v1203
    %1658 = vmatprep.subr.bf16.mxu0 %v1208
    %1659 = vmatpush1.bf16.msra.mxu0 %v1207
    %1660 = vmatprep.subr.bf16.mxu0 %v1212
    %1661 = vmatpush1.bf16.msra.mxu0 %v1211
    %1662 = vmatprep.subr.bf16.mxu0 %v1216
    %1663 = vmatpush1.bf16.msra.mxu0 %v1215
    %1664 = vmatprep.subr.bf16.mxu0 %v1220
    %1665 = vmatpush1.bf16.msra.mxu0 %v1219
    %1666 = vmatprep.subr.bf16.mxu0 %v1224
    %1667 = vmatpush1.bf16.msra.mxu0 %v1223
    %1668 = vmatprep.subr.bf16.mxu0 %v1228
    %1669 = vmatpush1.bf16.msra.mxu0 %v1227
    %1670 = vmatprep.subr.bf16.mxu0 %v1232
    %1671 = vmatpush1.bf16.msra.mxu0 %v1231
    %1672 = vmatprep.mubr.bf16.mxu0 %v458
    %1673 = vmatmul.mubr.bf16.gmra.mrb[0].mxu0 %v457
    %v1674 = vpop.f32.mrb[0].mxu0
    %v1675 = vadd.f32 %v1632, %v1674
    %v1676 = vpop.f32.mrb[0].mxu0
    %v1677 = vadd.f32 %v1634, %v1676
    %v1678 = vpop.f32.mrb[0].mxu0
    %v1679 = vadd.f32 %v1636, %v1678
    %v1680 = vpop.f32.mrb[0].mxu0
    %v1681 = vadd.f32 %v1638, %v1680
    %1682 = vdwg.mxu0
    %v1683 = vmax.f32 %v1546, 0.0
    %v1684 = vmax.f32 %v1548, 0.0
    %v1685 = vmax.f32 %v1675, 0.0
    %v1686 = vmax.f32 %v1677, 0.0
    %v1687 = vmax.f32 %v1550, 0.0
    %v1688 = vmax.f32 %v1552, 0.0
    %v1689 = vmax.f32 %v1679, 0.0
    %v1690 = vmax.f32 %v1681, 0.0
    %v1691 = vpack.c.bf16 %v1687, %v1683
    %v1692 = vpack.c.bf16 %v1688, %v1684
    %v1693 = vpack.c.bf16 %v1689, %v1685
    %v1694 = vpack.c.bf16 %v1690, %v1686
    %v1696 = vlaneseq
    %v1697 = vshrl.u32 %v1696, 7
    %v1698 = vsub.s32 0, %v1697
    %v1699 = vrot.slane %v62, %v1698
    %v1700 = vlaneseq
    %v1701 = vshrl.u32 %v1700, 7
    %v1702 = vsub.s32 1, %v1701
    %v1703 = vrot.slane %v62, %v1702
    %v1770 = vunpack.c.l.b16 %v264
    %v1771 = vunpack.c.h.b16 %v264
    %v1772 = vunpack.c.l.b16 %v265
    %v1773 = vunpack.c.h.b16 %v265
    %v1774 = vunpack.c.l.b16 %v266
    %v1775 = vunpack.c.h.b16 %v266
    %v1776 = vunpack.c.l.b16 %v267
    %v1777 = vunpack.c.h.b16 %v267
    %v1778 = vunpack.c.l.b16 %v268
    %v1779 = vunpack.c.h.b16 %v268
    %v1780 = vunpack.c.l.b16 %v269
    %v1781 = vunpack.c.h.b16 %v269
    %v1782 = vunpack.c.l.b16 %v270
    %v1783 = vunpack.c.h.b16 %v270
    %v1784 = vunpack.c.l.b16 %v271
    %v1785 = vunpack.c.h.b16 %v271
    %v1786 = vunpack.c.l.b16 %v272
    %v1787 = vunpack.c.h.b16 %v272
    %v1788 = vunpack.c.l.b16 %v273
    %v1789 = vunpack.c.h.b16 %v273
    %v1790 = vunpack.c.l.b16 %v274
    %v1791 = vunpack.c.h.b16 %v274
    %v1792 = vunpack.c.l.b16 %v275
    %v1793 = vunpack.c.h.b16 %v275
    %v1794 = vunpack.c.l.b16 %v276
    %v1795 = vunpack.c.h.b16 %v276
    %v1796 = vunpack.c.l.b16 %v277
    %v1797 = vunpack.c.h.b16 %v277
    %v1798 = vunpack.c.l.b16 %v278
    %v1799 = vunpack.c.h.b16 %v278
    %v1800 = vunpack.c.l.b16 %v279
    %v1801 = vunpack.c.h.b16 %v279
    %v1802 = vunpack.c.l.b16 %v280
    %v1803 = vunpack.c.h.b16 %v280
    %v1804 = vunpack.c.l.b16 %v281
    %v1805 = vunpack.c.h.b16 %v281
    %v1806 = vunpack.c.l.b16 %v282
    %v1807 = vunpack.c.h.b16 %v282
    %v1808 = vunpack.c.l.b16 %v283
    %v1809 = vunpack.c.h.b16 %v283
    %v1810 = vunpack.c.l.b16 %v284
    %v1811 = vunpack.c.h.b16 %v284
    %v1812 = vunpack.c.l.b16 %v285
    %v1813 = vunpack.c.h.b16 %v285
    %v1814 = vunpack.c.l.b16 %v286
    %v1815 = vunpack.c.h.b16 %v286
    %v1816 = vunpack.c.l.b16 %v287
    %v1817 = vunpack.c.h.b16 %v287
    %v1818 = vunpack.c.l.b16 %v288
    %v1819 = vunpack.c.h.b16 %v288
    %v1820 = vunpack.c.l.b16 %v289
    %v1821 = vunpack.c.h.b16 %v289
    %v1822 = vunpack.c.l.b16 %v290
    %v1823 = vunpack.c.h.b16 %v290
    %v1824 = vunpack.c.l.b16 %v291
    %v1825 = vunpack.c.h.b16 %v291
    %v1826 = vunpack.c.l.b16 %v292
    %v1827 = vunpack.c.h.b16 %v292
    %v1828 = vunpack.c.l.b16 %v293
    %v1829 = vunpack.c.h.b16 %v293
    %v1830 = vunpack.c.l.b16 %v294
    %v1831 = vunpack.c.h.b16 %v294
    %v1832 = vunpack.c.l.b16 %v295
    %v1833 = vunpack.c.h.b16 %v295
    %v1834 = vunpack.c.l.b16 %v296
    %v1835 = vunpack.c.h.b16 %v296
    %v1836 = vunpack.c.l.b16 %v297
    %v1837 = vunpack.c.h.b16 %v297
    %v1838 = vunpack.c.l.b16 %v298
    %v1839 = vunpack.c.h.b16 %v298
    %v1840 = vunpack.c.l.b16 %v299
    %v1841 = vunpack.c.h.b16 %v299
    %v1842 = vunpack.c.l.b16 %v300
    %v1843 = vunpack.c.h.b16 %v300
    %v1844 = vunpack.c.l.b16 %v301
    %v1845 = vunpack.c.h.b16 %v301
    %v1846 = vunpack.c.l.b16 %v302
    %v1847 = vunpack.c.h.b16 %v302
    %v1848 = vunpack.c.l.b16 %v303
    %v1849 = vunpack.c.h.b16 %v303
    %v1850 = vunpack.c.l.b16 %v304
    %v1851 = vunpack.c.h.b16 %v304
    %v1852 = vunpack.c.l.b16 %v305
    %v1853 = vunpack.c.h.b16 %v305
    %v1854 = vunpack.c.l.b16 %v306
    %v1855 = vunpack.c.h.b16 %v306
    %v1856 = vunpack.c.l.b16 %v307
    %v1857 = vunpack.c.h.b16 %v307
    %v1858 = vunpack.c.l.b16 %v308
    %v1859 = vunpack.c.h.b16 %v308
    %v1860 = vunpack.c.l.b16 %v309
    %v1861 = vunpack.c.h.b16 %v309
    %v1862 = vunpack.c.l.b16 %v310
    %v1863 = vunpack.c.h.b16 %v310
    %v1864 = vunpack.c.l.b16 %v311
    %v1865 = vunpack.c.h.b16 %v311
    %v1866 = vunpack.c.l.b16 %v312
    %v1867 = vunpack.c.h.b16 %v312
    %v1868 = vunpack.c.l.b16 %v313
    %v1869 = vunpack.c.h.b16 %v313
    %v1870 = vunpack.c.l.b16 %v314
    %v1871 = vunpack.c.h.b16 %v314
    %v1872 = vunpack.c.l.b16 %v315
    %v1873 = vunpack.c.h.b16 %v315
    %v1874 = vunpack.c.l.b16 %v316
    %v1875 = vunpack.c.h.b16 %v316
    %v1876 = vunpack.c.l.b16 %v317
    %v1877 = vunpack.c.h.b16 %v317
    %v1878 = vunpack.c.l.b16 %v318
    %v1879 = vunpack.c.h.b16 %v318
    %v1880 = vunpack.c.l.b16 %v319
    %v1881 = vunpack.c.h.b16 %v319
    %v1882 = vunpack.c.l.b16 %v320
    %v1883 = vunpack.c.h.b16 %v320
    %v1884 = vunpack.c.l.b16 %v321
    %v1885 = vunpack.c.h.b16 %v321
    %v1886 = vunpack.c.l.b16 %v322
    %v1887 = vunpack.c.h.b16 %v322
    %v1888 = vunpack.c.l.b16 %v323
    %v1889 = vunpack.c.h.b16 %v323
    %v1890 = vunpack.c.l.b16 %v324
    %v1891 = vunpack.c.h.b16 %v324
    %v1892 = vunpack.c.l.b16 %v325
    %v1893 = vunpack.c.h.b16 %v325
    %v1894 = vunpack.c.l.b16 %v326
    %v1895 = vunpack.c.h.b16 %v326
    %v1896 = vunpack.c.l.b16 %v327
    %v1897 = vunpack.c.h.b16 %v327
    %v1898 = vpack.c.b16 %v1772, %v1770
    %v1899 = vpack.c.b16 %v1773, %v1771
    %v1900 = vpack.c.b16 %v1776, %v1774
    %v1901 = vpack.c.b16 %v1777, %v1775
    %v1902 = vpack.c.b16 %v1780, %v1778
    %v1903 = vpack.c.b16 %v1781, %v1779
    %v1904 = vpack.c.b16 %v1784, %v1782
    %v1905 = vpack.c.b16 %v1785, %v1783
    %v1906 = vpack.c.b16 %v1788, %v1786
    %v1907 = vpack.c.b16 %v1789, %v1787
    %v1908 = vpack.c.b16 %v1792, %v1790
    %v1909 = vpack.c.b16 %v1793, %v1791
    %v1910 = vpack.c.b16 %v1796, %v1794
    %v1911 = vpack.c.b16 %v1797, %v1795
    %v1912 = vpack.c.b16 %v1800, %v1798
    %v1913 = vpack.c.b16 %v1801, %v1799
    %v1914 = vpack.c.b16 %v1804, %v1802
    %v1915 = vpack.c.b16 %v1805, %v1803
    %v1916 = vpack.c.b16 %v1808, %v1806
    %v1917 = vpack.c.b16 %v1809, %v1807
    %v1918 = vpack.c.b16 %v1812, %v1810
    %v1919 = vpack.c.b16 %v1813, %v1811
    %v1920 = vpack.c.b16 %v1816, %v1814
    %v1921 = vpack.c.b16 %v1817, %v1815
    %v1922 = vpack.c.b16 %v1820, %v1818
    %v1923 = vpack.c.b16 %v1821, %v1819
    %v1924 = vpack.c.b16 %v1824, %v1822
    %v1925 = vpack.c.b16 %v1825, %v1823
    %v1926 = vpack.c.b16 %v1828, %v1826
    %v1927 = vpack.c.b16 %v1829, %v1827
    %v1928 = vpack.c.b16 %v1832, %v1830
    %v1929 = vpack.c.b16 %v1833, %v1831
    %v1930 = vpack.c.b16 %v1836, %v1834
    %v1931 = vpack.c.b16 %v1837, %v1835
    %v1932 = vpack.c.b16 %v1840, %v1838
    %v1933 = vpack.c.b16 %v1841, %v1839
    %v1934 = vpack.c.b16 %v1844, %v1842
    %v1935 = vpack.c.b16 %v1845, %v1843
    %v1936 = vpack.c.b16 %v1848, %v1846
    %v1937 = vpack.c.b16 %v1849, %v1847
    %v1938 = vpack.c.b16 %v1852, %v1850
    %v1939 = vpack.c.b16 %v1853, %v1851
    %v1940 = vpack.c.b16 %v1856, %v1854
    %v1941 = vpack.c.b16 %v1857, %v1855
    %v1942 = vpack.c.b16 %v1860, %v1858
    %v1943 = vpack.c.b16 %v1861, %v1859
    %v1944 = vpack.c.b16 %v1864, %v1862
    %v1945 = vpack.c.b16 %v1865, %v1863
    %v1946 = vpack.c.b16 %v1868, %v1866
    %v1947 = vpack.c.b16 %v1869, %v1867
    %v1948 = vpack.c.b16 %v1872, %v1870
    %v1949 = vpack.c.b16 %v1873, %v1871
    %v1950 = vpack.c.b16 %v1876, %v1874
    %v1951 = vpack.c.b16 %v1877, %v1875
    %v1952 = vpack.c.b16 %v1880, %v1878
    %v1953 = vpack.c.b16 %v1881, %v1879
    %v1954 = vpack.c.b16 %v1884, %v1882
    %v1955 = vpack.c.b16 %v1885, %v1883
    %v1956 = vpack.c.b16 %v1888, %v1886
    %v1957 = vpack.c.b16 %v1889, %v1887
    %v1958 = vpack.c.b16 %v1892, %v1890
    %v1959 = vpack.c.b16 %v1893, %v1891
    %v1960 = vpack.c.b16 %v1896, %v1894
    %v1961 = vpack.c.b16 %v1897, %v1895
    %2026 = vmatprep.subr.bf16.mxu0 %v1899
    %2027 = vmatpush1.bf16.msra.mxu0 %v1898
    %2028 = vmatprep.subr.bf16.mxu0 %v1901
    %2029 = vmatpush1.bf16.msra.mxu0 %v1900
    %2030 = vmatprep.subr.bf16.mxu0 %v1903
    %2031 = vmatpush1.bf16.msra.mxu0 %v1902
    %2032 = vmatprep.subr.bf16.mxu0 %v1905
    %2033 = vmatpush1.bf16.msra.mxu0 %v1904
    %2034 = vmatprep.subr.bf16.mxu0 %v1907
    %2035 = vmatpush1.bf16.msra.mxu0 %v1906
    %2036 = vmatprep.subr.bf16.mxu0 %v1909
    %2037 = vmatpush1.bf16.msra.mxu0 %v1908
    %2038 = vmatprep.subr.bf16.mxu0 %v1911
    %2039 = vmatpush1.bf16.msra.mxu0 %v1910
    %2040 = vmatprep.subr.bf16.mxu0 %v1913
    %2041 = vmatpush1.bf16.msra.mxu0 %v1912
    %2042 = vmatprep.subr.bf16.mxu0 %v1915
    %2043 = vmatpush1.bf16.msra.mxu0 %v1914
    %2044 = vmatprep.subr.bf16.mxu0 %v1917
    %2045 = vmatpush1.bf16.msra.mxu0 %v1916
    %2046 = vmatprep.subr.bf16.mxu0 %v1919
    %2047 = vmatpush1.bf16.msra.mxu0 %v1918
    %2048 = vmatprep.subr.bf16.mxu0 %v1921
    %2049 = vmatpush1.bf16.msra.mxu0 %v1920
    %2050 = vmatprep.subr.bf16.mxu0 %v1923
    %2051 = vmatpush1.bf16.msra.mxu0 %v1922
    %2052 = vmatprep.subr.bf16.mxu0 %v1925
    %2053 = vmatpush1.bf16.msra.mxu0 %v1924
    %2054 = vmatprep.subr.bf16.mxu0 %v1927
    %2055 = vmatpush1.bf16.msra.mxu0 %v1926
    %2056 = vmatprep.subr.bf16.mxu0 %v1929
    %2057 = vmatpush1.bf16.msra.mxu0 %v1928
    %2058 = vmatprep.mubr.bf16.mxu0 %v1692
    %2059 = vmatmul.mubr.bf16.gmra.mrb[0].mxu0 %v1691
    %v2060 = vpop.f32.mrb[0].mxu0
    %v2061 = vadd.f32 %v1699, %v2060
    %v2062 = vpop.f32.mrb[0].mxu0
    %v2063 = vadd.f32 %v1703, %v2062
    %v2064 = vpop.f32.mrb[0].mxu0
    %v2065 = vadd.f32 %v1699, %v2064
    %v2066 = vpop.f32.mrb[0].mxu0
    %v2067 = vadd.f32 %v1703, %v2066
    %2068 = vdwg.mxu0
    %2069 = vmatprep.subr.bf16.mxu0 %v1931
    %2070 = vmatpush1.bf16.msra.mxu0 %v1930
    %2071 = vmatprep.subr.bf16.mxu0 %v1933
    %2072 = vmatpush1.bf16.msra.mxu0 %v1932
    %2073 = vmatprep.subr.bf16.mxu0 %v1935
    %2074 = vmatpush1.bf16.msra.mxu0 %v1934
    %2075 = vmatprep.subr.bf16.mxu0 %v1937
    %2076 = vmatpush1.bf16.msra.mxu0 %v1936
    %2077 = vmatprep.subr.bf16.mxu0 %v1939
    %2078 = vmatpush1.bf16.msra.mxu0 %v1938
    %2079 = vmatprep.subr.bf16.mxu0 %v1941
    %2080 = vmatpush1.bf16.msra.mxu0 %v1940
    %2081 = vmatprep.subr.bf16.mxu0 %v1943
    %2082 = vmatpush1.bf16.msra.mxu0 %v1942
    %2083 = vmatprep.subr.bf16.mxu0 %v1945
    %2084 = vmatpush1.bf16.msra.mxu0 %v1944
    %2085 = vmatprep.subr.bf16.mxu0 %v1947
    %2086 = vmatpush1.bf16.msra.mxu0 %v1946
    %2087 = vmatprep.subr.bf16.mxu0 %v1949
    %2088 = vmatpush1.bf16.msra.mxu0 %v1948
    %2089 = vmatprep.subr.bf16.mxu0 %v1951
    %2090 = vmatpush1.bf16.msra.mxu0 %v1950
    %2091 = vmatprep.subr.bf16.mxu0 %v1953
    %2092 = vmatpush1.bf16.msra.mxu0 %v1952
    %2093 = vmatprep.subr.bf16.mxu0 %v1955
    %2094 = vmatpush1.bf16.msra.mxu0 %v1954
    %2095 = vmatprep.subr.bf16.mxu0 %v1957
    %2096 = vmatpush1.bf16.msra.mxu0 %v1956
    %2097 = vmatprep.subr.bf16.mxu0 %v1959
    %2098 = vmatpush1.bf16.msra.mxu0 %v1958
    %2099 = vmatprep.subr.bf16.mxu0 %v1961
    %2100 = vmatpush1.bf16.msra.mxu0 %v1960
    %2101 = vmatprep.mubr.bf16.mxu0 %v1694
    %2102 = vmatmul.mubr.bf16.gmra.mrb[0].mxu0 %v1693
    %v2103 = vpop.f32.mrb[0].mxu0
    %v2104 = vadd.f32 %v2061, %v2103
    %v2105 = vpop.f32.mrb[0].mxu0
    %v2106 = vadd.f32 %v2063, %v2105
    %v2107 = vpop.f32.mrb[0].mxu0
    %v2108 = vadd.f32 %v2065, %v2107
    %v2109 = vpop.f32.mrb[0].mxu0
    %v2110 = vadd.f32 %v2067, %v2109
    %2111 = vdwg.mxu0
    %v2112 = vmax.f32 %v2104, 0.0
    %v2113 = vmax.f32 %v2106, 0.0
    %v2114 = vmax.f32 %v2108, 0.0
    %v2115 = vmax.f32 %v2110, 0.0
    %v2117 = vlaneseq
    %v2118 = vshrl.u32 %v2117, 7
    %v2119 = vsub.s32 0, %v2118
    %v2120 = vrot.slane %v66, %v2119
    %v2121 = vlaneseq
    %v2122 = vshrl.u32 %v2121, 7
    %v2123 = vsub.s32 1, %v2122
    %v2124 = vrot.slane %v66, %v2123
    %v2127 = vmul.f32 %v2112, %v2120
    %v2128 = vmul.f32 %v2113, %v2124
    %v2129 = vmul.f32 %v2114, %v2120
    %v2130 = vmul.f32 %v2115, %v2124
    %v2131 = vadd.f32 %v2127, %v2128
    %2132 = vadd.xlane.f32.xlu0 %v2131
    %v2133 = vpop.xlane.xlu0 %2132
    %v2134 = vadd.f32 %v2129, %v2130
    %2135 = vadd.xlane.f32.xlu0 %v2134
    %v2136 = vpop.xlane.xlu0 %2135
    %v2137 = vadd.f32 %v2133, %v69
    %v2138 = vadd.f32 %v2136, %v69
    %v2139 = vxor.u32 %v2137, 2147483648
    %v2140 = vxor.u32 %v2138, 2147483648
    %v2141 = vmul.f32 %v2139, 1.442695
    %v2142 = vpow.pop %v2141
    %v2143 = vmul.f32 %v2140, 1.442695
    %v2144 = vpow.pop %v2143
    %v2145 = vadd.f32 %v2142, 1.0
    %v2146 = vadd.f32 %v2144, 1.0
    %v2147 = vrcp.pop %v2145
    %v2148 = vmul.f32 1.0, %v2147
    %v2149 = vrcp.pop %v2146
    %v2150 = vmul.f32 1.0, %v2149
    %s2151 = smul.u32 0, 16
    %v2152 = vlaneseq
    %v2153 = vshrl.u32 %v2152, 7
    %v2154 = vadd.s32 %v2153, 8
    %v2155 = vstv %s2151
    %v2156 = vadd.s32 %v2155, %v2153
    %v2157 = vadd.s32 %v2155, %v2154
    %vm2158 = vcmp.lt.s32.totalorder %v2156, 8
    %vm2159 = vcmp.lt.s32.totalorder %v2157, 8
    %v2160 = vsel %vm2158, 1, 0
    %v2161 = vsel %vm2159, 1, 0
    %v2162 = vcvt.s32.f32 %v2160
    %v2163 = vcvt.s32.f32 %v2161
    %v2164 = vsub.f32 %v2148, %v410
    %v2165 = vsub.f32 %v2150, %v411
    %v2166 = vmul.f32 %v2164, %v2164
    %v2167 = vmul.f32 %v2165, %v2165
    %v2168 = vmul.f32 %v2166, %v2162
    %v2169 = vmul.f32 %v2167, %v2163
    %vm2170 = vcmask 7168
    %v2171 = vsel %vm2170, %v2168, 0.0
    %v2172 = vsel %vm2170, %v2169, 0.0
    %v2173 = vadd.f32 %v2171, %v2172
    %2174 = vadd.xlane.f32.xlu0 %v2173
    %v2175 = vpop.xlane.xlu0 %2174
    %v2176 = vrot.slane %v2175, 4
    %v2177 = vadd.f32 %v2175, %v2176
    %v2178 = vrot.slane %v2177, 2
    %v2179 = vadd.f32 %v2177, %v2178
    %v2180 = vrot.slane %v2179, 1
    %v2181 = vadd.f32 %v2179, %v2180
    %s2182 = vtos %v2181
    %2184 = vset.pattern.permute.xlu0 0
    %2185 = vperm.xlu0 %2184, %v2148
    %v2186 = vpop.permute.xlu0 %2185
    %2189 = vset.pattern.permute.xlu0 0
    %2190 = vperm.xlu0 %2189, %v2150
    %v2191 = vpop.permute.xlu0 %2190
    %v2194 = vlaneseq
    %v2195 = vshrl.u32 %v2194, 7
    %v2196 = vsub.s32 0, %v2195
    %v2197 = vrot.slane %v60, %v2196
    %v2198 = vlaneseq
    %v2199 = vshrl.u32 %v2198, 7
    %v2200 = vsub.s32 1, %v2199
    %v2201 = vrot.slane %v60, %v2200
    %v2202 = vlaneseq
    %v2203 = vshrl.u32 %v2202, 7
    %v2204 = vsub.s32 2, %v2203
    %v2205 = vrot.slane %v60, %v2204
    %v2206 = vlaneseq
    %v2207 = vshrl.u32 %v2206, 7
    %v2208 = vsub.s32 3, %v2207
    %v2209 = vrot.slane %v60, %v2208
    %v2214 = vmul.f32 %v2186, %v2197
    %v2215 = vmul.f32 %v2186, %v2201
    %v2216 = vmul.f32 %v2186, %v2205
    %v2217 = vmul.f32 %v2186, %v2209
    %v2218 = vmul.f32 %v2191, %v2197
    %v2219 = vmul.f32 %v2191, %v2201
    %v2220 = vmul.f32 %v2191, %v2205
    %v2221 = vmul.f32 %v2191, %v2209
    %v2223 = vlaneseq
    %v2224 = vshrl.u32 %v2223, 7
    %v2225 = vsub.s32 0, %v2224
    %v2226 = vrot.slane %v58, %v2225
    %v2227 = vlaneseq
    %v2228 = vshrl.u32 %v2227, 7
    %v2229 = vsub.s32 1, %v2228
    %v2230 = vrot.slane %v58, %v2229
    %v2231 = vlaneseq
    %v2232 = vshrl.u32 %v2231, 7
    %v2233 = vsub.s32 2, %v2232
    %v2234 = vrot.slane %v58, %v2233
    %v2235 = vlaneseq
    %v2236 = vshrl.u32 %v2235, 7
    %v2237 = vsub.s32 3, %v2236
    %v2238 = vrot.slane %v58, %v2237
    %v2243 = vadd.f32 %v2214, %v2226
    %v2244 = vadd.f32 %v2215, %v2230
    %v2245 = vadd.f32 %v2216, %v2234
    %v2246 = vadd.f32 %v2217, %v2238
    %v2247 = vadd.f32 %v2218, %v2226
    %v2248 = vadd.f32 %v2219, %v2230
    %v2249 = vadd.f32 %v2220, %v2234
    %v2250 = vadd.f32 %v2221, %v2238
    %v2251 = vmax.f32 %v2243, 0.0
    %v2252 = vmax.f32 %v2244, 0.0
    %v2253 = vmax.f32 %v2245, 0.0
    %v2254 = vmax.f32 %v2246, 0.0
    %v2255 = vmax.f32 %v2247, 0.0
    %v2256 = vmax.f32 %v2248, 0.0
    %v2257 = vmax.f32 %v2249, 0.0
    %v2258 = vmax.f32 %v2250, 0.0
    %v2259 = vpack.c.bf16 %v2255, %v2251
    %v2260 = vpack.c.bf16 %v2256, %v2252
    %v2261 = vpack.c.bf16 %v2257, %v2253
    %v2262 = vpack.c.bf16 %v2258, %v2254
    %v2264 = vlaneseq
    %v2265 = vshrl.u32 %v2264, 7
    %v2266 = vsub.s32 0, %v2265
    %v2267 = vrot.slane %v64, %v2266
    %v2268 = vlaneseq
    %v2269 = vshrl.u32 %v2268, 7
    %v2270 = vsub.s32 1, %v2269
    %v2271 = vrot.slane %v64, %v2270
    %v2338 = vunpack.c.l.b16 %v328
    %v2339 = vunpack.c.h.b16 %v328
    %v2340 = vunpack.c.l.b16 %v329
    %v2341 = vunpack.c.h.b16 %v329
    %v2342 = vunpack.c.l.b16 %v330
    %v2343 = vunpack.c.h.b16 %v330
    %v2344 = vunpack.c.l.b16 %v331
    %v2345 = vunpack.c.h.b16 %v331
    %v2346 = vunpack.c.l.b16 %v332
    %v2347 = vunpack.c.h.b16 %v332
    %v2348 = vunpack.c.l.b16 %v333
    %v2349 = vunpack.c.h.b16 %v333
    %v2350 = vunpack.c.l.b16 %v334
    %v2351 = vunpack.c.h.b16 %v334
    %v2352 = vunpack.c.l.b16 %v335
    %v2353 = vunpack.c.h.b16 %v335
    %v2354 = vunpack.c.l.b16 %v336
    %v2355 = vunpack.c.h.b16 %v336
    %v2356 = vunpack.c.l.b16 %v337
    %v2357 = vunpack.c.h.b16 %v337
    %v2358 = vunpack.c.l.b16 %v338
    %v2359 = vunpack.c.h.b16 %v338
    %v2360 = vunpack.c.l.b16 %v339
    %v2361 = vunpack.c.h.b16 %v339
    %v2362 = vunpack.c.l.b16 %v340
    %v2363 = vunpack.c.h.b16 %v340
    %v2364 = vunpack.c.l.b16 %v341
    %v2365 = vunpack.c.h.b16 %v341
    %v2366 = vunpack.c.l.b16 %v342
    %v2367 = vunpack.c.h.b16 %v342
    %v2368 = vunpack.c.l.b16 %v343
    %v2369 = vunpack.c.h.b16 %v343
    %v2370 = vunpack.c.l.b16 %v344
    %v2371 = vunpack.c.h.b16 %v344
    %v2372 = vunpack.c.l.b16 %v345
    %v2373 = vunpack.c.h.b16 %v345
    %v2374 = vunpack.c.l.b16 %v346
    %v2375 = vunpack.c.h.b16 %v346
    %v2376 = vunpack.c.l.b16 %v347
    %v2377 = vunpack.c.h.b16 %v347
    %v2378 = vunpack.c.l.b16 %v348
    %v2379 = vunpack.c.h.b16 %v348
    %v2380 = vunpack.c.l.b16 %v349
    %v2381 = vunpack.c.h.b16 %v349
    %v2382 = vunpack.c.l.b16 %v350
    %v2383 = vunpack.c.h.b16 %v350
    %v2384 = vunpack.c.l.b16 %v351
    %v2385 = vunpack.c.h.b16 %v351
    %v2386 = vunpack.c.l.b16 %v352
    %v2387 = vunpack.c.h.b16 %v352
    %v2388 = vunpack.c.l.b16 %v353
    %v2389 = vunpack.c.h.b16 %v353
    %v2390 = vunpack.c.l.b16 %v354
    %v2391 = vunpack.c.h.b16 %v354
    %v2392 = vunpack.c.l.b16 %v355
    %v2393 = vunpack.c.h.b16 %v355
    %v2394 = vunpack.c.l.b16 %v356
    %v2395 = vunpack.c.h.b16 %v356
    %v2396 = vunpack.c.l.b16 %v357
    %v2397 = vunpack.c.h.b16 %v357
    %v2398 = vunpack.c.l.b16 %v358
    %v2399 = vunpack.c.h.b16 %v358
    %v2400 = vunpack.c.l.b16 %v359
    %v2401 = vunpack.c.h.b16 %v359
    %v2402 = vunpack.c.l.b16 %v360
    %v2403 = vunpack.c.h.b16 %v360
    %v2404 = vunpack.c.l.b16 %v361
    %v2405 = vunpack.c.h.b16 %v361
    %v2406 = vunpack.c.l.b16 %v362
    %v2407 = vunpack.c.h.b16 %v362
    %v2408 = vunpack.c.l.b16 %v363
    %v2409 = vunpack.c.h.b16 %v363
    %v2410 = vunpack.c.l.b16 %v364
    %v2411 = vunpack.c.h.b16 %v364
    %v2412 = vunpack.c.l.b16 %v365
    %v2413 = vunpack.c.h.b16 %v365
    %v2414 = vunpack.c.l.b16 %v366
    %v2415 = vunpack.c.h.b16 %v366
    %v2416 = vunpack.c.l.b16 %v367
    %v2417 = vunpack.c.h.b16 %v367
    %v2418 = vunpack.c.l.b16 %v368
    %v2419 = vunpack.c.h.b16 %v368
    %v2420 = vunpack.c.l.b16 %v369
    %v2421 = vunpack.c.h.b16 %v369
    %v2422 = vunpack.c.l.b16 %v370
    %v2423 = vunpack.c.h.b16 %v370
    %v2424 = vunpack.c.l.b16 %v371
    %v2425 = vunpack.c.h.b16 %v371
    %v2426 = vunpack.c.l.b16 %v372
    %v2427 = vunpack.c.h.b16 %v372
    %v2428 = vunpack.c.l.b16 %v373
    %v2429 = vunpack.c.h.b16 %v373
    %v2430 = vunpack.c.l.b16 %v374
    %v2431 = vunpack.c.h.b16 %v374
    %v2432 = vunpack.c.l.b16 %v375
    %v2433 = vunpack.c.h.b16 %v375
    %v2434 = vunpack.c.l.b16 %v376
    %v2435 = vunpack.c.h.b16 %v376
    %v2436 = vunpack.c.l.b16 %v377
    %v2437 = vunpack.c.h.b16 %v377
    %v2438 = vunpack.c.l.b16 %v378
    %v2439 = vunpack.c.h.b16 %v378
    %v2440 = vunpack.c.l.b16 %v379
    %v2441 = vunpack.c.h.b16 %v379
    %v2442 = vunpack.c.l.b16 %v380
    %v2443 = vunpack.c.h.b16 %v380
    %v2444 = vunpack.c.l.b16 %v381
    %v2445 = vunpack.c.h.b16 %v381
    %v2446 = vunpack.c.l.b16 %v382
    %v2447 = vunpack.c.h.b16 %v382
    %v2448 = vunpack.c.l.b16 %v383
    %v2449 = vunpack.c.h.b16 %v383
    %v2450 = vunpack.c.l.b16 %v384
    %v2451 = vunpack.c.h.b16 %v384
    %v2452 = vunpack.c.l.b16 %v385
    %v2453 = vunpack.c.h.b16 %v385
    %v2454 = vunpack.c.l.b16 %v386
    %v2455 = vunpack.c.h.b16 %v386
    %v2456 = vunpack.c.l.b16 %v387
    %v2457 = vunpack.c.h.b16 %v387
    %v2458 = vunpack.c.l.b16 %v388
    %v2459 = vunpack.c.h.b16 %v388
    %v2460 = vunpack.c.l.b16 %v389
    %v2461 = vunpack.c.h.b16 %v389
    %v2462 = vunpack.c.l.b16 %v390
    %v2463 = vunpack.c.h.b16 %v390
    %v2464 = vunpack.c.l.b16 %v391
    %v2465 = vunpack.c.h.b16 %v391
    %v2466 = vpack.c.b16 %v2340, %v2338
    %v2467 = vpack.c.b16 %v2341, %v2339
    %v2468 = vpack.c.b16 %v2344, %v2342
    %v2469 = vpack.c.b16 %v2345, %v2343
    %v2470 = vpack.c.b16 %v2348, %v2346
    %v2471 = vpack.c.b16 %v2349, %v2347
    %v2472 = vpack.c.b16 %v2352, %v2350
    %v2473 = vpack.c.b16 %v2353, %v2351
    %v2474 = vpack.c.b16 %v2356, %v2354
    %v2475 = vpack.c.b16 %v2357, %v2355
    %v2476 = vpack.c.b16 %v2360, %v2358
    %v2477 = vpack.c.b16 %v2361, %v2359
    %v2478 = vpack.c.b16 %v2364, %v2362
    %v2479 = vpack.c.b16 %v2365, %v2363
    %v2480 = vpack.c.b16 %v2368, %v2366
    %v2481 = vpack.c.b16 %v2369, %v2367
    %v2482 = vpack.c.b16 %v2372, %v2370
    %v2483 = vpack.c.b16 %v2373, %v2371
    %v2484 = vpack.c.b16 %v2376, %v2374
    %v2485 = vpack.c.b16 %v2377, %v2375
    %v2486 = vpack.c.b16 %v2380, %v2378
    %v2487 = vpack.c.b16 %v2381, %v2379
    %v2488 = vpack.c.b16 %v2384, %v2382
    %v2489 = vpack.c.b16 %v2385, %v2383
    %v2490 = vpack.c.b16 %v2388, %v2386
    %v2491 = vpack.c.b16 %v2389, %v2387
    %v2492 = vpack.c.b16 %v2392, %v2390
    %v2493 = vpack.c.b16 %v2393, %v2391
    %v2494 = vpack.c.b16 %v2396, %v2394
    %v2495 = vpack.c.b16 %v2397, %v2395
    %v2496 = vpack.c.b16 %v2400, %v2398
    %v2497 = vpack.c.b16 %v2401, %v2399
    %v2498 = vpack.c.b16 %v2404, %v2402
    %v2499 = vpack.c.b16 %v2405, %v2403
    %v2500 = vpack.c.b16 %v2408, %v2406
    %v2501 = vpack.c.b16 %v2409, %v2407
    %v2502 = vpack.c.b16 %v2412, %v2410
    %v2503 = vpack.c.b16 %v2413, %v2411
    %v2504 = vpack.c.b16 %v2416, %v2414
    %v2505 = vpack.c.b16 %v2417, %v2415
    %v2506 = vpack.c.b16 %v2420, %v2418
    %v2507 = vpack.c.b16 %v2421, %v2419
    %v2508 = vpack.c.b16 %v2424, %v2422
    %v2509 = vpack.c.b16 %v2425, %v2423
    %v2510 = vpack.c.b16 %v2428, %v2426
    %v2511 = vpack.c.b16 %v2429, %v2427
    %v2512 = vpack.c.b16 %v2432, %v2430
    %v2513 = vpack.c.b16 %v2433, %v2431
    %v2514 = vpack.c.b16 %v2436, %v2434
    %v2515 = vpack.c.b16 %v2437, %v2435
    %v2516 = vpack.c.b16 %v2440, %v2438
    %v2517 = vpack.c.b16 %v2441, %v2439
    %v2518 = vpack.c.b16 %v2444, %v2442
    %v2519 = vpack.c.b16 %v2445, %v2443
    %v2520 = vpack.c.b16 %v2448, %v2446
    %v2521 = vpack.c.b16 %v2449, %v2447
    %v2522 = vpack.c.b16 %v2452, %v2450
    %v2523 = vpack.c.b16 %v2453, %v2451
    %v2524 = vpack.c.b16 %v2456, %v2454
    %v2525 = vpack.c.b16 %v2457, %v2455
    %v2526 = vpack.c.b16 %v2460, %v2458
    %v2527 = vpack.c.b16 %v2461, %v2459
    %v2528 = vpack.c.b16 %v2464, %v2462
    %v2529 = vpack.c.b16 %v2465, %v2463
    %2594 = vmatprep.subr.bf16.mxu0 %v2467
    %2595 = vmatpush1.bf16.msra.mxu0 %v2466
    %2596 = vmatprep.subr.bf16.mxu0 %v2469
    %2597 = vmatpush1.bf16.msra.mxu0 %v2468
    %2598 = vmatprep.subr.bf16.mxu0 %v2471
    %2599 = vmatpush1.bf16.msra.mxu0 %v2470
    %2600 = vmatprep.subr.bf16.mxu0 %v2473
    %2601 = vmatpush1.bf16.msra.mxu0 %v2472
    %2602 = vmatprep.subr.bf16.mxu0 %v2475
    %2603 = vmatpush1.bf16.msra.mxu0 %v2474
    %2604 = vmatprep.subr.bf16.mxu0 %v2477
    %2605 = vmatpush1.bf16.msra.mxu0 %v2476
    %2606 = vmatprep.subr.bf16.mxu0 %v2479
    %2607 = vmatpush1.bf16.msra.mxu0 %v2478
    %2608 = vmatprep.subr.bf16.mxu0 %v2481
    %2609 = vmatpush1.bf16.msra.mxu0 %v2480
    %2610 = vmatprep.subr.bf16.mxu0 %v2483
    %2611 = vmatpush1.bf16.msra.mxu0 %v2482
    %2612 = vmatprep.subr.bf16.mxu0 %v2485
    %2613 = vmatpush1.bf16.msra.mxu0 %v2484
    %2614 = vmatprep.subr.bf16.mxu0 %v2487
    %2615 = vmatpush1.bf16.msra.mxu0 %v2486
    %2616 = vmatprep.subr.bf16.mxu0 %v2489
    %2617 = vmatpush1.bf16.msra.mxu0 %v2488
    %2618 = vmatprep.subr.bf16.mxu0 %v2491
    %2619 = vmatpush1.bf16.msra.mxu0 %v2490
    %2620 = vmatprep.subr.bf16.mxu0 %v2493
    %2621 = vmatpush1.bf16.msra.mxu0 %v2492
    %2622 = vmatprep.subr.bf16.mxu0 %v2495
    %2623 = vmatpush1.bf16.msra.mxu0 %v2494
    %2624 = vmatprep.subr.bf16.mxu0 %v2497
    %2625 = vmatpush1.bf16.msra.mxu0 %v2496
    %2626 = vmatprep.mubr.bf16.mxu0 %v2260
    %2627 = vmatmul.mubr.bf16.gmra.mrb[0].mxu0 %v2259
    %v2628 = vpop.f32.mrb[0].mxu0
    %v2629 = vadd.f32 %v2267, %v2628
    %v2630 = vpop.f32.mrb[0].mxu0
    %v2631 = vadd.f32 %v2271, %v2630
    %v2632 = vpop.f32.mrb[0].mxu0
    %v2633 = vadd.f32 %v2267, %v2632
    %v2634 = vpop.f32.mrb[0].mxu0
    %v2635 = vadd.f32 %v2271, %v2634
    %2636 = vdwg.mxu0
    %2637 = vmatprep.subr.bf16.mxu0 %v2499
    %2638 = vmatpush1.bf16.msra.mxu0 %v2498
    %2639 = vmatprep.subr.bf16.mxu0 %v2501
    %2640 = vmatpush1.bf16.msra.mxu0 %v2500
    %2641 = vmatprep.subr.bf16.mxu0 %v2503
    %2642 = vmatpush1.bf16.msra.mxu0 %v2502
    %2643 = vmatprep.subr.bf16.mxu0 %v2505
    %2644 = vmatpush1.bf16.msra.mxu0 %v2504
    %2645 = vmatprep.subr.bf16.mxu0 %v2507
    %2646 = vmatpush1.bf16.msra.mxu0 %v2506
    %2647 = vmatprep.subr.bf16.mxu0 %v2509
    %2648 = vmatpush1.bf16.msra.mxu0 %v2508
    %2649 = vmatprep.subr.bf16.mxu0 %v2511
    %2650 = vmatpush1.bf16.msra.mxu0 %v2510
    %2651 = vmatprep.subr.bf16.mxu0 %v2513
    %2652 = vmatpush1.bf16.msra.mxu0 %v2512
    %2653 = vmatprep.subr.bf16.mxu0 %v2515
    %2654 = vmatpush1.bf16.msra.mxu0 %v2514
    %2655 = vmatprep.subr.bf16.mxu0 %v2517
    %2656 = vmatpush1.bf16.msra.mxu0 %v2516
    %2657 = vmatprep.subr.bf16.mxu0 %v2519
    %2658 = vmatpush1.bf16.msra.mxu0 %v2518
    %2659 = vmatprep.subr.bf16.mxu0 %v2521
    %2660 = vmatpush1.bf16.msra.mxu0 %v2520
    %2661 = vmatprep.subr.bf16.mxu0 %v2523
    %2662 = vmatpush1.bf16.msra.mxu0 %v2522
    %2663 = vmatprep.subr.bf16.mxu0 %v2525
    %2664 = vmatpush1.bf16.msra.mxu0 %v2524
    %2665 = vmatprep.subr.bf16.mxu0 %v2527
    %2666 = vmatpush1.bf16.msra.mxu0 %v2526
    %2667 = vmatprep.subr.bf16.mxu0 %v2529
    %2668 = vmatpush1.bf16.msra.mxu0 %v2528
    %2669 = vmatprep.mubr.bf16.mxu0 %v2262
    %2670 = vmatmul.mubr.bf16.gmra.mrb[0].mxu0 %v2261
    %v2671 = vpop.f32.mrb[0].mxu0
    %v2672 = vadd.f32 %v2629, %v2671
    %v2673 = vpop.f32.mrb[0].mxu0
    %v2674 = vadd.f32 %v2631, %v2673
    %v2675 = vpop.f32.mrb[0].mxu0
    %v2676 = vadd.f32 %v2633, %v2675
    %v2677 = vpop.f32.mrb[0].mxu0
    %v2678 = vadd.f32 %v2635, %v2677
    %2679 = vdwg.mxu0
    %v2680 = vmax.f32 %v2672, 0.0
    %v2681 = vmax.f32 %v2674, 0.0
    %v2682 = vmax.f32 %v2676, 0.0
    %v2683 = vmax.f32 %v2678, 0.0
    %2684 = vmatprep.subr.mxu0 %v71
    %2685 = vmatpush1.xpose.msra.mxu0 %v70
    %2686 = vmatprep.subr.mxu0 0.0
    %2687 = vmatpush1.xpose.msra.mxu0 0.0
    %2688 = vmatprep.subr.mxu0 0.0
    %2689 = vmatpush1.xpose.msra.mxu0 0.0
    %2690 = vmatprep.subr.mxu0 0.0
    %2691 = vmatpush1.xpose.msra.mxu0 0.0
    %2692 = vmatprep.subr.mxu0 0.0
    %2693 = vmatpush1.xpose.msra.mxu0 0.0
    %2694 = vmatprep.subr.mxu0 0.0
    %2695 = vmatpush1.xpose.msra.mxu0 0.0
    %2696 = vmatprep.subr.mxu0 0.0
    %2697 = vmatpush1.xpose.msra.mxu0 0.0
    %2698 = vmatprep.subr.mxu0 0.0
    %2699 = vmatpush1.xpose.msra.mxu0 0.0
    %2700 = vmatprep.subr.mxu0 0.0
    %2701 = vmatpush1.xpose.msra.mxu0 0.0
    %2702 = vmatprep.subr.mxu0 0.0
    %2703 = vmatpush1.xpose.msra.mxu0 0.0
    %2704 = vmatprep.subr.mxu0 0.0
    %2705 = vmatpush1.xpose.msra.mxu0 0.0
    %2706 = vmatprep.subr.mxu0 0.0
    %2707 = vmatpush1.xpose.msra.mxu0 0.0
    %2708 = vmatprep.subr.mxu0 0.0
    %2709 = vmatpush1.xpose.msra.mxu0 0.0
    %2710 = vmatprep.subr.mxu0 0.0
    %2711 = vmatpush1.xpose.msra.mxu0 0.0
    %2712 = vmatprep.subr.mxu0 0.0
    %2713 = vmatpush1.xpose.msra.mxu0 0.0
    %2714 = vmatprep.subr.mxu0 0.0
    %2715 = vmatpush1.xpose.msra.mxu0 0.0
    %2716 = vmatprep.subr.mxu0 0.0
    %2717 = vmatpush1.xpose.msra.mxu0 0.0
    %2718 = vmatprep.subr.mxu0 0.0
    %2719 = vmatpush1.xpose.msra.mxu0 0.0
    %2720 = vmatprep.subr.mxu0 0.0
    %2721 = vmatpush1.xpose.msra.mxu0 0.0
    %2722 = vmatprep.subr.mxu0 0.0
    %2723 = vmatpush1.xpose.msra.mxu0 0.0
    %2724 = vmatprep.subr.mxu0 0.0
    %2725 = vmatpush1.xpose.msra.mxu0 0.0
    %2726 = vmatprep.subr.mxu0 0.0
    %2727 = vmatpush1.xpose.msra.mxu0 0.0
    %2728 = vmatprep.subr.mxu0 0.0
    %2729 = vmatpush1.xpose.msra.mxu0 0.0
    %2730 = vmatprep.subr.mxu0 0.0
    %2731 = vmatpush1.xpose.msra.mxu0 0.0
    %2732 = vmatprep.subr.mxu0 0.0
    %2733 = vmatpush1.xpose.msra.mxu0 0.0
    %2734 = vmatprep.subr.mxu0 0.0
    %2735 = vmatpush1.xpose.msra.mxu0 0.0
    %2736 = vmatprep.subr.mxu0 0.0
    %2737 = vmatpush1.xpose.msra.mxu0 0.0
    %2738 = vmatprep.subr.mxu0 0.0
    %2739 = vmatpush1.xpose.msra.mxu0 0.0
    %2740 = vmatprep.subr.mxu0 0.0
    %2741 = vmatpush1.xpose.msra.mxu0 0.0
    %2742 = vmatprep.subr.mxu0 0.0
    %2743 = vmatpush1.xpose.msra.mxu0 0.0
    %2744 = vmatprep.subr.mxu0 0.0
    %2745 = vmatpush1.xpose.msra.mxu0 0.0
    %2746 = vmatprep.subr.mxu0 0.0
    %2747 = vmatpush1.xpose.msra.mxu0 0.0
    %2748 = vmatprep.mubr.f32.mxu0 %v2681
    %2749 = vmatmul.mubr.f32.gmra.mrb[0].mxu0 %v2680
    %v2750 = vpop.f32.mrb[0].mxu0
    %v2751 = vadd.f32 %v67, %v2750
    %v2752 = vpop.f32.mrb[0].mxu0
    %2753 = vmatprep.mubr.f32.mxu0 %v2683
    %2754 = vmatmul.mubr.f32.gmra.mrb[0].mxu0 %v2682
    %v2755 = vpop.f32.mrb[0].mxu0
    %v2756 = vadd.f32 %v67, %v2755
    %v2757 = vpop.f32.mrb[0].mxu0
    %2758 = vdwg.mxu0
    %vm2759 = vcmask 31744
    %v2760 = vsel %vm2759, %v2751, -inf
    %2761 = vmax.xlane.f32.xlu0 %v2760
    %v2762 = vpop.xlane.xlu0 %2761
    %v2763 = vsel %vm2759, %v2756, -inf
    %2764 = vmax.xlane.f32.xlu0 %v2763
    %v2765 = vpop.xlane.xlu0 %2764
    %v2766 = vsub.f32 %v2751, %v2762
    %v2767 = vsub.f32 %v2756, %v2765
    %v2768 = vmul.f32 %v2766, 1.442695
    %v2769 = vpow.pop %v2768
    %v2770 = vmul.f32 %v2767, 1.442695
    %v2771 = vpow.pop %v2770
    %v2772 = vsel %vm2759, %v2769, 0.0
    %2773 = vadd.xlane.f32.xlu0 %v2772
    %v2774 = vpop.xlane.xlu0 %2773
    %v2775 = vsel %vm2759, %v2771, 0.0
    %2776 = vadd.xlane.f32.xlu0 %v2775
    %v2777 = vpop.xlane.xlu0 %2776
    %v2778 = vrcp.pop %v2774
    %v2779 = vrcp.pop %v2777
    %v2780 = vmul.f32 %v2769, %v2778
    %v2781 = vmul.f32 %v2771, %v2779
    %v2782 = vlaneseq
    %v2783 = vand.u32 %v2782, 127
    %2784 = vset.pattern.permute.xlu0 2
    %2785 = vperm.xlu0 %2784, %v412
    %v2786 = vpop.permute.xlu0 %2785
    %2787 = vset.pattern.permute.xlu0 2
    %2788 = vperm.xlu0 %2787, %v413
    %v2789 = vpop.permute.xlu0 %2788
    %vm2790 = vcmp.eq.s32.totalorder %v2783, %v2786
    %vm2791 = vcmp.eq.s32.totalorder %v2783, %v2789
    %v2792 = vsel %vm2790, 1, 0
    %v2793 = vsel %vm2791, 1, 0
    %v2794 = vcvt.s32.f32 %v2792
    %v2795 = vcvt.s32.f32 %v2793
    %v2796 = vlog2.pop %v2774
    %v2797 = vmul.f32 %v2796, 0.6931472
    %v2798 = vlog2.pop %v2777
    %v2799 = vmul.f32 %v2798, 0.6931472
    %v2800 = vsub.f32 %v2766, %v2797
    %v2801 = vsub.f32 %v2767, %v2799
    %v2802 = vmul.f32 %v2800, %v2794
    %v2803 = vmul.f32 %v2801, %v2795
    %v2804 = vsel %vm2759, %v2802, 0.0
    %2805 = vadd.xlane.f32.xlu0 %v2804
    %v2806 = vpop.xlane.xlu0 %2805
    %v2807 = vsel %vm2759, %v2803, 0.0
    %2808 = vadd.xlane.f32.xlu0 %v2807
    %v2809 = vpop.xlane.xlu0 %2808
    %v2810 = vmul.f32 %v2806, 1.442695
    %v2811 = vpow.pop %v2810
    %v2812 = vmul.f32 %v2809, 1.442695
    %v2813 = vpow.pop %v2812
    %v2814 = vmul.f32 %v68, %v2794
    %v2815 = vmul.f32 %v68, %v2795
    %v2816 = vsel %vm2759, %v2814, 0.0
    %2817 = vadd.xlane.f32.xlu0 %v2816
    %v2818 = vpop.xlane.xlu0 %2817
    %v2819 = vsel %vm2759, %v2815, 0.0
    %2820 = vadd.xlane.f32.xlu0 %v2819
    %v2821 = vpop.xlane.xlu0 %2820
    %v2822 = vsub.f32 0.0, %v2818
    %v2823 = vsub.f32 0.0, %v2821
    %v2824 = vsub.f32 1.0, %v2811
    %v2825 = vsub.f32 1.0, %v2813
    %v2826 = vmul.f32 %v2822, %v2824
    %v2827 = vmul.f32 %v2823, %v2825
    %v2828 = vmul.f32 %v2826, %v2824
    %v2829 = vmul.f32 %v2827, %v2825
    %v2830 = vmul.f32 %v2828, %v2806
    %v2831 = vmul.f32 %v2829, %v2809
    %v2832 = vmul.f32 %v2830, %v2162
    %v2833 = vmul.f32 %v2831, %v2163
    %v2834 = vsel %vm2170, %v2832, 0.0
    %v2835 = vsel %vm2170, %v2833, 0.0
    %v2836 = vadd.f32 %v2834, %v2835
    %2837 = vadd.xlane.f32.xlu0 %v2836
    %v2838 = vpop.xlane.xlu0 %2837
    %v2839 = vrot.slane %v2838, 4
    %v2840 = vadd.f32 %v2838, %v2839
    %v2841 = vrot.slane %v2840, 2
    %v2842 = vadd.f32 %v2840, %v2841
    %v2843 = vrot.slane %v2842, 1
    %v2844 = vadd.f32 %v2842, %v2843
    %s2845 = vtos %v2844
    %v2846 = vstv %s2845
    %v2847 = vstv %s2182
    %2848 = vrot.lane.b32.xlu0 %v2148, 4
    %v2849 = vpop.permute.xlu0 %2848
    %2850 = vrot.lane.b32.xlu0 %v2150, 4
    %v2851 = vpop.permute.xlu0 %2850
    %v2854 = vsel %vm2759, %v2780, %v2849
    %v2855 = vsel %vm2759, %v2781, %v2851
    %vm2856 = vcmask 39936
    %v2857 = vsel %vm2856, %v2854, %v2846
    %v2858 = vsel %vm2856, %v2855, %v2846
    %vm2859 = vcmask 48128
    %v2860 = vsel %vm2859, %v2857, %v2847
    %v2861 = vsel %vm2859, %v2858, %v2847
    %vm2862 = vcmask 56320
    %v2863 = vsel %vm2862, %v2860, 0.0
    %v2864 = vsel %vm2862, %v2861, 0.0
    %2865 = vxpose.xlu0.b32.start [1/16] %v2863, 128
    %2866 = vxpose.xlu0.b32.cont [2/16] %v2864, 128
    %2867 = vxpose.xlu0.b32.cont [3/16] 0.0, 128
    %2868 = vxpose.xlu0.b32.cont [4/16] 0.0, 128
    %2869 = vxpose.xlu0.b32.cont [5/16] 0.0, 128
    %2870 = vxpose.xlu0.b32.cont [6/16] 0.0, 128
    %2871 = vxpose.xlu0.b32.cont [7/16] 0.0, 128
    %2872 = vxpose.xlu0.b32.cont [8/16] 0.0, 128
    %2873 = vxpose.xlu0.b32.cont [9/16] 0.0, 128
    %2874 = vxpose.xlu0.b32.cont [10/16] 0.0, 128
    %2875 = vxpose.xlu0.b32.cont [11/16] 0.0, 128
    %2876 = vxpose.xlu0.b32.cont [12/16] 0.0, 128
    %2877 = vxpose.xlu0.b32.cont [13/16] 0.0, 128
    %2878 = vxpose.xlu0.b32.cont [14/16] 0.0, 128
    %2879 = vxpose.xlu0.b32.cont [15/16] 0.0, 128
    %2880 = vxpose.xlu0.b32.end [16/16] 0.0, 128
    %v2881 = vpop.trf.xlu0
    %v2882 = vpop.trf.xlu0
    %v2883 = vpop.trf.xlu0
    %v2884 = vpop.trf.xlu0
    %v2885 = vpop.trf.xlu0
    %v2886 = vpop.trf.xlu0
    %v2887 = vpop.trf.xlu0
    %v2888 = vpop.trf.xlu0
    %v2889 = vpop.trf.xlu0
    %v2890 = vpop.trf.xlu0
    %v2891 = vpop.trf.xlu0
    %v2892 = vpop.trf.xlu0
    %v2893 = vpop.trf.xlu0
    %v2894 = vpop.trf.xlu0
    %v2895 = vpop.trf.xlu0
    %v2896 = vpop.trf.xlu0
    %vm2897 = vcmask 130048
    %2898 = vst.msk [vmem:[#allocation8] sm:$0xff] %vm2897, %v2881
    // Predicated region
    $region26: #{tpu_custom_call.1} parent=1 // pred_check
      _
    $region27: #{tpu_custom_call.1} parent=1 // pred_check_branch
      %2900 = sbr.rel (0) target = $region29
    $region28: #{tpu_custom_call.1} parent=1 // pred_region
      %s2902 = ssub.s32 128, 128
      %2903 = vsyncadd [#allocation4], %s2902
      %s2905 = sshll.u32 [#allocation8], 4
      %s2906 = int_to_ptr.vmem [resolvable:$true] %s2905
      %2908 = dma.vmem_to_hbm [thread:$0]  %s2906, 128, %s3, [#allocation4]
    $region29: #{tpu_custom_call.1} parent=1 // pred_fallthru
      _
    // Predicated region
    $region30: #{tpu_custom_call.1} parent=1 // pred_check
      _
    $region31: #{tpu_custom_call.1} parent=1 // pred_check_branch
      %2910 = sbr.rel (0) target = $region33
    $region32: #{tpu_custom_call.1} parent=1 // pred_region
      %2911 = dma.done [#allocation4], 128
    $region33: #{tpu_custom_call.1} parent=1 // pred_fallthru
      _
    %2912 = vsyncpa [#allocation3], 1
    %2913 = vsyncpa [#allocation6], 1
    %2914 = vsyncpa [#allocation4], 1

// kernel: tpu_custom_call.1
$region0: #{tpu_custom_call.1}
  #allocation0 [shape = 'u32[]', space=smem, size = 0x4, offset = 0x4, fixed_abs, tag = 'smem constant byte address 0x4 - core index']
  #allocation1 [shape = 'u32[144,128]{1,0:T(1,128)}', space=vmem, size = 0x12000, scoped, tag = 'internal scratch']
  %s0 = inlined_call_operand.hbm [shape: bf16[16,776], index: 0, kind: input, shape index: {}]
  %s1 = inlined_call_operand.hbm [shape: bf16[1280,512], index: 1, kind: input, shape index: {}]
  %s2 = inlined_call_operand.hbm [shape: f32[16,512], index: 2, kind: input, shape index: {}]
  %s3 = inlined_call_operand.hbm [shape: f32[1,8,16], index: 3, kind: output, shape index: {}]
  %s4 = sld [smem:[#allocation0]]
  $region34: #{tpu_custom_call.1} parent=0
    _
  %s6 = ssub.s32 1, %s4
  %s7 = scalar_select 0, %s6, %s4
  $region1: #{tpu_custom_call.1} parent=0
    #allocation2 [shape = 'u8[28672]{0}', space=vmem, size = 0x7000, scoped, tag = 'input window, operand 0, single buffered']
    #allocation3 [shape = 's32[1]{0}', space=sflag, size = 0x4, scoped, tag = 'scoped memory for tpu_custom_call.1']
    #allocation4 [shape = 's32[1]{0}', space=sflag, size = 0x4, scoped, tag = 'scoped memory for tpu_custom_call.1']
    #allocation5 [shape = 'u8[1310720]{0}', space=vmem, size = 0x140000, scoped, tag = 'input window, operand 1, single buffered']
    #allocation6 [shape = 's32[1]{0}', space=sflag, size = 0x4, scoped, tag = 'scoped memory for tpu_custom_call.1']
    #allocation7 [shape = 'u8[32768]{0}', space=vmem, size = 0x8000, scoped, tag = 'input window, operand 2, single buffered']
    #allocation8 [shape = 'u8[4096]{0}', space=vmem, size = 0x1000, scoped, tag = 'output window, operand 0, single buffered']
    %8 = vsyncpa [#allocation3], 0
    %9 = vsyncpa [#allocation6], 0
    %10 = vsyncpa [#allocation4], 0
    // Predicated region
    $region2: #{tpu_custom_call.1} parent=1 // pred_check
      _
    $region3: #{tpu_custom_call.1} parent=1 // pred_check_branch
      %12 = sbr.rel (0) target = $region5
    $region4: #{tpu_custom_call.1} parent=1 // pred_region
      %s14 = ssub.s32 896, 896
      %15 = vsyncadd [#allocation3], %s14
      %s16 = sshll.u32 [#allocation2], 4
      %s17 = int_to_ptr.vmem [resolvable:$true] %s16
      %22 = dma.hbm_to_vmem [thread:$0]  %s0, 896, %s17, [#allocation3], 448, 448, 28
    $region5: #{tpu_custom_call.1} parent=1 // pred_fallthru
      _
    // Predicated region
    $region6: #{tpu_custom_call.1} parent=1 // pred_check
      _
    $region7: #{tpu_custom_call.1} parent=1 // pred_check_branch
      %24 = sbr.rel (0) target = $region9
    $region8: #{tpu_custom_call.1} parent=1 // pred_region
      %s26 = ssub.s32 40960, 40960
      %27 = vsyncadd [#allocation6], %s26
      %s28 = sshll.u32 [#allocation5], 4
      %s29 = int_to_ptr.vmem [resolvable:$true] %s28
      %34 = dma.hbm_to_vmem [thread:$0]  %s1, 40960, %s29, [#allocation6], 256, 256, 16
    $region9: #{tpu_custom_call.1} parent=1 // pred_fallthru
      _
    // Predicated region
    $region10: #{tpu_custom_call.1} parent=1 // pred_check
      _
    $region11: #{tpu_custom_call.1} parent=1 // pred_check_branch
      %36 = sbr.rel (0) target = $region13
    $region12: #{tpu_custom_call.1} parent=1 // pred_region
      %s38 = ssub.s32 1024, 1024
      %39 = vsyncadd [#allocation6], %s38
      %s40 = sshll.u32 [#allocation7], 4
      %s41 = int_to_ptr.vmem [resolvable:$true] %s40
      %46 = dma.hbm_to_vmem [thread:$0]  %s2, 1024, %s41, [#allocation6], 512, 512, 32
    $region13: #{tpu_custom_call.1} parent=1 // pred_fallthru
      _
    // Predicated region
    $region14: #{tpu_custom_call.1} parent=1 // pred_check
      _
    $region15: #{tpu_custom_call.1} parent=1 // pred_check_branch
      %48 = sbr.rel (0) target = $region17
    $region16: #{tpu_custom_call.1} parent=1 // pred_region
      %49 = dma.done [#allocation3], 896
    $region17: #{tpu_custom_call.1} parent=1 // pred_fallthru
      _
    // Predicated region
    $region18: #{tpu_custom_call.1} parent=1 // pred_check
      _
    $region19: #{tpu_custom_call.1} parent=1 // pred_check_branch
      %51 = sbr.rel (0) target = $region21
    $region20: #{tpu_custom_call.1} parent=1 // pred_region
      %52 = dma.done [#allocation6], 40960
    $region21: #{tpu_custom_call.1} parent=1 // pred_fallthru
      _
    // Predicated region
    $region22: #{tpu_custom_call.1} parent=1 // pred_check
      _
    $region23: #{tpu_custom_call.1} parent=1 // pred_check_branch
      %54 = sbr.rel (0) target = $region25
    $region24: #{tpu_custom_call.1} parent=1 // pred_region
      %55 = dma.done [#allocation6], 1024
    $region25: #{tpu_custom_call.1} parent=1 // pred_fallthru
      _
    %v56 = vld [vmem:[#allocation7] ss:$8 sm:$0xf]
    %s57 = scalar_lea.vmem [#allocation7], 1
    %v58 = vld [vmem:[%s57] ss:$8 sm:$0xf]
    %s59 = scalar_lea.vmem [#allocation7], 2
    %v60 = vld [vmem:[%s59] ss:$8 sm:$0xf]
    %s61 = scalar_lea.vmem [#allocation7], 3
    %v62 = vld [vmem:[%s61] ss:$8 sm:$0x3]
    %s63 = scalar_lea.vmem [#allocation7], 19
    %v64 = vld [vmem:[%s63] ss:$8 sm:$0x3]
    %s65 = scalar_lea.vmem [#allocation7], 4
    %v66 = vld [vmem:[%s65] ss:$8 sm:$0x3]
    %v67 = vld [vmem:[#allocation7 + $0x5] ss:$0 sm:$0xff]
    %v68 = vld [vmem:[#allocation7 + $0xd] ss:$0 sm:$0xff]
    %v69 = vld [vmem:[#allocation7 + $0x15] ss:$0 sm:$0xff]
    %v70 = vld [vmem:[#allocation7 + $0x20] sm:$0xf]
    %v71 = vld [vmem:[#allocation7 + $0x28] sm:$0xf]
    %v72 = vld [vmem:[#allocation5] sm:$0xff]
    %v73 = vld [vmem:[#allocation5 + $0x8] sm:$0xff]
    %v74 = vld [vmem:[#allocation5 + $0x10] sm:$0xff]
    %v75 = vld [vmem:[#allocation5 + $0x18] sm:$0xff]
    %v76 = vld [vmem:[#allocation5 + $0x20] sm:$0xff]
    %v77 = vld [vmem:[#allocation5 + $0x28] sm:$0xff]
    %v78 = vld [vmem:[#allocation5 + $0x30] sm:$0xff]
    %v79 = vld [vmem:[#allocation5 + $0x38] sm:$0xff]
    %v80 = vld [vmem:[#allocation5 + $0x40] sm:$0xff]
    %v81 = vld [vmem:[#allocation5 + $0x48] sm:$0xff]
    %v82 = vld [vmem:[#allocation5 + $0x50] sm:$0xff]
    %v83 = vld [vmem:[#allocation5 + $0x58] sm:$0xff]
    %v84 = vld [vmem:[#allocation5 + $0x60] sm:$0xff]
    %v85 = vld [vmem:[#allocation5 + $0x68] sm:$0xff]
    %v86 = vld [vmem:[#allocation5 + $0x70] sm:$0xff]
    %v87 = vld [vmem:[#allocation5 + $0x78] sm:$0xff]
    %v88 = vld [vmem:[#allocation5 + $0x80] sm:$0xff]
    %v89 = vld [vmem:[#allocation5 + $0x88] sm:$0xff]
    %v90 = vld [vmem:[#allocation5 + $0x90] sm:$0xff]
    %v91 = vld [vmem:[#allocation5 + $0x98] sm:$0xff]
    %v92 = vld [vmem:[#allocation5 + $0xa0] sm:$0xff]
    %v93 = vld [vmem:[#allocation5 + $0xa8] sm:$0xff]
    %v94 = vld [vmem:[#allocation5 + $0xb0] sm:$0xff]
    %v95 = vld [vmem:[#allocation5 + $0xb8] sm:$0xff]
    %v96 = vld [vmem:[#allocation5 + $0xc0] sm:$0xff]
    %v97 = vld [vmem:[#allocation5 + $0xc8] sm:$0xff]
    %v98 = vld [vmem:[#allocation5 + $0xd0] sm:$0xff]
    %v99 = vld [vmem:[#allocation5 + $0xd8] sm:$0xff]
    %v100 = vld [vmem:[#allocation5 + $0xe0] sm:$0xff]
    %v101 = vld [vmem:[#allocation5 + $0xe8] sm:$0xff]
    %v102 = vld [vmem:[#allocation5 + $0xf0] sm:$0xff]
    %v103 = vld [vmem:[#allocation5 + $0xf8] sm:$0xff]
    %v104 = vld [vmem:[#allocation5 + $0x100] sm:$0xff]
    %v105 = vld [vmem:[#allocation5 + $0x108] sm:$0xff]
    %v106 = vld [vmem:[#allocation5 + $0x110] sm:$0xff]
    %v107 = vld [vmem:[#allocation5 + $0x118] sm:$0xff]
    %v108 = vld [vmem:[#allocation5 + $0x120] sm:$0xff]
    %v109 = vld [vmem:[#allocation5 + $0x128] sm:$0xff]
    %v110 = vld [vmem:[#allocation5 + $0x130] sm:$0xff]
    %v111 = vld [vmem:[#allocation5 + $0x138] sm:$0xff]
    %v112 = vld [vmem:[#allocation5 + $0x140] sm:$0xff]
    %v113 = vld [vmem:[#allocation5 + $0x148] sm:$0xff]
    %v114 = vld [vmem:[#allocation5 + $0x150] sm:$0xff]
    %v115 = vld [vmem:[#allocation5 + $0x158] sm:$0xff]
    %v116 = vld [vmem:[#allocation5 + $0x160] sm:$0xff]
    %v117 = vld [vmem:[#allocation5 + $0x168] sm:$0xff]
    %v118 = vld [vmem:[#allocation5 + $0x170] sm:$0xff]
    %v119 = vld [vmem:[#allocation5 + $0x178] sm:$0xff]
    %v120 = vld [vmem:[#allocation5 + $0x180] sm:$0xff]
    %v121 = vld [vmem:[#allocation5 + $0x188] sm:$0xff]
    %v122 = vld [vmem:[#allocation5 + $0x190] sm:$0xff]
    %v123 = vld [vmem:[#allocation5 + $0x198] sm:$0xff]
    %v124 = vld [vmem:[#allocation5 + $0x1a0] sm:$0xff]
    %v125 = vld [vmem:[#allocation5 + $0x1a8] sm:$0xff]
    %v126 = vld [vmem:[#allocation5 + $0x1b0] sm:$0xff]
    %v127 = vld [vmem:[#allocation5 + $0x1b8] sm:$0xff]
    %v128 = vld [vmem:[#allocation5 + $0x1c0] sm:$0xff]
    %v129 = vld [vmem:[#allocation5 + $0x1c8] sm:$0xff]
    %v130 = vld [vmem:[#allocation5 + $0x1d0] sm:$0xff]
    %v131 = vld [vmem:[#allocation5 + $0x1d8] sm:$0xff]
    %v132 = vld [vmem:[#allocation5 + $0x1e0] sm:$0xff]
    %v133 = vld [vmem:[#allocation5 + $0x1e8] sm:$0xff]
    %v134 = vld [vmem:[#allocation5 + $0x1f0] sm:$0xff]
    %v135 = vld [vmem:[#allocation5 + $0x1f8] sm:$0xff]
    %v136 = vld [vmem:[#allocation5 + $0x200] sm:$0xff]
    %v137 = vld [vmem:[#allocation5 + $0x208] sm:$0xff]
    %v138 = vld [vmem:[#allocation5 + $0x210] sm:$0xff]
    %v139 = vld [vmem:[#allocation5 + $0x218] sm:$0xff]
    %v140 = vld [vmem:[#allocation5 + $0x220] sm:$0xff]
    %v141 = vld [vmem:[#allocation5 + $0x228] sm:$0xff]
    %v142 = vld [vmem:[#allocation5 + $0x230] sm:$0xff]
    %v143 = vld [vmem:[#allocation5 + $0x238] sm:$0xff]
    %v144 = vld [vmem:[#allocation5 + $0x240] sm:$0xff]
    %v145 = vld [vmem:[#allocation5 + $0x248] sm:$0xff]
    %v146 = vld [vmem:[#allocation5 + $0x250] sm:$0xff]
    %v147 = vld [vmem:[#allocation5 + $0x258] sm:$0xff]
    %v148 = vld [vmem:[#allocation5 + $0x260] sm:$0xff]
    %v149 = vld [vmem:[#allocation5 + $0x268] sm:$0xff]
    %v150 = vld [vmem:[#allocation5 + $0x270] sm:$0xff]
    %v151 = vld [vmem:[#allocation5 + $0x278] sm:$0xff]
    %v152 = vld [vmem:[#allocation5 + $0x280] sm:$0xff]
    %v153 = vld [vmem:[#allocation5 + $0x288] sm:$0xff]
    %v154 = vld [vmem:[#allocation5 + $0x290] sm:$0xff]
    %v155 = vld [vmem:[#allocation5 + $0x298] sm:$0xff]
    %v156 = vld [vmem:[#allocation5 + $0x2a0] sm:$0xff]
    %v157 = vld [vmem:[#allocation5 + $0x2a8] sm:$0xff]
    %v158 = vld [vmem:[#allocation5 + $0x2b0] sm:$0xff]
    %v159 = vld [vmem:[#allocation5 + $0x2b8] sm:$0xff]
    %v160 = vld [vmem:[#allocation5 + $0x2c0] sm:$0xff]
    %v161 = vld [vmem:[#allocation5 + $0x2c8] sm:$0xff]
    %v162 = vld [vmem:[#allocation5 + $0x2d0] sm:$0xff]
    %v163 = vld [vmem:[#allocation5 + $0x2d8] sm:$0xff]
    %v164 = vld [vmem:[#allocation5 + $0x2e0] sm:$0xff]
    %v165 = vld [vmem:[#allocation5 + $0x2e8] sm:$0xff]
    %v166 = vld [vmem:[#allocation5 + $0x2f0] sm:$0xff]
    %v167 = vld [vmem:[#allocation5 + $0x2f8] sm:$0xff]
    %v168 = vld [vmem:[#allocation5 + $0x300] sm:$0xff]
    %v169 = vld [vmem:[#allocation5 + $0x308] sm:$0xff]
    %v170 = vld [vmem:[#allocation5 + $0x310] sm:$0xff]
    %v171 = vld [vmem:[#allocation5 + $0x318] sm:$0xff]
    %v172 = vld [vmem:[#allocation5 + $0x320] sm:$0xff]
    %v173 = vld [vmem:[#allocation5 + $0x328] sm:$0xff]
    %v174 = vld [vmem:[#allocation5 + $0x330] sm:$0xff]
    %v175 = vld [vmem:[#allocation5 + $0x338] sm:$0xff]
    %v176 = vld [vmem:[#allocation5 + $0x340] sm:$0xff]
    %v177 = vld [vmem:[#allocation5 + $0x348] sm:$0xff]
    %v178 = vld [vmem:[#allocation5 + $0x350] sm:$0xff]
    %v179 = vld [vmem:[#allocation5 + $0x358] sm:$0xff]
    %v180 = vld [vmem:[#allocation5 + $0x360] sm:$0xff]
    %v181 = vld [vmem:[#allocation5 + $0x368] sm:$0xff]
    %v182 = vld [vmem:[#allocation5 + $0x370] sm:$0xff]
    %v183 = vld [vmem:[#allocation5 + $0x378] sm:$0xff]
    %v184 = vld [vmem:[#allocation5 + $0x380] sm:$0xff]
    %v185 = vld [vmem:[#allocation5 + $0x388] sm:$0xff]
    %v186 = vld [vmem:[#allocation5 + $0x390] sm:$0xff]
    %v187 = vld [vmem:[#allocation5 + $0x398] sm:$0xff]
    %v188 = vld [vmem:[#allocation5 + $0x3a0] sm:$0xff]
    %v189 = vld [vmem:[#allocation5 + $0x3a8] sm:$0xff]
    %v190 = vld [vmem:[#allocation5 + $0x3b0] sm:$0xff]
    %v191 = vld [vmem:[#allocation5 + $0x3b8] sm:$0xff]
    %v192 = vld [vmem:[#allocation5 + $0x3c0] sm:$0xff]
    %v193 = vld [vmem:[#allocation5 + $0x3c8] sm:$0xff]
    %v194 = vld [vmem:[#allocation5 + $0x3d0] sm:$0xff]
    %v195 = vld [vmem:[#allocation5 + $0x3d8] sm:$0xff]
    %v196 = vld [vmem:[#allocation5 + $0x3e0] sm:$0xff]
    %v197 = vld [vmem:[#allocation5 + $0x3e8] sm:$0xff]
    %v198 = vld [vmem:[#allocation5 + $0x3f0] sm:$0xff]
    %v199 = vld [vmem:[#allocation5 + $0x3f8] sm:$0xff]
    %v200 = vld [vmem:[#allocation5 + $0x400] sm:$0xff]
    %v201 = vld [vmem:[#allocation5 + $0x408] sm:$0xff]
    %v202 = vld [vmem:[#allocation5 + $0x410] sm:$0xff]
    %v203 = vld [vmem:[#allocation5 + $0x418] sm:$0xff]
    %v204 = vld [vmem:[#allocation5 + $0x420] sm:$0xff]
    %v205 = vld [vmem:[#allocation5 + $0x428] sm:$0xff]
    %v206 = vld [vmem:[#allocation5 + $0x430] sm:$0xff]
    %v207 = vld [vmem:[#allocation5 + $0x438] sm:$0xff]
    %v208 = vld [vmem:[#allocation5 + $0x440] sm:$0xff]
    %v209 = vld [vmem:[#allocation5 + $0x448] sm:$0xff]
    %v210 = vld [vmem:[#allocation5 + $0x450] sm:$0xff]
    %v211 = vld [vmem:[#allocation5 + $0x458] sm:$0xff]
    %v212 = vld [vmem:[#allocation5 + $0x460] sm:$0xff]
    %v213 = vld [vmem:[#allocation5 + $0x468] sm:$0xff]
    %v214 = vld [vmem:[#allocation5 + $0x470] sm:$0xff]
    %v215 = vld [vmem:[#allocation5 + $0x478] sm:$0xff]
    %v216 = vld [vmem:[#allocation5 + $0x480] sm:$0xff]
    %v217 = vld [vmem:[#allocation5 + $0x488] sm:$0xff]
    %v218 = vld [vmem:[#allocation5 + $0x490] sm:$0xff]
    %v219 = vld [vmem:[#allocation5 + $0x498] sm:$0xff]
    %v220 = vld [vmem:[#allocation5 + $0x4a0] sm:$0xff]
    %v221 = vld [vmem:[#allocation5 + $0x4a8] sm:$0xff]
    %v222 = vld [vmem:[#allocation5 + $0x4b0] sm:$0xff]
    %v223 = vld [vmem:[#allocation5 + $0x4b8] sm:$0xff]
    %v224 = vld [vmem:[#allocation5 + $0x4c0] sm:$0xff]
    %v225 = vld [vmem:[#allocation5 + $0x4c8] sm:$0xff]
    %v226 = vld [vmem:[#allocation5 + $0x4d0] sm:$0xff]
    %v227 = vld [vmem:[#allocation5 + $0x4d8] sm:$0xff]
    %v228 = vld [vmem:[#allocation5 + $0x4e0] sm:$0xff]
    %v229 = vld [vmem:[#allocation5 + $0x4e8] sm:$0xff]
    %v230 = vld [vmem:[#allocation5 + $0x4f0] sm:$0xff]
    %v231 = vld [vmem:[#allocation5 + $0x4f8] sm:$0xff]
    %v232 = vld [vmem:[#allocation5 + $0x500] sm:$0xff]
    %v233 = vld [vmem:[#allocation5 + $0x508] sm:$0xff]
    %v234 = vld [vmem:[#allocation5 + $0x510] sm:$0xff]
    %v235 = vld [vmem:[#allocation5 + $0x518] sm:$0xff]
    %v236 = vld [vmem:[#allocation5 + $0x520] sm:$0xff]
    %v237 = vld [vmem:[#allocation5 + $0x528] sm:$0xff]
    %v238 = vld [vmem:[#allocation5 + $0x530] sm:$0xff]
    %v239 = vld [vmem:[#allocation5 + $0x538] sm:$0xff]
    %v240 = vld [vmem:[#allocation5 + $0x540] sm:$0xff]
    %v241 = vld [vmem:[#allocation5 + $0x548] sm:$0xff]
    %v242 = vld [vmem:[#allocation5 + $0x550] sm:$0xff]
    %v243 = vld [vmem:[#allocation5 + $0x558] sm:$0xff]
    %v244 = vld [vmem:[#allocation5 + $0x560] sm:$0xff]
    %v245 = vld [vmem:[#allocation5 + $0x568] sm:$0xff]
    %v246 = vld [vmem:[#allocation5 + $0x570] sm:$0xff]
    %v247 = vld [vmem:[#allocation5 + $0x578] sm:$0xff]
    %v248 = vld [vmem:[#allocation5 + $0x580] sm:$0xff]
    %v249 = vld [vmem:[#allocation5 + $0x588] sm:$0xff]
    %v250 = vld [vmem:[#allocation5 + $0x590] sm:$0xff]
    %v251 = vld [vmem:[#allocation5 + $0x598] sm:$0xff]
    %v252 = vld [vmem:[#allocation5 + $0x5a0] sm:$0xff]
    %v253 = vld [vmem:[#allocation5 + $0x5a8] sm:$0xff]
    %v254 = vld [vmem:[#allocation5 + $0x5b0] sm:$0xff]
    %v255 = vld [vmem:[#allocation5 + $0x5b8] sm:$0xff]
    %v256 = vld [vmem:[#allocation5 + $0x5c0] sm:$0xff]
    %v257 = vld [vmem:[#allocation5 + $0x5c8] sm:$0xff]
    %v258 = vld [vmem:[#allocation5 + $0x5d0] sm:$0xff]
    %v259 = vld [vmem:[#allocation5 + $0x5d8] sm:$0xff]
    %v260 = vld [vmem:[#allocation5 + $0x5e0] sm:$0xff]
    %v261 = vld [vmem:[#allocation5 + $0x5e8] sm:$0xff]
    %v262 = vld [vmem:[#allocation5 + $0x5f0] sm:$0xff]
    %v263 = vld [vmem:[#allocation5 + $0x5f8] sm:$0xff]
    %v264 = vld [vmem:[#allocation5 + $0x600] sm:$0xff]
    %v265 = vld [vmem:[#allocation5 + $0x610] sm:$0xff]
    %v266 = vld [vmem:[#allocation5 + $0x620] sm:$0xff]
    %v267 = vld [vmem:[#allocation5 + $0x630] sm:$0xff]
    %v268 = vld [vmem:[#allocation5 + $0x640] sm:$0xff]
    %v269 = vld [vmem:[#allocation5 + $0x650] sm:$0xff]
    %v270 = vld [vmem:[#allocation5 + $0x660] sm:$0xff]
    %v271 = vld [vmem:[#allocation5 + $0x670] sm:$0xff]
    %v272 = vld [vmem:[#allocation5 + $0x680] sm:$0xff]
    %v273 = vld [vmem:[#allocation5 + $0x690] sm:$0xff]
    %v274 = vld [vmem:[#allocation5 + $0x6a0] sm:$0xff]
    %v275 = vld [vmem:[#allocation5 + $0x6b0] sm:$0xff]
    %v276 = vld [vmem:[#allocation5 + $0x6c0] sm:$0xff]
    %v277 = vld [vmem:[#allocation5 + $0x6d0] sm:$0xff]
    %v278 = vld [vmem:[#allocation5 + $0x6e0] sm:$0xff]
    %v279 = vld [vmem:[#allocation5 + $0x6f0] sm:$0xff]
    %v280 = vld [vmem:[#allocation5 + $0x700] sm:$0xff]
    %v281 = vld [vmem:[#allocation5 + $0x710] sm:$0xff]
    %v282 = vld [vmem:[#allocation5 + $0x720] sm:$0xff]
    %v283 = vld [vmem:[#allocation5 + $0x730] sm:$0xff]
    %v284 = vld [vmem:[#allocation5 + $0x740] sm:$0xff]
    %v285 = vld [vmem:[#allocation5 + $0x750] sm:$0xff]
    %v286 = vld [vmem:[#allocation5 + $0x760] sm:$0xff]
    %v287 = vld [vmem:[#allocation5 + $0x770] sm:$0xff]
    %v288 = vld [vmem:[#allocation5 + $0x780] sm:$0xff]
    %v289 = vld [vmem:[#allocation5 + $0x790] sm:$0xff]
    %v290 = vld [vmem:[#allocation5 + $0x7a0] sm:$0xff]
    %v291 = vld [vmem:[#allocation5 + $0x7b0] sm:$0xff]
    %v292 = vld [vmem:[#allocation5 + $0x7c0] sm:$0xff]
    %v293 = vld [vmem:[#allocation5 + $0x7d0] sm:$0xff]
    %v294 = vld [vmem:[#allocation5 + $0x7e0] sm:$0xff]
    %v295 = vld [vmem:[#allocation5 + $0x7f0] sm:$0xff]
    %v296 = vld [vmem:[#allocation5 + $0x800] sm:$0xff]
    %v297 = vld [vmem:[#allocation5 + $0x810] sm:$0xff]
    %v298 = vld [vmem:[#allocation5 + $0x820] sm:$0xff]
    %v299 = vld [vmem:[#allocation5 + $0x830] sm:$0xff]
    %v300 = vld [vmem:[#allocation5 + $0x840] sm:$0xff]
    %v301 = vld [vmem:[#allocation5 + $0x850] sm:$0xff]
    %v302 = vld [vmem:[#allocation5 + $0x860] sm:$0xff]
    %v303 = vld [vmem:[#allocation5 + $0x870] sm:$0xff]
    %v304 = vld [vmem:[#allocation5 + $0x880] sm:$0xff]
    %v305 = vld [vmem:[#allocation5 + $0x890] sm:$0xff]
    %v306 = vld [vmem:[#allocation5 + $0x8a0] sm:$0xff]
    %v307 = vld [vmem:[#allocation5 + $0x8b0] sm:$0xff]
    %v308 = vld [vmem:[#allocation5 + $0x8c0] sm:$0xff]
    %v309 = vld [vmem:[#allocation5 + $0x8d0] sm:$0xff]
    %v310 = vld [vmem:[#allocation5 + $0x8e0] sm:$0xff]
    %v311 = vld [vmem:[#allocation5 + $0x8f0] sm:$0xff]
    %v312 = vld [vmem:[#allocation5 + $0x900] sm:$0xff]
    %v313 = vld [vmem:[#allocation5 + $0x910] sm:$0xff]
    %v314 = vld [vmem:[#allocation5 + $0x920] sm:$0xff]
    %v315 = vld [vmem:[#allocation5 + $0x930] sm:$0xff]
    %v316 = vld [vmem:[#allocation5 + $0x940] sm:$0xff]
    %v317 = vld [vmem:[#allocation5 + $0x950] sm:$0xff]
    %v318 = vld [vmem:[#allocation5 + $0x960] sm:$0xff]
    %v319 = vld [vmem:[#allocation5 + $0x970] sm:$0xff]
    %v320 = vld [vmem:[#allocation5 + $0x980] sm:$0xff]
    %v321 = vld [vmem:[#allocation5 + $0x990] sm:$0xff]
    %v322 = vld [vmem:[#allocation5 + $0x9a0] sm:$0xff]
    %v323 = vld [vmem:[#allocation5 + $0x9b0] sm:$0xff]
    %v324 = vld [vmem:[#allocation5 + $0x9c0] sm:$0xff]
    %v325 = vld [vmem:[#allocation5 + $0x9d0] sm:$0xff]
    %v326 = vld [vmem:[#allocation5 + $0x9e0] sm:$0xff]
    %v327 = vld [vmem:[#allocation5 + $0x9f0] sm:$0xff]
    %v328 = vld [vmem:[#allocation5 + $0x608] sm:$0xff]
    %v329 = vld [vmem:[#allocation5 + $0x618] sm:$0xff]
    %v330 = vld [vmem:[#allocation5 + $0x628] sm:$0xff]
    %v331 = vld [vmem:[#allocation5 + $0x638] sm:$0xff]
    %v332 = vld [vmem:[#allocation5 + $0x648] sm:$0xff]
    %v333 = vld [vmem:[#allocation5 + $0x658] sm:$0xff]
    %v334 = vld [vmem:[#allocation5 + $0x668] sm:$0xff]
    %v335 = vld [vmem:[#allocation5 + $0x678] sm:$0xff]
    %v336 = vld [vmem:[#allocation5 + $0x688] sm:$0xff]
    %v337 = vld [vmem:[#allocation5 + $0x698] sm:$0xff]
    %v338 = vld [vmem:[#allocation5 + $0x6a8] sm:$0xff]
    %v339 = vld [vmem:[#allocation5 + $0x6b8] sm:$0xff]
    %v340 = vld [vmem:[#allocation5 + $0x6c8] sm:$0xff]
    %v341 = vld [vmem:[#allocation5 + $0x6d8] sm:$0xff]
    %v342 = vld [vmem:[#allocation5 + $0x6e8] sm:$0xff]
    %v343 = vld [vmem:[#allocation5 + $0x6f8] sm:$0xff]
    %v344 = vld [vmem:[#allocation5 + $0x708] sm:$0xff]
    %v345 = vld [vmem:[#allocation5 + $0x718] sm:$0xff]
    %v346 = vld [vmem:[#allocation5 + $0x728] sm:$0xff]
    %v347 = vld [vmem:[#allocation5 + $0x738] sm:$0xff]
    %v348 = vld [vmem:[#allocation5 + $0x748] sm:$0xff]
    %v349 = vld [vmem:[#allocation5 + $0x758] sm:$0xff]
    %v350 = vld [vmem:[#allocation5 + $0x768] sm:$0xff]
    %v351 = vld [vmem:[#allocation5 + $0x778] sm:$0xff]
    %v352 = vld [vmem:[#allocation5 + $0x788] sm:$0xff]
    %v353 = vld [vmem:[#allocation5 + $0x798] sm:$0xff]
    %v354 = vld [vmem:[#allocation5 + $0x7a8] sm:$0xff]
    %v355 = vld [vmem:[#allocation5 + $0x7b8] sm:$0xff]
    %v356 = vld [vmem:[#allocation5 + $0x7c8] sm:$0xff]
    %v357 = vld [vmem:[#allocation5 + $0x7d8] sm:$0xff]
    %v358 = vld [vmem:[#allocation5 + $0x7e8] sm:$0xff]
    %v359 = vld [vmem:[#allocation5 + $0x7f8] sm:$0xff]
    %v360 = vld [vmem:[#allocation5 + $0x808] sm:$0xff]
    %v361 = vld [vmem:[#allocation5 + $0x818] sm:$0xff]
    %v362 = vld [vmem:[#allocation5 + $0x828] sm:$0xff]
    %v363 = vld [vmem:[#allocation5 + $0x838] sm:$0xff]
    %v364 = vld [vmem:[#allocation5 + $0x848] sm:$0xff]
    %v365 = vld [vmem:[#allocation5 + $0x858] sm:$0xff]
    %v366 = vld [vmem:[#allocation5 + $0x868] sm:$0xff]
    %v367 = vld [vmem:[#allocation5 + $0x878] sm:$0xff]
    %v368 = vld [vmem:[#allocation5 + $0x888] sm:$0xff]
    %v369 = vld [vmem:[#allocation5 + $0x898] sm:$0xff]
    %v370 = vld [vmem:[#allocation5 + $0x8a8] sm:$0xff]
    %v371 = vld [vmem:[#allocation5 + $0x8b8] sm:$0xff]
    %v372 = vld [vmem:[#allocation5 + $0x8c8] sm:$0xff]
    %v373 = vld [vmem:[#allocation5 + $0x8d8] sm:$0xff]
    %v374 = vld [vmem:[#allocation5 + $0x8e8] sm:$0xff]
    %v375 = vld [vmem:[#allocation5 + $0x8f8] sm:$0xff]
    %v376 = vld [vmem:[#allocation5 + $0x908] sm:$0xff]
    %v377 = vld [vmem:[#allocation5 + $0x918] sm:$0xff]
    %v378 = vld [vmem:[#allocation5 + $0x928] sm:$0xff]
    %v379 = vld [vmem:[#allocation5 + $0x938] sm:$0xff]
    %v380 = vld [vmem:[#allocation5 + $0x948] sm:$0xff]
    %v381 = vld [vmem:[#allocation5 + $0x958] sm:$0xff]
    %v382 = vld [vmem:[#allocation5 + $0x968] sm:$0xff]
    %v383 = vld [vmem:[#allocation5 + $0x978] sm:$0xff]
    %v384 = vld [vmem:[#allocation5 + $0x988] sm:$0xff]
    %v385 = vld [vmem:[#allocation5 + $0x998] sm:$0xff]
    %v386 = vld [vmem:[#allocation5 + $0x9a8] sm:$0xff]
    %v387 = vld [vmem:[#allocation5 + $0x9b8] sm:$0xff]
    %v388 = vld [vmem:[#allocation5 + $0x9c8] sm:$0xff]
    %v389 = vld [vmem:[#allocation5 + $0x9d8] sm:$0xff]
    %v390 = vld [vmem:[#allocation5 + $0x9e8] sm:$0xff]
    %v391 = vld [vmem:[#allocation5 + $0x9f8] sm:$0xff]
    %v392 = vld [vmem:[#allocation2] sm:$0xff]
    %v393 = vld [vmem:[#allocation2 + $0x8] sm:$0xff]
    %v394 = vld [vmem:[#allocation2 + $0x10] sm:$0xff]
    %v395 = vld [vmem:[#allocation2 + $0x1c] sm:$0xff]
    %v396 = vld [vmem:[#allocation2 + $0x24] sm:$0xff]
    %v397 = vld [vmem:[#allocation2 + $0x2c] sm:$0xff]
    %v398 = vld [vmem:[#allocation2 + $0x18] sm:$0xf]
    %v399 = vld [vmem:[#allocation2 + $0x34] sm:$0xf]
    %v400 = vunpack.c.l.bf16 %v398
    %v401 = vunpack.c.l.bf16 %v399
    %404 = vrot.lane.b32.xlu0 %v400, 127
    %v405 = vpop.permute.xlu0 %404
    %406 = vrot.lane.b32.xlu0 %v401, 127
    %v407 = vpop.permute.xlu0 %406
    %v410 = vadd.f32 %v400, %v405
    %v411 = vadd.f32 %v401, %v407
    %v412 = vcvt.f32.s32.to.zero.pseudo %v400
    %v413 = vcvt.f32.s32.to.zero.pseudo %v401
    %v415 = vlaneseq
    %v416 = vshrl.u32 %v415, 7
    %v417 = vsub.s32 0, %v416
    %v418 = vrot.slane %v56, %v417
    %v419 = vlaneseq
    %v420 = vshrl.u32 %v419, 7
    %v421 = vsub.s32 1, %v420
    %v422 = vrot.slane %v56, %v421
    %v423 = vlaneseq
    %v424 = vshrl.u32 %v423, 7
    %v425 = vsub.s32 2, %v424
    %v426 = vrot.slane %v56, %v425
    %v427 = vlaneseq
    %v428 = vshrl.u32 %v427, 7
    %v429 = vsub.s32 3, %v428
    %v430 = vrot.slane %v56, %v429
    %v441 = vunpack.c.l.b16 %v392
    %v442 = vunpack.c.h.b16 %v392
    %v443 = vunpack.c.l.b16 %v393
    %v444 = vunpack.c.h.b16 %v393
    %v445 = vunpack.c.l.b16 %v394
    %v446 = vunpack.c.h.b16 %v394
    %v447 = vunpack.c.l.b16 %v395
    %v448 = vunpack.c.h.b16 %v395
    %v449 = vunpack.c.l.b16 %v396
    %v450 = vunpack.c.h.b16 %v396
    %v451 = vunpack.c.l.b16 %v397
    %v452 = vunpack.c.h.b16 %v397
    %v453 = vpack.c.b16 %v447, %v441
    %v454 = vpack.c.b16 %v448, %v442
    %v455 = vpack.c.b16 %v449, %v443
    %v456 = vpack.c.b16 %v450, %v444
    %v457 = vpack.c.b16 %v451, %v445
    %v458 = vpack.c.b16 %v452, %v446
    %v657 = vunpack.c.l.b16 %v72
    %v658 = vunpack.c.h.b16 %v72
    %v659 = vunpack.c.l.b16 %v73
    %v660 = vunpack.c.h.b16 %v73
    %v661 = vunpack.c.l.b16 %v74
    %v662 = vunpack.c.h.b16 %v74
    %v663 = vunpack.c.l.b16 %v75
    %v664 = vunpack.c.h.b16 %v75
    %v665 = vunpack.c.l.b16 %v76
    %v666 = vunpack.c.h.b16 %v76
    %v667 = vunpack.c.l.b16 %v77
    %v668 = vunpack.c.h.b16 %v77
    %v669 = vunpack.c.l.b16 %v78
    %v670 = vunpack.c.h.b16 %v78
    %v671 = vunpack.c.l.b16 %v79
    %v672 = vunpack.c.h.b16 %v79
    %v673 = vunpack.c.l.b16 %v80
    %v674 = vunpack.c.h.b16 %v80
    %v675 = vunpack.c.l.b16 %v81
    %v676 = vunpack.c.h.b16 %v81
    %v677 = vunpack.c.l.b16 %v82
    %v678 = vunpack.c.h.b16 %v82
    %v679 = vunpack.c.l.b16 %v83
    %v680 = vunpack.c.h.b16 %v83
    %v681 = vunpack.c.l.b16 %v84
    %v682 = vunpack.c.h.b16 %v84
    %v683 = vunpack.c.l.b16 %v85
    %v684 = vunpack.c.h.b16 %v85
    %v685 = vunpack.c.l.b16 %v86
    %v686 = vunpack.c.h.b16 %v86
    %v687 = vunpack.c.l.b16 %v87
    %v688 = vunpack.c.h.b16 %v87
    %v689 = vunpack.c.l.b16 %v88
    %v690 = vunpack.c.h.b16 %v88
    %v691 = vunpack.c.l.b16 %v89
    %v692 = vunpack.c.h.b16 %v89
    %v693 = vunpack.c.l.b16 %v90
    %v694 = vunpack.c.h.b16 %v90
    %v695 = vunpack.c.l.b16 %v91
    %v696 = vunpack.c.h.b16 %v91
    %v697 = vunpack.c.l.b16 %v92
    %v698 = vunpack.c.h.b16 %v92
    %v699 = vunpack.c.l.b16 %v93
    %v700 = vunpack.c.h.b16 %v93
    %v701 = vunpack.c.l.b16 %v94
    %v702 = vunpack.c.h.b16 %v94
    %v703 = vunpack.c.l.b16 %v95
    %v704 = vunpack.c.h.b16 %v95
    %v705 = vunpack.c.l.b16 %v96
    %v706 = vunpack.c.h.b16 %v96
    %v707 = vunpack.c.l.b16 %v97
    %v708 = vunpack.c.h.b16 %v97
    %v709 = vunpack.c.l.b16 %v98
    %v710 = vunpack.c.h.b16 %v98
    %v711 = vunpack.c.l.b16 %v99
    %v712 = vunpack.c.h.b16 %v99
    %v713 = vunpack.c.l.b16 %v100
    %v714 = vunpack.c.h.b16 %v100
    %v715 = vunpack.c.l.b16 %v101
    %v716 = vunpack.c.h.b16 %v101
    %v717 = vunpack.c.l.b16 %v102
    %v718 = vunpack.c.h.b16 %v102
    %v719 = vunpack.c.l.b16 %v103
    %v720 = vunpack.c.h.b16 %v103
    %v721 = vunpack.c.l.b16 %v104
    %v722 = vunpack.c.h.b16 %v104
    %v723 = vunpack.c.l.b16 %v105
    %v724 = vunpack.c.h.b16 %v105
    %v725 = vunpack.c.l.b16 %v106
    %v726 = vunpack.c.h.b16 %v106
    %v727 = vunpack.c.l.b16 %v107
    %v728 = vunpack.c.h.b16 %v107
    %v729 = vunpack.c.l.b16 %v108
    %v730 = vunpack.c.h.b16 %v108
    %v731 = vunpack.c.l.b16 %v109
    %v732 = vunpack.c.h.b16 %v109
    %v733 = vunpack.c.l.b16 %v110
    %v734 = vunpack.c.h.b16 %v110
    %v735 = vunpack.c.l.b16 %v111
    %v736 = vunpack.c.h.b16 %v111
    %v737 = vunpack.c.l.b16 %v112
    %v738 = vunpack.c.h.b16 %v112
    %v739 = vunpack.c.l.b16 %v113
    %v740 = vunpack.c.h.b16 %v113
    %v741 = vunpack.c.l.b16 %v114
    %v742 = vunpack.c.h.b16 %v114
    %v743 = vunpack.c.l.b16 %v115
    %v744 = vunpack.c.h.b16 %v115
    %v745 = vunpack.c.l.b16 %v116
    %v746 = vunpack.c.h.b16 %v116
    %v747 = vunpack.c.l.b16 %v117
    %v748 = vunpack.c.h.b16 %v117
    %v749 = vunpack.c.l.b16 %v118
    %v750 = vunpack.c.h.b16 %v118
    %v751 = vunpack.c.l.b16 %v119
    %v752 = vunpack.c.h.b16 %v119
    %v753 = vunpack.c.l.b16 %v120
    %v754 = vunpack.c.h.b16 %v120
    %v755 = vunpack.c.l.b16 %v121
    %v756 = vunpack.c.h.b16 %v121
    %v757 = vunpack.c.l.b16 %v122
    %v758 = vunpack.c.h.b16 %v122
    %v759 = vunpack.c.l.b16 %v123
    %v760 = vunpack.c.h.b16 %v123
    %v761 = vunpack.c.l.b16 %v124
    %v762 = vunpack.c.h.b16 %v124
    %v763 = vunpack.c.l.b16 %v125
    %v764 = vunpack.c.h.b16 %v125
    %v765 = vunpack.c.l.b16 %v126
    %v766 = vunpack.c.h.b16 %v126
    %v767 = vunpack.c.l.b16 %v127
    %v768 = vunpack.c.h.b16 %v127
    %v769 = vunpack.c.l.b16 %v128
    %v770 = vunpack.c.h.b16 %v128
    %v771 = vunpack.c.l.b16 %v129
    %v772 = vunpack.c.h.b16 %v129
    %v773 = vunpack.c.l.b16 %v130
    %v774 = vunpack.c.h.b16 %v130
    %v775 = vunpack.c.l.b16 %v131
    %v776 = vunpack.c.h.b16 %v131
    %v777 = vunpack.c.l.b16 %v132
    %v778 = vunpack.c.h.b16 %v132
    %v779 = vunpack.c.l.b16 %v133
    %v780 = vunpack.c.h.b16 %v133
    %v781 = vunpack.c.l.b16 %v134
    %v782 = vunpack.c.h.b16 %v134
    %v783 = vunpack.c.l.b16 %v135
    %v784 = vunpack.c.h.b16 %v135
    %v785 = vunpack.c.l.b16 %v136
    %v786 = vunpack.c.h.b16 %v136
    %v787 = vunpack.c.l.b16 %v137
    %v788 = vunpack.c.h.b16 %v137
    %v789 = vunpack.c.l.b16 %v138
    %v790 = vunpack.c.h.b16 %v138
    %v791 = vunpack.c.l.b16 %v139
    %v792 = vunpack.c.h.b16 %v139
    %v793 = vunpack.c.l.b16 %v140
    %v794 = vunpack.c.h.b16 %v140
    %v795 = vunpack.c.l.b16 %v141
    %v796 = vunpack.c.h.b16 %v141
    %v797 = vunpack.c.l.b16 %v142
    %v798 = vunpack.c.h.b16 %v142
    %v799 = vunpack.c.l.b16 %v143
    %v800 = vunpack.c.h.b16 %v143
    %v801 = vunpack.c.l.b16 %v144
    %v802 = vunpack.c.h.b16 %v144
    %v803 = vunpack.c.l.b16 %v145
    %v804 = vunpack.c.h.b16 %v145
    %v805 = vunpack.c.l.b16 %v146
    %v806 = vunpack.c.h.b16 %v146
    %v807 = vunpack.c.l.b16 %v147
    %v808 = vunpack.c.h.b16 %v147
    %v809 = vunpack.c.l.b16 %v148
    %v810 = vunpack.c.h.b16 %v148
    %v811 = vunpack.c.l.b16 %v149
    %v812 = vunpack.c.h.b16 %v149
    %v813 = vunpack.c.l.b16 %v150
    %v814 = vunpack.c.h.b16 %v150
    %v815 = vunpack.c.l.b16 %v151
    %v816 = vunpack.c.h.b16 %v151
    %v817 = vunpack.c.l.b16 %v152
    %v818 = vunpack.c.h.b16 %v152
    %v819 = vunpack.c.l.b16 %v153
    %v820 = vunpack.c.h.b16 %v153
    %v821 = vunpack.c.l.b16 %v154
    %v822 = vunpack.c.h.b16 %v154
    %v823 = vunpack.c.l.b16 %v155
    %v824 = vunpack.c.h.b16 %v155
    %v825 = vunpack.c.l.b16 %v156
    %v826 = vunpack.c.h.b16 %v156
    %v827 = vunpack.c.l.b16 %v157
    %v828 = vunpack.c.h.b16 %v157
    %v829 = vunpack.c.l.b16 %v158
    %v830 = vunpack.c.h.b16 %v158
    %v831 = vunpack.c.l.b16 %v159
    %v832 = vunpack.c.h.b16 %v159
    %v833 = vunpack.c.l.b16 %v160
    %v834 = vunpack.c.h.b16 %v160
    %v835 = vunpack.c.l.b16 %v161
    %v836 = vunpack.c.h.b16 %v161
    %v837 = vunpack.c.l.b16 %v162
    %v838 = vunpack.c.h.b16 %v162
    %v839 = vunpack.c.l.b16 %v163
    %v840 = vunpack.c.h.b16 %v163
    %v841 = vunpack.c.l.b16 %v164
    %v842 = vunpack.c.h.b16 %v164
    %v843 = vunpack.c.l.b16 %v165
    %v844 = vunpack.c.h.b16 %v165
    %v845 = vunpack.c.l.b16 %v166
    %v846 = vunpack.c.h.b16 %v166
    %v847 = vunpack.c.l.b16 %v167
    %v848 = vunpack.c.h.b16 %v167
    %v849 = vunpack.c.l.b16 %v168
    %v850 = vunpack.c.h.b16 %v168
    %v851 = vunpack.c.l.b16 %v169
    %v852 = vunpack.c.h.b16 %v169
    %v853 = vunpack.c.l.b16 %v170
    %v854 = vunpack.c.h.b16 %v170
    %v855 = vunpack.c.l.b16 %v171
    %v856 = vunpack.c.h.b16 %v171
    %v857 = vunpack.c.l.b16 %v172
    %v858 = vunpack.c.h.b16 %v172
    %v859 = vunpack.c.l.b16 %v173
    %v860 = vunpack.c.h.b16 %v173
    %v861 = vunpack.c.l.b16 %v174
    %v862 = vunpack.c.h.b16 %v174
    %v863 = vunpack.c.l.b16 %v175
    %v864 = vunpack.c.h.b16 %v175
    %v865 = vunpack.c.l.b16 %v176
    %v866 = vunpack.c.h.b16 %v176
    %v867 = vunpack.c.l.b16 %v177
    %v868 = vunpack.c.h.b16 %v177
    %v869 = vunpack.c.l.b16 %v178
    %v870 = vunpack.c.h.b16 %v178
    %v871 = vunpack.c.l.b16 %v179
    %v872 = vunpack.c.h.b16 %v179
    %v873 = vunpack.c.l.b16 %v180
    %v874 = vunpack.c.h.b16 %v180
    %v875 = vunpack.c.l.b16 %v181
    %v876 = vunpack.c.h.b16 %v181
    %v877 = vunpack.c.l.b16 %v182
    %v878 = vunpack.c.h.b16 %v182
    %v879 = vunpack.c.l.b16 %v183
    %v880 = vunpack.c.h.b16 %v183
    %v881 = vunpack.c.l.b16 %v184
    %v882 = vunpack.c.h.b16 %v184
    %v883 = vunpack.c.l.b16 %v185
    %v884 = vunpack.c.h.b16 %v185
    %v885 = vunpack.c.l.b16 %v186
    %v886 = vunpack.c.h.b16 %v186
    %v887 = vunpack.c.l.b16 %v187
    %v888 = vunpack.c.h.b16 %v187
    %v889 = vunpack.c.l.b16 %v188
    %v890 = vunpack.c.h.b16 %v188
    %v891 = vunpack.c.l.b16 %v189
    %v892 = vunpack.c.h.b16 %v189
    %v893 = vunpack.c.l.b16 %v190
    %v894 = vunpack.c.h.b16 %v190
    %v895 = vunpack.c.l.b16 %v191
    %v896 = vunpack.c.h.b16 %v191
    %v897 = vunpack.c.l.b16 %v192
    %v898 = vunpack.c.h.b16 %v192
    %v899 = vunpack.c.l.b16 %v193
    %v900 = vunpack.c.h.b16 %v193
    %v901 = vunpack.c.l.b16 %v194
    %v902 = vunpack.c.h.b16 %v194
    %v903 = vunpack.c.l.b16 %v195
    %v904 = vunpack.c.h.b16 %v195
    %v905 = vunpack.c.l.b16 %v196
    %v906 = vunpack.c.h.b16 %v196
    %v907 = vunpack.c.l.b16 %v197
    %v908 = vunpack.c.h.b16 %v197
    %v909 = vunpack.c.l.b16 %v198
    %v910 = vunpack.c.h.b16 %v198
    %v911 = vunpack.c.l.b16 %v199
    %v912 = vunpack.c.h.b16 %v199
    %v913 = vunpack.c.l.b16 %v200
    %v914 = vunpack.c.h.b16 %v200
    %v915 = vunpack.c.l.b16 %v201
    %v916 = vunpack.c.h.b16 %v201
    %v917 = vunpack.c.l.b16 %v202
    %v918 = vunpack.c.h.b16 %v202
    %v919 = vunpack.c.l.b16 %v203
    %v920 = vunpack.c.h.b16 %v203
    %v921 = vunpack.c.l.b16 %v204
    %v922 = vunpack.c.h.b16 %v204
    %v923 = vunpack.c.l.b16 %v205
    %v924 = vunpack.c.h.b16 %v205
    %v925 = vunpack.c.l.b16 %v206
    %v926 = vunpack.c.h.b16 %v206
    %v927 = vunpack.c.l.b16 %v207
    %v928 = vunpack.c.h.b16 %v207
    %v929 = vunpack.c.l.b16 %v208
    %v930 = vunpack.c.h.b16 %v208
    %v931 = vunpack.c.l.b16 %v209
    %v932 = vunpack.c.h.b16 %v209
    %v933 = vunpack.c.l.b16 %v210
    %v934 = vunpack.c.h.b16 %v210
    %v935 = vunpack.c.l.b16 %v211
    %v936 = vunpack.c.h.b16 %v211
    %v937 = vunpack.c.l.b16 %v212
    %v938 = vunpack.c.h.b16 %v212
    %v939 = vunpack.c.l.b16 %v213
    %v940 = vunpack.c.h.b16 %v213
    %v941 = vunpack.c.l.b16 %v214
    %v942 = vunpack.c.h.b16 %v214
    %v943 = vunpack.c.l.b16 %v215
    %v944 = vunpack.c.h.b16 %v215
    %v945 = vunpack.c.l.b16 %v216
    %v946 = vunpack.c.h.b16 %v216
    %v947 = vunpack.c.l.b16 %v217
    %v948 = vunpack.c.h.b16 %v217
    %v949 = vunpack.c.l.b16 %v218
    %v950 = vunpack.c.h.b16 %v218
    %v951 = vunpack.c.l.b16 %v219
    %v952 = vunpack.c.h.b16 %v219
    %v953 = vunpack.c.l.b16 %v220
    %v954 = vunpack.c.h.b16 %v220
    %v955 = vunpack.c.l.b16 %v221
    %v956 = vunpack.c.h.b16 %v221
    %v957 = vunpack.c.l.b16 %v222
    %v958 = vunpack.c.h.b16 %v222
    %v959 = vunpack.c.l.b16 %v223
    %v960 = vunpack.c.h.b16 %v223
    %v961 = vunpack.c.l.b16 %v224
    %v962 = vunpack.c.h.b16 %v224
    %v963 = vunpack.c.l.b16 %v225
    %v964 = vunpack.c.h.b16 %v225
    %v965 = vunpack.c.l.b16 %v226
    %v966 = vunpack.c.h.b16 %v226
    %v967 = vunpack.c.l.b16 %v227
    %v968 = vunpack.c.h.b16 %v227
    %v969 = vunpack.c.l.b16 %v228
    %v970 = vunpack.c.h.b16 %v228
    %v971 = vunpack.c.l.b16 %v229
    %v972 = vunpack.c.h.b16 %v229
    %v973 = vunpack.c.l.b16 %v230
    %v974 = vunpack.c.h.b16 %v230
    %v975 = vunpack.c.l.b16 %v231
    %v976 = vunpack.c.h.b16 %v231
    %v977 = vunpack.c.l.b16 %v232
    %v978 = vunpack.c.h.b16 %v232
    %v979 = vunpack.c.l.b16 %v233
    %v980 = vunpack.c.h.b16 %v233
    %v981 = vunpack.c.l.b16 %v234
    %v982 = vunpack.c.h.b16 %v234
    %v983 = vunpack.c.l.b16 %v235
    %v984 = vunpack.c.h.b16 %v235
    %v985 = vunpack.c.l.b16 %v236
    %v986 = vunpack.c.h.b16 %v236
    %v987 = vunpack.c.l.b16 %v237
    %v988 = vunpack.c.h.b16 %v237
    %v989 = vunpack.c.l.b16 %v238
    %v990 = vunpack.c.h.b16 %v238
    %v991 = vunpack.c.l.b16 %v239
    %v992 = vunpack.c.h.b16 %v239
    %v993 = vunpack.c.l.b16 %v240
    %v994 = vunpack.c.h.b16 %v240
    %v995 = vunpack.c.l.b16 %v241
    %v996 = vunpack.c.h.b16 %v241
    %v997 = vunpack.c.l.b16 %v242
    %v998 = vunpack.c.h.b16 %v242
    %v999 = vunpack.c.l.b16 %v243
    %v1000 = vunpack.c.h.b16 %v243
    %v1001 = vunpack.c.l.b16 %v244
    %v1002 = vunpack.c.h.b16 %v244
    %v1003 = vunpack.c.l.b16 %v245
    %v1004 = vunpack.c.h.b16 %v245
    %v1005 = vunpack.c.l.b16 %v246
    %v1006 = vunpack.c.h.b16 %v246
    %v1007 = vunpack.c.l.b16 %v247
    %v1008 = vunpack.c.h.b16 %v247
    %v1009 = vunpack.c.l.b16 %v248
    %v1010 = vunpack.c.h.b16 %v248
    %v1011 = vunpack.c.l.b16 %v249
    %v1012 = vunpack.c.h.b16 %v249
    %v1013 = vunpack.c.l.b16 %v250
    %v1014 = vunpack.c.h.b16 %v250
    %v1015 = vunpack.c.l.b16 %v251
    %v1016 = vunpack.c.h.b16 %v251
    %v1017 = vunpack.c.l.b16 %v252
    %v1018 = vunpack.c.h.b16 %v252
    %v1019 = vunpack.c.l.b16 %v253
    %v1020 = vunpack.c.h.b16 %v253
    %v1021 = vunpack.c.l.b16 %v254
    %v1022 = vunpack.c.h.b16 %v254
    %v1023 = vunpack.c.l.b16 %v255
    %v1024 = vunpack.c.h.b16 %v255
    %v1025 = vunpack.c.l.b16 %v256
    %v1026 = vunpack.c.h.b16 %v256
    %v1027 = vunpack.c.l.b16 %v257
    %v1028 = vunpack.c.h.b16 %v257
    %v1029 = vunpack.c.l.b16 %v258
    %v1030 = vunpack.c.h.b16 %v258
    %v1031 = vunpack.c.l.b16 %v259
    %v1032 = vunpack.c.h.b16 %v259
    %v1033 = vunpack.c.l.b16 %v260
    %v1034 = vunpack.c.h.b16 %v260
    %v1035 = vunpack.c.l.b16 %v261
    %v1036 = vunpack.c.h.b16 %v261
    %v1037 = vunpack.c.l.b16 %v262
    %v1038 = vunpack.c.h.b16 %v262
    %v1039 = vunpack.c.l.b16 %v263
    %v1040 = vunpack.c.h.b16 %v263
    %v1041 = vpack.c.b16 %v661, %v657
    %v1042 = vpack.c.b16 %v662, %v658
    %v1043 = vpack.c.b16 %v663, %v659
    %v1044 = vpack.c.b16 %v664, %v660
    %v1045 = vpack.c.b16 %v669, %v665
    %v1046 = vpack.c.b16 %v670, %v666
    %v1047 = vpack.c.b16 %v671, %v667
    %v1048 = vpack.c.b16 %v672, %v668
    %v1049 = vpack.c.b16 %v677, %v673
    %v1050 = vpack.c.b16 %v678, %v674
    %v1051 = vpack.c.b16 %v679, %v675
    %v1052 = vpack.c.b16 %v680, %v676
    %v1053 = vpack.c.b16 %v685, %v681
    %v1054 = vpack.c.b16 %v686, %v682
    %v1055 = vpack.c.b16 %v687, %v683
    %v1056 = vpack.c.b16 %v688, %v684
    %v1057 = vpack.c.b16 %v693, %v689
    %v1058 = vpack.c.b16 %v694, %v690
    %v1059 = vpack.c.b16 %v695, %v691
    %v1060 = vpack.c.b16 %v696, %v692
    %v1061 = vpack.c.b16 %v701, %v697
    %v1062 = vpack.c.b16 %v702, %v698
    %v1063 = vpack.c.b16 %v703, %v699
    %v1064 = vpack.c.b16 %v704, %v700
    %v1065 = vpack.c.b16 %v709, %v705
    %v1066 = vpack.c.b16 %v710, %v706
    %v1067 = vpack.c.b16 %v711, %v707
    %v1068 = vpack.c.b16 %v712, %v708
    %v1069 = vpack.c.b16 %v717, %v713
    %v1070 = vpack.c.b16 %v718, %v714
    %v1071 = vpack.c.b16 %v719, %v715
    %v1072 = vpack.c.b16 %v720, %v716
    %v1073 = vpack.c.b16 %v725, %v721
    %v1074 = vpack.c.b16 %v726, %v722
    %v1075 = vpack.c.b16 %v727, %v723
    %v1076 = vpack.c.b16 %v728, %v724
    %v1077 = vpack.c.b16 %v733, %v729
    %v1078 = vpack.c.b16 %v734, %v730
    %v1079 = vpack.c.b16 %v735, %v731
    %v1080 = vpack.c.b16 %v736, %v732
    %v1081 = vpack.c.b16 %v741, %v737
    %v1082 = vpack.c.b16 %v742, %v738
    %v1083 = vpack.c.b16 %v743, %v739
    %v1084 = vpack.c.b16 %v744, %v740
    %v1085 = vpack.c.b16 %v749, %v745
    %v1086 = vpack.c.b16 %v750, %v746
    %v1087 = vpack.c.b16 %v751, %v747
    %v1088 = vpack.c.b16 %v752, %v748
    %v1089 = vpack.c.b16 %v757, %v753
    %v1090 = vpack.c.b16 %v758, %v754
    %v1091 = vpack.c.b16 %v759, %v755
    %v1092 = vpack.c.b16 %v760, %v756
    %v1093 = vpack.c.b16 %v765, %v761
    %v1094 = vpack.c.b16 %v766, %v762
    %v1095 = vpack.c.b16 %v767, %v763
    %v1096 = vpack.c.b16 %v768, %v764
    %v1097 = vpack.c.b16 %v773, %v769
    %v1098 = vpack.c.b16 %v774, %v770
    %v1099 = vpack.c.b16 %v775, %v771
    %v1100 = vpack.c.b16 %v776, %v772
    %v1101 = vpack.c.b16 %v781, %v777
    %v1102 = vpack.c.b16 %v782, %v778
    %v1103 = vpack.c.b16 %v783, %v779
    %v1104 = vpack.c.b16 %v784, %v780
    %v1105 = vpack.c.b16 %v789, %v785
    %v1106 = vpack.c.b16 %v790, %v786
    %v1107 = vpack.c.b16 %v791, %v787
    %v1108 = vpack.c.b16 %v792, %v788
    %v1109 = vpack.c.b16 %v797, %v793
    %v1110 = vpack.c.b16 %v798, %v794
    %v1111 = vpack.c.b16 %v799, %v795
    %v1112 = vpack.c.b16 %v800, %v796
    %v1113 = vpack.c.b16 %v805, %v801
    %v1114 = vpack.c.b16 %v806, %v802
    %v1115 = vpack.c.b16 %v807, %v803
    %v1116 = vpack.c.b16 %v808, %v804
    %v1117 = vpack.c.b16 %v813, %v809
    %v1118 = vpack.c.b16 %v814, %v810
    %v1119 = vpack.c.b16 %v815, %v811
    %v1120 = vpack.c.b16 %v816, %v812
    %v1121 = vpack.c.b16 %v821, %v817
    %v1122 = vpack.c.b16 %v822, %v818
    %v1123 = vpack.c.b16 %v823, %v819
    %v1124 = vpack.c.b16 %v824, %v820
    %v1125 = vpack.c.b16 %v829, %v825
    %v1126 = vpack.c.b16 %v830, %v826
    %v1127 = vpack.c.b16 %v831, %v827
    %v1128 = vpack.c.b16 %v832, %v828
    %v1129 = vpack.c.b16 %v837, %v833
    %v1130 = vpack.c.b16 %v838, %v834
    %v1131 = vpack.c.b16 %v839, %v835
    %v1132 = vpack.c.b16 %v840, %v836
    %v1133 = vpack.c.b16 %v845, %v841
    %v1134 = vpack.c.b16 %v846, %v842
    %v1135 = vpack.c.b16 %v847, %v843
    %v1136 = vpack.c.b16 %v848, %v844
    %v1137 = vpack.c.b16 %v853, %v849
    %v1138 = vpack.c.b16 %v854, %v850
    %v1139 = vpack.c.b16 %v855, %v851
    %v1140 = vpack.c.b16 %v856, %v852
    %v1141 = vpack.c.b16 %v861, %v857
    %v1142 = vpack.c.b16 %v862, %v858
    %v1143 = vpack.c.b16 %v863, %v859
    %v1144 = vpack.c.b16 %v864, %v860
    %v1145 = vpack.c.b16 %v869, %v865
    %v1146 = vpack.c.b16 %v870, %v866
    %v1147 = vpack.c.b16 %v871, %v867
    %v1148 = vpack.c.b16 %v872, %v868
    %v1149 = vpack.c.b16 %v877, %v873
    %v1150 = vpack.c.b16 %v878, %v874
    %v1151 = vpack.c.b16 %v879, %v875
    %v1152 = vpack.c.b16 %v880, %v876
    %v1153 = vpack.c.b16 %v885, %v881
    %v1154 = vpack.c.b16 %v886, %v882
    %v1155 = vpack.c.b16 %v887, %v883
    %v1156 = vpack.c.b16 %v888, %v884
    %v1157 = vpack.c.b16 %v893, %v889
    %v1158 = vpack.c.b16 %v894, %v890
    %v1159 = vpack.c.b16 %v895, %v891
    %v1160 = vpack.c.b16 %v896, %v892
    %v1161 = vpack.c.b16 %v901, %v897
    %v1162 = vpack.c.b16 %v902, %v898
    %v1163 = vpack.c.b16 %v903, %v899
    %v1164 = vpack.c.b16 %v904, %v900
    %v1165 = vpack.c.b16 %v909, %v905
    %v1166 = vpack.c.b16 %v910, %v906
    %v1167 = vpack.c.b16 %v911, %v907
    %v1168 = vpack.c.b16 %v912, %v908
    %v1169 = vpack.c.b16 %v917, %v913
    %v1170 = vpack.c.b16 %v918, %v914
    %v1171 = vpack.c.b16 %v919, %v915
    %v1172 = vpack.c.b16 %v920, %v916
    %v1173 = vpack.c.b16 %v925, %v921
    %v1174 = vpack.c.b16 %v926, %v922
    %v1175 = vpack.c.b16 %v927, %v923
    %v1176 = vpack.c.b16 %v928, %v924
    %v1177 = vpack.c.b16 %v933, %v929
    %v1178 = vpack.c.b16 %v934, %v930
    %v1179 = vpack.c.b16 %v935, %v931
    %v1180 = vpack.c.b16 %v936, %v932
    %v1181 = vpack.c.b16 %v941, %v937
    %v1182 = vpack.c.b16 %v942, %v938
    %v1183 = vpack.c.b16 %v943, %v939
    %v1184 = vpack.c.b16 %v944, %v940
    %v1185 = vpack.c.b16 %v949, %v945
    %v1186 = vpack.c.b16 %v950, %v946
    %v1187 = vpack.c.b16 %v951, %v947
    %v1188 = vpack.c.b16 %v952, %v948
    %v1189 = vpack.c.b16 %v957, %v953
    %v1190 = vpack.c.b16 %v958, %v954
    %v1191 = vpack.c.b16 %v959, %v955
    %v1192 = vpack.c.b16 %v960, %v956
    %v1193 = vpack.c.b16 %v965, %v961
    %v1194 = vpack.c.b16 %v966, %v962
    %v1195 = vpack.c.b16 %v967, %v963
    %v1196 = vpack.c.b16 %v968, %v964
    %v1197 = vpack.c.b16 %v973, %v969
    %v1198 = vpack.c.b16 %v974, %v970
    %v1199 = vpack.c.b16 %v975, %v971
    %v1200 = vpack.c.b16 %v976, %v972
    %v1201 = vpack.c.b16 %v981, %v977
    %v1202 = vpack.c.b16 %v982, %v978
    %v1203 = vpack.c.b16 %v983, %v979
    %v1204 = vpack.c.b16 %v984, %v980
    %v1205 = vpack.c.b16 %v989, %v985
    %v1206 = vpack.c.b16 %v990, %v986
    %v1207 = vpack.c.b16 %v991, %v987
    %v1208 = vpack.c.b16 %v992, %v988
    %v1209 = vpack.c.b16 %v997, %v993
    %v1210 = vpack.c.b16 %v998, %v994
    %v1211 = vpack.c.b16 %v999, %v995
    %v1212 = vpack.c.b16 %v1000, %v996
    %v1213 = vpack.c.b16 %v1005, %v1001
    %v1214 = vpack.c.b16 %v1006, %v1002
    %v1215 = vpack.c.b16 %v1007, %v1003
    %v1216 = vpack.c.b16 %v1008, %v1004
    %v1217 = vpack.c.b16 %v1013, %v1009
    %v1218 = vpack.c.b16 %v1014, %v1010
    %v1219 = vpack.c.b16 %v1015, %v1011
    %v1220 = vpack.c.b16 %v1016, %v1012
    %v1221 = vpack.c.b16 %v1021, %v1017
    %v1222 = vpack.c.b16 %v1022, %v1018
    %v1223 = vpack.c.b16 %v1023, %v1019
    %v1224 = vpack.c.b16 %v1024, %v1020
    %v1225 = vpack.c.b16 %v1029, %v1025
    %v1226 = vpack.c.b16 %v1030, %v1026
    %v1227 = vpack.c.b16 %v1031, %v1027
    %v1228 = vpack.c.b16 %v1032, %v1028
    %v1229 = vpack.c.b16 %v1037, %v1033
    %v1230 = vpack.c.b16 %v1038, %v1034
    %v1231 = vpack.c.b16 %v1039, %v1035
    %v1232 = vpack.c.b16 %v1040, %v1036
    %1425 = vmatprep.subr.bf16.mxu0 %v1042
    %1426 = vmatpush1.bf16.msra.mxu0 %v1041
    %1427 = vmatprep.subr.bf16.mxu0 %v1046
    %1428 = vmatpush1.bf16.msra.mxu0 %v1045
    %1429 = vmatprep.subr.bf16.mxu0 %v1050
    %1430 = vmatpush1.bf16.msra.mxu0 %v1049
    %1431 = vmatprep.subr.bf16.mxu0 %v1054
    %1432 = vmatpush1.bf16.msra.mxu0 %v1053
    %1433 = vmatprep.subr.bf16.mxu0 %v1058
    %1434 = vmatpush1.bf16.msra.mxu0 %v1057
    %1435 = vmatprep.subr.bf16.mxu0 %v1062
    %1436 = vmatpush1.bf16.msra.mxu0 %v1061
    %1437 = vmatprep.subr.bf16.mxu0 %v1066
    %1438 = vmatpush1.bf16.msra.mxu0 %v1065
    %1439 = vmatprep.subr.bf16.mxu0 %v1070
    %1440 = vmatpush1.bf16.msra.mxu0 %v1069
    %1441 = vmatprep.subr.bf16.mxu0 %v1074
    %1442 = vmatpush1.bf16.msra.mxu0 %v1073
    %1443 = vmatprep.subr.bf16.mxu0 %v1078
    %1444 = vmatpush1.bf16.msra.mxu0 %v1077
    %1445 = vmatprep.subr.bf16.mxu0 %v1082
    %1446 = vmatpush1.bf16.msra.mxu0 %v1081
    %1447 = vmatprep.subr.bf16.mxu0 %v1086
    %1448 = vmatpush1.bf16.msra.mxu0 %v1085
    %1449 = vmatprep.subr.bf16.mxu0 %v1090
    %1450 = vmatpush1.bf16.msra.mxu0 %v1089
    %1451 = vmatprep.subr.bf16.mxu0 %v1094
    %1452 = vmatpush1.bf16.msra.mxu0 %v1093
    %1453 = vmatprep.subr.bf16.mxu0 %v1098
    %1454 = vmatpush1.bf16.msra.mxu0 %v1097
    %1455 = vmatprep.subr.bf16.mxu0 %v1102
    %1456 = vmatpush1.bf16.msra.mxu0 %v1101
    %1457 = vmatprep.mubr.bf16.mxu0 %v454
    %1458 = vmatmul.mubr.bf16.gmra.mrb[0].mxu0 %v453
    %v1459 = vpop.f32.mrb[0].mxu0
    %v1460 = vadd.f32 %v418, %v1459
    %v1461 = vpop.f32.mrb[0].mxu0
    %v1462 = vadd.f32 %v422, %v1461
    %v1463 = vpop.f32.mrb[0].mxu0
    %v1464 = vadd.f32 %v418, %v1463
    %v1465 = vpop.f32.mrb[0].mxu0
    %v1466 = vadd.f32 %v422, %v1465
    %1467 = vdwg.mxu0
    %1468 = vmatprep.subr.bf16.mxu0 %v1106
    %1469 = vmatpush1.bf16.msra.mxu0 %v1105
    %1470 = vmatprep.subr.bf16.mxu0 %v1110
    %1471 = vmatpush1.bf16.msra.mxu0 %v1109
    %1472 = vmatprep.subr.bf16.mxu0 %v1114
    %1473 = vmatpush1.bf16.msra.mxu0 %v1113
    %1474 = vmatprep.subr.bf16.mxu0 %v1118
    %1475 = vmatpush1.bf16.msra.mxu0 %v1117
    %1476 = vmatprep.subr.bf16.mxu0 %v1122
    %1477 = vmatpush1.bf16.msra.mxu0 %v1121
    %1478 = vmatprep.subr.bf16.mxu0 %v1126
    %1479 = vmatpush1.bf16.msra.mxu0 %v1125
    %1480 = vmatprep.subr.bf16.mxu0 %v1130
    %1481 = vmatpush1.bf16.msra.mxu0 %v1129
    %1482 = vmatprep.subr.bf16.mxu0 %v1134
    %1483 = vmatpush1.bf16.msra.mxu0 %v1133
    %1484 = vmatprep.subr.bf16.mxu0 %v1138
    %1485 = vmatpush1.bf16.msra.mxu0 %v1137
    %1486 = vmatprep.subr.bf16.mxu0 %v1142
    %1487 = vmatpush1.bf16.msra.mxu0 %v1141
    %1488 = vmatprep.subr.bf16.mxu0 %v1146
    %1489 = vmatpush1.bf16.msra.mxu0 %v1145
    %1490 = vmatprep.subr.bf16.mxu0 %v1150
    %1491 = vmatpush1.bf16.msra.mxu0 %v1149
    %1492 = vmatprep.subr.bf16.mxu0 %v1154
    %1493 = vmatpush1.bf16.msra.mxu0 %v1153
    %1494 = vmatprep.subr.bf16.mxu0 %v1158
    %1495 = vmatpush1.bf16.msra.mxu0 %v1157
    %1496 = vmatprep.subr.bf16.mxu0 %v1162
    %1497 = vmatpush1.bf16.msra.mxu0 %v1161
    %1498 = vmatprep.subr.bf16.mxu0 %v1166
    %1499 = vmatpush1.bf16.msra.mxu0 %v1165
    %1500 = vmatprep.mubr.bf16.mxu0 %v456
    %1501 = vmatmul.mubr.bf16.gmra.mrb[0].mxu0 %v455
    %v1502 = vpop.f32.mrb[0].mxu0
    %v1503 = vadd.f32 %v1460, %v1502
    %v1504 = vpop.f32.mrb[0].mxu0
    %v1505 = vadd.f32 %v1462, %v1504
    %v1506 = vpop.f32.mrb[0].mxu0
    %v1507 = vadd.f32 %v1464, %v1506
    %v1508 = vpop.f32.mrb[0].mxu0
    %v1509 = vadd.f32 %v1466, %v1508
    %1510 = vdwg.mxu0
    %1511 = vmatprep.subr.bf16.mxu0 %v1170
    %1512 = vmatpush1.bf16.msra.mxu0 %v1169
    %1513 = vmatprep.subr.bf16.mxu0 %v1174
    %1514 = vmatpush1.bf16.msra.mxu0 %v1173
    %1515 = vmatprep.subr.bf16.mxu0 %v1178
    %1516 = vmatpush1.bf16.msra.mxu0 %v1177
    %1517 = vmatprep.subr.bf16.mxu0 %v1182
    %1518 = vmatpush1.bf16.msra.mxu0 %v1181
    %1519 = vmatprep.subr.bf16.mxu0 %v1186
    %1520 = vmatpush1.bf16.msra.mxu0 %v1185
    %1521 = vmatprep.subr.bf16.mxu0 %v1190
    %1522 = vmatpush1.bf16.msra.mxu0 %v1189
    %1523 = vmatprep.subr.bf16.mxu0 %v1194
    %1524 = vmatpush1.bf16.msra.mxu0 %v1193
    %1525 = vmatprep.subr.bf16.mxu0 %v1198
    %1526 = vmatpush1.bf16.msra.mxu0 %v1197
    %1527 = vmatprep.subr.bf16.mxu0 %v1202
    %1528 = vmatpush1.bf16.msra.mxu0 %v1201
    %1529 = vmatprep.subr.bf16.mxu0 %v1206
    %1530 = vmatpush1.bf16.msra.mxu0 %v1205
    %1531 = vmatprep.subr.bf16.mxu0 %v1210
    %1532 = vmatpush1.bf16.msra.mxu0 %v1209
    %1533 = vmatprep.subr.bf16.mxu0 %v1214
    %1534 = vmatpush1.bf16.msra.mxu0 %v1213
    %1535 = vmatprep.subr.bf16.mxu0 %v1218
    %1536 = vmatpush1.bf16.msra.mxu0 %v1217
    %1537 = vmatprep.subr.bf16.mxu0 %v1222
    %1538 = vmatpush1.bf16.msra.mxu0 %v1221
    %1539 = vmatprep.subr.bf16.mxu0 %v1226
    %1540 = vmatpush1.bf16.msra.mxu0 %v1225
    %1541 = vmatprep.subr.bf16.mxu0 %v1230
    %1542 = vmatpush1.bf16.msra.mxu0 %v1229
    %1543 = vmatprep.mubr.bf16.mxu0 %v458
    %1544 = vmatmul.mubr.bf16.gmra.mrb[0].mxu0 %v457
    %v1545 = vpop.f32.mrb[0].mxu0
    %v1546 = vadd.f32 %v1503, %v1545
    %v1547 = vpop.f32.mrb[0].mxu0
    %v1548 = vadd.f32 %v1505, %v1547
    %v1549 = vpop.f32.mrb[0].mxu0
    %v1550 = vadd.f32 %v1507, %v1549
    %v1551 = vpop.f32.mrb[0].mxu0
    %v1552 = vadd.f32 %v1509, %v1551
    %1553 = vdwg.mxu0
    %1554 = vmatprep.subr.bf16.mxu0 %v1044
    %1555 = vmatpush1.bf16.msra.mxu0 %v1043
    %1556 = vmatprep.subr.bf16.mxu0 %v1048
    %1557 = vmatpush1.bf16.msra.mxu0 %v1047
    %1558 = vmatprep.subr.bf16.mxu0 %v1052
    %1559 = vmatpush1.bf16.msra.mxu0 %v1051
    %1560 = vmatprep.subr.bf16.mxu0 %v1056
    %1561 = vmatpush1.bf16.msra.mxu0 %v1055
    %1562 = vmatprep.subr.bf16.mxu0 %v1060
    %1563 = vmatpush1.bf16.msra.mxu0 %v1059
    %1564 = vmatprep.subr.bf16.mxu0 %v1064
    %1565 = vmatpush1.bf16.msra.mxu0 %v1063
    %1566 = vmatprep.subr.bf16.mxu0 %v1068
    %1567 = vmatpush1.bf16.msra.mxu0 %v1067
    %1568 = vmatprep.subr.bf16.mxu0 %v1072
    %1569 = vmatpush1.bf16.msra.mxu0 %v1071
    %1570 = vmatprep.subr.bf16.mxu0 %v1076
    %1571 = vmatpush1.bf16.msra.mxu0 %v1075
    %1572 = vmatprep.subr.bf16.mxu0 %v1080
    %1573 = vmatpush1.bf16.msra.mxu0 %v1079
    %1574 = vmatprep.subr.bf16.mxu0 %v1084
    %1575 = vmatpush1.bf16.msra.mxu0 %v1083
    %1576 = vmatprep.subr.bf16.mxu0 %v1088
    %1577 = vmatpush1.bf16.msra.mxu0 %v1087
    %1578 = vmatprep.subr.bf16.mxu0 %v1092
    %1579 = vmatpush1.bf16.msra.mxu0 %v1091
    %1580 = vmatprep.subr.bf16.mxu0 %v1096
    %1581 = vmatpush1.bf16.msra.mxu0 %v1095
    %1582 = vmatprep.subr.bf16.mxu0 %v1100
    %1583 = vmatpush1.bf16.msra.mxu0 %v1099
    %1584 = vmatprep.subr.bf16.mxu0 %v1104
    %1585 = vmatpush1.bf16.msra.mxu0 %v1103
    %1586 = vmatprep.mubr.bf16.mxu0 %v454
    %1587 = vmatmul.mubr.bf16.gmra.mrb[0].mxu0 %v453
    %v1588 = vpop.f32.mrb[0].mxu0
    %v1589 = vadd.f32 %v426, %v1588
    %v1590 = vpop.f32.mrb[0].mxu0
    %v1591 = vadd.f32 %v430, %v1590
    %v1592 = vpop.f32.mrb[0].mxu0
    %v1593 = vadd.f32 %v426, %v1592
    %v1594 = vpop.f32.mrb[0].mxu0
    %v1595 = vadd.f32 %v430, %v1594
    %1596 = vdwg.mxu0
    %1597 = vmatprep.subr.bf16.mxu0 %v1108
    %1598 = vmatpush1.bf16.msra.mxu0 %v1107
    %1599 = vmatprep.subr.bf16.mxu0 %v1112
    %1600 = vmatpush1.bf16.msra.mxu0 %v1111
    %1601 = vmatprep.subr.bf16.mxu0 %v1116
    %1602 = vmatpush1.bf16.msra.mxu0 %v1115
    %1603 = vmatprep.subr.bf16.mxu0 %v1120
    %1604 = vmatpush1.bf16.msra.mxu0 %v1119
    %1605 = vmatprep.subr.bf16.mxu0 %v1124
    %1606 = vmatpush1.bf16.msra.mxu0 %v1123
    %1607 = vmatprep.subr.bf16.mxu0 %v1128
    %1608 = vmatpush1.bf16.msra.mxu0 %v1127
    %1609 = vmatprep.subr.bf16.mxu0 %v1132
    %1610 = vmatpush1.bf16.msra.mxu0 %v1131
    %1611 = vmatprep.subr.bf16.mxu0 %v1136
    %1612 = vmatpush1.bf16.msra.mxu0 %v1135
    %1613 = vmatprep.subr.bf16.mxu0 %v1140
    %1614 = vmatpush1.bf16.msra.mxu0 %v1139
    %1615 = vmatprep.subr.bf16.mxu0 %v1144
    %1616 = vmatpush1.bf16.msra.mxu0 %v1143
    %1617 = vmatprep.subr.bf16.mxu0 %v1148
    %1618 = vmatpush1.bf16.msra.mxu0 %v1147
    %1619 = vmatprep.subr.bf16.mxu0 %v1152
    %1620 = vmatpush1.bf16.msra.mxu0 %v1151
    %1621 = vmatprep.subr.bf16.mxu0 %v1156
    %1622 = vmatpush1.bf16.msra.mxu0 %v1155
    %1623 = vmatprep.subr.bf16.mxu0 %v1160
    %1624 = vmatpush1.bf16.msra.mxu0 %v1159
    %1625 = vmatprep.subr.bf16.mxu0 %v1164
    %1626 = vmatpush1.bf16.msra.mxu0 %v1163
    %1627 = vmatprep.subr.bf16.mxu0 %v1168
    %1628 = vmatpush1.bf16.msra.mxu0 %v1167
    %1629 = vmatprep.mubr.bf16.mxu0 %v456
    %1630 = vmatmul.mubr.bf16.gmra.mrb[0].mxu0 %v455
    %v1631 = vpop.f32.mrb[0].mxu0
    %v1632 = vadd.f32 %v1589, %v1631
    %v1633 = vpop.f32.mrb[0].mxu0
    %v1634 = vadd.f32 %v1591, %v1633
    %v1635 = vpop.f32.mrb[0].mxu0
    %v1636 = vadd.f32 %v1593, %v1635
    %v1637 = vpop.f32.mrb[0].mxu0
    %v1638 = vadd.f32 %v1595, %v1637
    %1639 = vdwg.mxu0
    %1640 = vmatprep.subr.bf16.mxu0 %v1172
    %1641 = vmatpush1.bf16.msra.mxu0 %v1171
    %1642 = vmatprep.subr.bf16.mxu0 %v1176
    %1643 = vmatpush1.bf16.msra.mxu0 %v1175
    %1644 = vmatprep.subr.bf16.mxu0 %v1180
    %1645 = vmatpush1.bf16.msra.mxu0 %v1179
    %1646 = vmatprep.subr.bf16.mxu0 %v1184
    %1647 = vmatpush1.bf16.msra.mxu0 %v1183
    %1648 = vmatprep.subr.bf16.mxu0 %v1188
    %1649 = vmatpush1.bf16.msra.mxu0 %v1187
    %1650 = vmatprep.subr.bf16.mxu0 %v1192
    %1651 = vmatpush1.bf16.msra.mxu0 %v1191
    %1652 = vmatprep.subr.bf16.mxu0 %v1196
    %1653 = vmatpush1.bf16.msra.mxu0 %v1195
    %1654 = vmatprep.subr.bf16.mxu0 %v1200
    %1655 = vmatpush1.bf16.msra.mxu0 %v1199
    %1656 = vmatprep.subr.bf16.mxu0 %v1204
    %1657 = vmatpush1.bf16.msra.mxu0 %v1203
    %1658 = vmatprep.subr.bf16.mxu0 %v1208
    %1659 = vmatpush1.bf16.msra.mxu0 %v1207
    %1660 = vmatprep.subr.bf16.mxu0 %v1212
    %1661 = vmatpush1.bf16.msra.mxu0 %v1211
    %1662 = vmatprep.subr.bf16.mxu0 %v1216
    %1663 = vmatpush1.bf16.msra.mxu0 %v1215
    %1664 = vmatprep.subr.bf16.mxu0 %v1220
    %1665 = vmatpush1.bf16.msra.mxu0 %v1219
    %1666 = vmatprep.subr.bf16.mxu0 %v1224
    %1667 = vmatpush1.bf16.msra.mxu0 %v1223
    %1668 = vmatprep.subr.bf16.mxu0 %v1228
    %1669 = vmatpush1.bf16.msra.mxu0 %v1227
    %1670 = vmatprep.subr.bf16.mxu0 %v1232
    %1671 = vmatpush1.bf16.msra.mxu0 %v1231
    %1672 = vmatprep.mubr.bf16.mxu0 %v458
    %1673 = vmatmul.mubr.bf16.gmra.mrb[0].mxu0 %v457
    %v1674 = vpop.f32.mrb[0].mxu0
    %v1675 = vadd.f32 %v1632, %v1674
    %v1676 = vpop.f32.mrb[0].mxu0
    %v1677 = vadd.f32 %v1634, %v1676
    %v1678 = vpop.f32.mrb[0].mxu0
    %v1679 = vadd.f32 %v1636, %v1678
    %v1680 = vpop.f32.mrb[0].mxu0
    %v1681 = vadd.f32 %v1638, %v1680
    %1682 = vdwg.mxu0
    %v1683 = vmax.f32 %v1546, 0.0
    %v1684 = vmax.f32 %v1548, 0.0
    %v1685 = vmax.f32 %v1675, 0.0
    %v1686 = vmax.f32 %v1677, 0.0
    %v1687 = vmax.f32 %v1550, 0.0
    %v1688 = vmax.f32 %v1552, 0.0
    %v1689 = vmax.f32 %v1679, 0.0
    %v1690 = vmax.f32 %v1681, 0.0
    %v1691 = vpack.c.bf16 %v1687, %v1683
    %v1692 = vpack.c.bf16 %v1688, %v1684
    %v1693 = vpack.c.bf16 %v1689, %v1685
    %v1694 = vpack.c.bf16 %v1690, %v1686
    %v1696 = vlaneseq
    %v1697 = vshrl.u32 %v1696, 7
    %v1698 = vsub.s32 0, %v1697
    %v1699 = vrot.slane %v62, %v1698
    %v1700 = vlaneseq
    %v1701 = vshrl.u32 %v1700, 7
    %v1702 = vsub.s32 1, %v1701
    %v1703 = vrot.slane %v62, %v1702
    %v1770 = vunpack.c.l.b16 %v264
    %v1771 = vunpack.c.h.b16 %v264
    %v1772 = vunpack.c.l.b16 %v265
    %v1773 = vunpack.c.h.b16 %v265
    %v1774 = vunpack.c.l.b16 %v266
    %v1775 = vunpack.c.h.b16 %v266
    %v1776 = vunpack.c.l.b16 %v267
    %v1777 = vunpack.c.h.b16 %v267
    %v1778 = vunpack.c.l.b16 %v268
    %v1779 = vunpack.c.h.b16 %v268
    %v1780 = vunpack.c.l.b16 %v269
    %v1781 = vunpack.c.h.b16 %v269
    %v1782 = vunpack.c.l.b16 %v270
    %v1783 = vunpack.c.h.b16 %v270
    %v1784 = vunpack.c.l.b16 %v271
    %v1785 = vunpack.c.h.b16 %v271
    %v1786 = vunpack.c.l.b16 %v272
    %v1787 = vunpack.c.h.b16 %v272
    %v1788 = vunpack.c.l.b16 %v273
    %v1789 = vunpack.c.h.b16 %v273
    %v1790 = vunpack.c.l.b16 %v274
    %v1791 = vunpack.c.h.b16 %v274
    %v1792 = vunpack.c.l.b16 %v275
    %v1793 = vunpack.c.h.b16 %v275
    %v1794 = vunpack.c.l.b16 %v276
    %v1795 = vunpack.c.h.b16 %v276
    %v1796 = vunpack.c.l.b16 %v277
    %v1797 = vunpack.c.h.b16 %v277
    %v1798 = vunpack.c.l.b16 %v278
    %v1799 = vunpack.c.h.b16 %v278
    %v1800 = vunpack.c.l.b16 %v279
    %v1801 = vunpack.c.h.b16 %v279
    %v1802 = vunpack.c.l.b16 %v280
    %v1803 = vunpack.c.h.b16 %v280
    %v1804 = vunpack.c.l.b16 %v281
    %v1805 = vunpack.c.h.b16 %v281
    %v1806 = vunpack.c.l.b16 %v282
    %v1807 = vunpack.c.h.b16 %v282
    %v1808 = vunpack.c.l.b16 %v283
    %v1809 = vunpack.c.h.b16 %v283
    %v1810 = vunpack.c.l.b16 %v284
    %v1811 = vunpack.c.h.b16 %v284
    %v1812 = vunpack.c.l.b16 %v285
    %v1813 = vunpack.c.h.b16 %v285
    %v1814 = vunpack.c.l.b16 %v286
    %v1815 = vunpack.c.h.b16 %v286
    %v1816 = vunpack.c.l.b16 %v287
    %v1817 = vunpack.c.h.b16 %v287
    %v1818 = vunpack.c.l.b16 %v288
    %v1819 = vunpack.c.h.b16 %v288
    %v1820 = vunpack.c.l.b16 %v289
    %v1821 = vunpack.c.h.b16 %v289
    %v1822 = vunpack.c.l.b16 %v290
    %v1823 = vunpack.c.h.b16 %v290
    %v1824 = vunpack.c.l.b16 %v291
    %v1825 = vunpack.c.h.b16 %v291
    %v1826 = vunpack.c.l.b16 %v292
    %v1827 = vunpack.c.h.b16 %v292
    %v1828 = vunpack.c.l.b16 %v293
    %v1829 = vunpack.c.h.b16 %v293
    %v1830 = vunpack.c.l.b16 %v294
    %v1831 = vunpack.c.h.b16 %v294
    %v1832 = vunpack.c.l.b16 %v295
    %v1833 = vunpack.c.h.b16 %v295
    %v1834 = vunpack.c.l.b16 %v296
    %v1835 = vunpack.c.h.b16 %v296
    %v1836 = vunpack.c.l.b16 %v297
    %v1837 = vunpack.c.h.b16 %v297
    %v1838 = vunpack.c.l.b16 %v298
    %v1839 = vunpack.c.h.b16 %v298
    %v1840 = vunpack.c.l.b16 %v299
    %v1841 = vunpack.c.h.b16 %v299
    %v1842 = vunpack.c.l.b16 %v300
    %v1843 = vunpack.c.h.b16 %v300
    %v1844 = vunpack.c.l.b16 %v301
    %v1845 = vunpack.c.h.b16 %v301
    %v1846 = vunpack.c.l.b16 %v302
    %v1847 = vunpack.c.h.b16 %v302
    %v1848 = vunpack.c.l.b16 %v303
    %v1849 = vunpack.c.h.b16 %v303
    %v1850 = vunpack.c.l.b16 %v304
    %v1851 = vunpack.c.h.b16 %v304
    %v1852 = vunpack.c.l.b16 %v305
    %v1853 = vunpack.c.h.b16 %v305
    %v1854 = vunpack.c.l.b16 %v306
    %v1855 = vunpack.c.h.b16 %v306
    %v1856 = vunpack.c.l.b16 %v307
    %v1857 = vunpack.c.h.b16 %v307
    %v1858 = vunpack.c.l.b16 %v308
    %v1859 = vunpack.c.h.b16 %v308
    %v1860 = vunpack.c.l.b16 %v309
    %v1861 = vunpack.c.h.b16 %v309
    %v1862 = vunpack.c.l.b16 %v310
    %v1863 = vunpack.c.h.b16 %v310
    %v1864 = vunpack.c.l.b16 %v311
    %v1865 = vunpack.c.h.b16 %v311
    %v1866 = vunpack.c.l.b16 %v312
    %v1867 = vunpack.c.h.b16 %v312
    %v1868 = vunpack.c.l.b16 %v313
    %v1869 = vunpack.c.h.b16 %v313
    %v1870 = vunpack.c.l.b16 %v314
    %v1871 = vunpack.c.h.b16 %v314
    %v1872 = vunpack.c.l.b16 %v315
    %v1873 = vunpack.c.h.b16 %v315
    %v1874 = vunpack.c.l.b16 %v316
    %v1875 = vunpack.c.h.b16 %v316
    %v1876 = vunpack.c.l.b16 %v317
    %v1877 = vunpack.c.h.b16 %v317
    %v1878 = vunpack.c.l.b16 %v318
    %v1879 = vunpack.c.h.b16 %v318
    %v1880 = vunpack.c.l.b16 %v319
    %v1881 = vunpack.c.h.b16 %v319
    %v1882 = vunpack.c.l.b16 %v320
    %v1883 = vunpack.c.h.b16 %v320
    %v1884 = vunpack.c.l.b16 %v321
    %v1885 = vunpack.c.h.b16 %v321
    %v1886 = vunpack.c.l.b16 %v322
    %v1887 = vunpack.c.h.b16 %v322
    %v1888 = vunpack.c.l.b16 %v323
    %v1889 = vunpack.c.h.b16 %v323
    %v1890 = vunpack.c.l.b16 %v324
    %v1891 = vunpack.c.h.b16 %v324
    %v1892 = vunpack.c.l.b16 %v325
    %v1893 = vunpack.c.h.b16 %v325
    %v1894 = vunpack.c.l.b16 %v326
    %v1895 = vunpack.c.h.b16 %v326
    %v1896 = vunpack.c.l.b16 %v327
    %v1897 = vunpack.c.h.b16 %v327
    %v1898 = vpack.c.b16 %v1772, %v1770
    %v1899 = vpack.c.b16 %v1773, %v1771
    %v1900 = vpack.c.b16 %v1776, %v1774
    %v1901 = vpack.c.b16 %v1777, %v1775
    %v1902 = vpack.c.b16 %v1780, %v1778
    %v1903 = vpack.c.b16 %v1781, %v1779
    %v1904 = vpack.c.b16 %v1784, %v1782
    %v1905 = vpack.c.b16 %v1785, %v1783
    %v1906 = vpack.c.b16 %v1788, %v1786
    %v1907 = vpack.c.b16 %v1789, %v1787
    %v1908 = vpack.c.b16 %v1792, %v1790
    %v1909 = vpack.c.b16 %v1793, %v1791
    %v1910 = vpack.c.b16 %v1796, %v1794
    %v1911 = vpack.c.b16 %v1797, %v1795
    %v1912 = vpack.c.b16 %v1800, %v1798
    %v1913 = vpack.c.b16 %v1801, %v1799
    %v1914 = vpack.c.b16 %v1804, %v1802
    %v1915 = vpack.c.b16 %v1805, %v1803
    %v1916 = vpack.c.b16 %v1808, %v1806
    %v1917 = vpack.c.b16 %v1809, %v1807
    %v1918 = vpack.c.b16 %v1812, %v1810
    %v1919 = vpack.c.b16 %v1813, %v1811
    %v1920 = vpack.c.b16 %v1816, %v1814
    %v1921 = vpack.c.b16 %v1817, %v1815
    %v1922 = vpack.c.b16 %v1820, %v1818
    %v1923 = vpack.c.b16 %v1821, %v1819
    %v1924 = vpack.c.b16 %v1824, %v1822
    %v1925 = vpack.c.b16 %v1825, %v1823
    %v1926 = vpack.c.b16 %v1828, %v1826
    %v1927 = vpack.c.b16 %v1829, %v1827
    %v1928 = vpack.c.b16 %v1832, %v1830
    %v1929 = vpack.c.b16 %v1833, %v1831
    %v1930 = vpack.c.b16 %v1836, %v1834
    %v1931 = vpack.c.b16 %v1837, %v1835
    %v1932 = vpack.c.b16 %v1840, %v1838
    %v1933 = vpack.c.b16 %v1841, %v1839
    %v1934 = vpack.c.b16 %v1844, %v1842
    %v1935 = vpack.c.b16 %v1845, %v1843
    %v1936 = vpack.c.b16 %v1848, %v1846
    %v1937 = vpack.c.b16 %v1849, %v1847
    %v1938 = vpack.c.b16 %v1852, %v1850
    %v1939 = vpack.c.b16 %v1853, %v1851
    %v1940 = vpack.c.b16 %v1856, %v1854
    %v1941 = vpack.c.b16 %v1857, %v1855
    %v1942 = vpack.c.b16 %v1860, %v1858
    %v1943 = vpack.c.b16 %v1861, %v1859
    %v1944 = vpack.c.b16 %v1864, %v1862
    %v1945 = vpack.c.b16 %v1865, %v1863
    %v1946 = vpack.c.b16 %v1868, %v1866
    %v1947 = vpack.c.b16 %v1869, %v1867
    %v1948 = vpack.c.b16 %v1872, %v1870
    %v1949 = vpack.c.b16 %v1873, %v1871
    %v1950 = vpack.c.b16 %v1876, %v1874
    %v1951 = vpack.c.b16 %v1877, %v1875
    %v1952 = vpack.c.b16 %v1880, %v1878
    %v1953 = vpack.c.b16 %v1881, %v1879
    %v1954 = vpack.c.b16 %v1884, %v1882
    %v1955 = vpack.c.b16 %v1885, %v1883
    %v1956 = vpack.c.b16 %v1888, %v1886
    %v1957 = vpack.c.b16 %v1889, %v1887
    %v1958 = vpack.c.b16 %v1892, %v1890
    %v1959 = vpack.c.b16 %v1893, %v1891
    %v1960 = vpack.c.b16 %v1896, %v1894
    %v1961 = vpack.c.b16 %v1897, %v1895
    %2026 = vmatprep.subr.bf16.mxu0 %v1899
    %2027 = vmatpush1.bf16.msra.mxu0 %v1898
    %2028 = vmatprep.subr.bf16.mxu0 %v1901
    %2029 = vmatpush1.bf16.msra.mxu0 %v1900
    %2030 = vmatprep.subr.bf16.mxu0 %v1903
    %2031 = vmatpush1.bf16.msra.mxu0 %v1902
    %2032 = vmatprep.subr.bf16.mxu0 %v1905
    %2033 = vmatpush1.bf16.msra.mxu0 %v1904
    %2034 = vmatprep.subr.bf16.mxu0 %v1907
    %2035 = vmatpush1.bf16.msra.mxu0 %v1906
    %2036 = vmatprep.subr.bf16.mxu0 %v1909
    %2037 = vmatpush1.bf16.msra.mxu0 %v1908
    %2038 = vmatprep.subr.bf16.mxu0 %v1911
    %2039 = vmatpush1.bf16.msra.mxu0 %v1910
    %2040 = vmatprep.subr.bf16.mxu0 %v1913
    %2041 = vmatpush1.bf16.msra.mxu0 %v1912
    %2042 = vmatprep.subr.bf16.mxu0 %v1915
    %2043 = vmatpush1.bf16.msra.mxu0 %v1914
    %2044 = vmatprep.subr.bf16.mxu0 %v1917
    %2045 = vmatpush1.bf16.msra.mxu0 %v1916
    %2046 = vmatprep.subr.bf16.mxu0 %v1919
    %2047 = vmatpush1.bf16.msra.mxu0 %v1918
    %2048 = vmatprep.subr.bf16.mxu0 %v1921
    %2049 = vmatpush1.bf16.msra.mxu0 %v1920
    %2050 = vmatprep.subr.bf16.mxu0 %v1923
    %2051 = vmatpush1.bf16.msra.mxu0 %v1922
    %2052 = vmatprep.subr.bf16.mxu0 %v1925
    %2053 = vmatpush1.bf16.msra.mxu0 %v1924
    %2054 = vmatprep.subr.bf16.mxu0 %v1927
    %2055 = vmatpush1.bf16.msra.mxu0 %v1926
    %2056 = vmatprep.subr.bf16.mxu0 %v1929
    %2057 = vmatpush1.bf16.msra.mxu0 %v1928
    %2058 = vmatprep.mubr.bf16.mxu0 %v1692
    %2059 = vmatmul.mubr.bf16.gmra.mrb[0].mxu0 %v1691
    %v2060 = vpop.f32.mrb[0].mxu0
    %v2061 = vadd.f32 %v1699, %v2060
    %v2062 = vpop.f32.mrb[0].mxu0
    %v2063 = vadd.f32 %v1703, %v2062
    %v2064 = vpop.f32.mrb[0].mxu0
    %v2065 = vadd.f32 %v1699, %v2064
    %v2066 = vpop.f32.mrb[0].mxu0
    %v2067 = vadd.f32 %v1703, %v2066
    %2068 = vdwg.mxu0
    %2069 = vmatprep.subr.bf16.mxu0 %v1931
    %2070 = vmatpush1.bf16.msra.mxu0 %v1930
    %2071 = vmatprep.subr.bf16.mxu0 %v1933
    %2072 = vmatpush1.bf16.msra.mxu0 %v1932
    %2073 = vmatprep.subr.bf16.mxu0 %v1935
    %2074 = vmatpush1.bf16.msra.mxu0 %v1934
    %2075 = vmatprep.subr.bf16.mxu0 %v1937
    %2076 = vmatpush1.bf16.msra.mxu0 %v1936
    %2077 = vmatprep.subr.bf16.mxu0 %v1939
    %2078 = vmatpush1.bf16.msra.mxu0 %v1938
    %2079 = vmatprep.subr.bf16.mxu0 %v1941
    %2080 = vmatpush1.bf16.msra.mxu0 %v1940
    %2081 = vmatprep.subr.bf16.mxu0 %v1943
    %2082 = vmatpush1.bf16.msra.mxu0 %v1942
    %2083 = vmatprep.subr.bf16.mxu0 %v1945
    %2084 = vmatpush1.bf16.msra.mxu0 %v1944
    %2085 = vmatprep.subr.bf16.mxu0 %v1947
    %2086 = vmatpush1.bf16.msra.mxu0 %v1946
    %2087 = vmatprep.subr.bf16.mxu0 %v1949
    %2088 = vmatpush1.bf16.msra.mxu0 %v1948
    %2089 = vmatprep.subr.bf16.mxu0 %v1951
    %2090 = vmatpush1.bf16.msra.mxu0 %v1950
    %2091 = vmatprep.subr.bf16.mxu0 %v1953
    %2092 = vmatpush1.bf16.msra.mxu0 %v1952
    %2093 = vmatprep.subr.bf16.mxu0 %v1955
    %2094 = vmatpush1.bf16.msra.mxu0 %v1954
    %2095 = vmatprep.subr.bf16.mxu0 %v1957
    %2096 = vmatpush1.bf16.msra.mxu0 %v1956
    %2097 = vmatprep.subr.bf16.mxu0 %v1959
    %2098 = vmatpush1.bf16.msra.mxu0 %v1958
    %2099 = vmatprep.subr.bf16.mxu0 %v1961
    %2100 = vmatpush1.bf16.msra.mxu0 %v1960
    %2101 = vmatprep.mubr.bf16.mxu0 %v1694
    %2102 = vmatmul.mubr.bf16.gmra.mrb[0].mxu0 %v1693
    %v2103 = vpop.f32.mrb[0].mxu0
    %v2104 = vadd.f32 %v2061, %v2103
    %v2105 = vpop.f32.mrb[0].mxu0
    %v2106 = vadd.f32 %v2063, %v2105
    %v2107 = vpop.f32.mrb[0].mxu0
    %v2108 = vadd.f32 %v2065, %v2107
    %v2109 = vpop.f32.mrb[0].mxu0
    %v2110 = vadd.f32 %v2067, %v2109
    %2111 = vdwg.mxu0
    %v2112 = vmax.f32 %v2104, 0.0
    %v2113 = vmax.f32 %v2106, 0.0
    %v2114 = vmax.f32 %v2108, 0.0
    %v2115 = vmax.f32 %v2110, 0.0
    %v2117 = vlaneseq
    %v2118 = vshrl.u32 %v2117, 7
    %v2119 = vsub.s32 0, %v2118
    %v2120 = vrot.slane %v66, %v2119
    %v2121 = vlaneseq
    %v2122 = vshrl.u32 %v2121, 7
    %v2123 = vsub.s32 1, %v2122
    %v2124 = vrot.slane %v66, %v2123
    %v2127 = vmul.f32 %v2112, %v2120
    %v2128 = vmul.f32 %v2113, %v2124
    %v2129 = vmul.f32 %v2114, %v2120
    %v2130 = vmul.f32 %v2115, %v2124
    %v2131 = vadd.f32 %v2127, %v2128
    %2132 = vadd.xlane.f32.xlu0 %v2131
    %v2133 = vpop.xlane.xlu0 %2132
    %v2134 = vadd.f32 %v2129, %v2130
    %2135 = vadd.xlane.f32.xlu0 %v2134
    %v2136 = vpop.xlane.xlu0 %2135
    %v2137 = vadd.f32 %v2133, %v69
    %v2138 = vadd.f32 %v2136, %v69
    %v2139 = vxor.u32 %v2137, 2147483648
    %v2140 = vxor.u32 %v2138, 2147483648
    %v2141 = vmul.f32 %v2139, 1.442695
    %v2142 = vpow.pop %v2141
    %v2143 = vmul.f32 %v2140, 1.442695
    %v2144 = vpow.pop %v2143
    %v2145 = vadd.f32 %v2142, 1.0
    %v2146 = vadd.f32 %v2144, 1.0
    %v2147 = vrcp.pop %v2145
    %v2148 = vmul.f32 1.0, %v2147
    %v2149 = vrcp.pop %v2146
    %v2150 = vmul.f32 1.0, %v2149
    %s2151 = smul.u32 0, 16
    %v2152 = vlaneseq
    %v2153 = vshrl.u32 %v2152, 7
    %v2154 = vadd.s32 %v2153, 8
    %v2155 = vstv %s2151
    %v2156 = vadd.s32 %v2155, %v2153
    %v2157 = vadd.s32 %v2155, %v2154
    %vm2158 = vcmp.lt.s32.totalorder %v2156, 8
    %vm2159 = vcmp.lt.s32.totalorder %v2157, 8
    %v2160 = vsel %vm2158, 1, 0
    %v2161 = vsel %vm2159, 1, 0
    %v2162 = vcvt.s32.f32 %v2160
    %v2163 = vcvt.s32.f32 %v2161
    %v2164 = vsub.f32 %v2148, %v410
    %v2165 = vsub.f32 %v2150, %v411
    %v2166 = vmul.f32 %v2164, %v2164
    %v2167 = vmul.f32 %v2165, %v2165
    %v2168 = vmul.f32 %v2166, %v2162
    %v2169 = vmul.f32 %v2167, %v2163
    %vm2170 = vcmask 7168
    %v2171 = vsel %vm2170, %v2168, 0.0
    %v2172 = vsel %vm2170, %v2169, 0.0
    %v2173 = vadd.f32 %v2171, %v2172
    %2174 = vadd.xlane.f32.xlu0 %v2173
    %v2175 = vpop.xlane.xlu0 %2174
    %v2176 = vrot.slane %v2175, 4
    %v2177 = vadd.f32 %v2175, %v2176
    %v2178 = vrot.slane %v2177, 2
    %v2179 = vadd.f32 %v2177, %v2178
    %v2180 = vrot.slane %v2179, 1
    %v2181 = vadd.f32 %v2179, %v2180
    %s2182 = vtos %v2181
    %2184 = vset.pattern.permute.xlu0 0
    %2185 = vperm.xlu0 %2184, %v2148
    %v2186 = vpop.permute.xlu0 %2185
    %2189 = vset.pattern.permute.xlu0 0
    %2190 = vperm.xlu0 %2189, %v2150
    %v2191 = vpop.permute.xlu0 %2190
    %v2194 = vlaneseq
    %v2195 = vshrl.u32 %v2194, 7
    %v2196 = vsub.s32 0, %v2195
    %v2197 = vrot.slane %v60, %v2196
    %v2198 = vlaneseq
    %v2199 = vshrl.u32 %v2198, 7
    %v2200 = vsub.s32 1, %v2199
    %v2201 = vrot.slane %v60, %v2200
    %v2202 = vlaneseq
    %v2203 = vshrl.u32 %v2202, 7
    %v2204 = vsub.s32 2, %v2203
    %v2205 = vrot.slane %v60, %v2204
    %v2206 = vlaneseq
    %v2207 = vshrl.u32 %v2206, 7
    %v2208 = vsub.s32 3, %v2207
    %v2209 = vrot.slane %v60, %v2208
    %v2214 = vmul.f32 %v2186, %v2197
    %v2215 = vmul.f32 %v2186, %v2201
    %v2216 = vmul.f32 %v2186, %v2205
    %v2217 = vmul.f32 %v2186, %v2209
    %v2218 = vmul.f32 %v2191, %v2197
    %v2219 = vmul.f32 %v2191, %v2201
    %v2220 = vmul.f32 %v2191, %v2205
    %v2221 = vmul.f32 %v2191, %v2209
    %v2223 = vlaneseq
    %v2224 = vshrl.u32 %v2223, 7
    %v2225 = vsub.s32 0, %v2224
    %v2226 = vrot.slane %v58, %v2225
    %v2227 = vlaneseq
    %v2228 = vshrl.u32 %v2227, 7
    %v2229 = vsub.s32 1, %v2228
    %v2230 = vrot.slane %v58, %v2229
    %v2231 = vlaneseq
    %v2232 = vshrl.u32 %v2231, 7
    %v2233 = vsub.s32 2, %v2232
    %v2234 = vrot.slane %v58, %v2233
    %v2235 = vlaneseq
    %v2236 = vshrl.u32 %v2235, 7
    %v2237 = vsub.s32 3, %v2236
    %v2238 = vrot.slane %v58, %v2237
    %v2243 = vadd.f32 %v2214, %v2226
    %v2244 = vadd.f32 %v2215, %v2230
    %v2245 = vadd.f32 %v2216, %v2234
    %v2246 = vadd.f32 %v2217, %v2238
    %v2247 = vadd.f32 %v2218, %v2226
    %v2248 = vadd.f32 %v2219, %v2230
    %v2249 = vadd.f32 %v2220, %v2234
    %v2250 = vadd.f32 %v2221, %v2238
    %v2251 = vmax.f32 %v2243, 0.0
    %v2252 = vmax.f32 %v2244, 0.0
    %v2253 = vmax.f32 %v2245, 0.0
    %v2254 = vmax.f32 %v2246, 0.0
    %v2255 = vmax.f32 %v2247, 0.0
    %v2256 = vmax.f32 %v2248, 0.0
    %v2257 = vmax.f32 %v2249, 0.0
    %v2258 = vmax.f32 %v2250, 0.0
    %v2259 = vpack.c.bf16 %v2255, %v2251
    %v2260 = vpack.c.bf16 %v2256, %v2252
    %v2261 = vpack.c.bf16 %v2257, %v2253
    %v2262 = vpack.c.bf16 %v2258, %v2254
    %v2264 = vlaneseq
    %v2265 = vshrl.u32 %v2264, 7
    %v2266 = vsub.s32 0, %v2265
    %v2267 = vrot.slane %v64, %v2266
    %v2268 = vlaneseq
    %v2269 = vshrl.u32 %v2268, 7
    %v2270 = vsub.s32 1, %v2269
    %v2271 = vrot.slane %v64, %v2270
    %v2338 = vunpack.c.l.b16 %v328
    %v2339 = vunpack.c.h.b16 %v328
    %v2340 = vunpack.c.l.b16 %v329
    %v2341 = vunpack.c.h.b16 %v329
    %v2342 = vunpack.c.l.b16 %v330
    %v2343 = vunpack.c.h.b16 %v330
    %v2344 = vunpack.c.l.b16 %v331
    %v2345 = vunpack.c.h.b16 %v331
    %v2346 = vunpack.c.l.b16 %v332
    %v2347 = vunpack.c.h.b16 %v332
    %v2348 = vunpack.c.l.b16 %v333
    %v2349 = vunpack.c.h.b16 %v333
    %v2350 = vunpack.c.l.b16 %v334
    %v2351 = vunpack.c.h.b16 %v334
    %v2352 = vunpack.c.l.b16 %v335
    %v2353 = vunpack.c.h.b16 %v335
    %v2354 = vunpack.c.l.b16 %v336
    %v2355 = vunpack.c.h.b16 %v336
    %v2356 = vunpack.c.l.b16 %v337
    %v2357 = vunpack.c.h.b16 %v337
    %v2358 = vunpack.c.l.b16 %v338
    %v2359 = vunpack.c.h.b16 %v338
    %v2360 = vunpack.c.l.b16 %v339
    %v2361 = vunpack.c.h.b16 %v339
    %v2362 = vunpack.c.l.b16 %v340
    %v2363 = vunpack.c.h.b16 %v340
    %v2364 = vunpack.c.l.b16 %v341
    %v2365 = vunpack.c.h.b16 %v341
    %v2366 = vunpack.c.l.b16 %v342
    %v2367 = vunpack.c.h.b16 %v342
    %v2368 = vunpack.c.l.b16 %v343
    %v2369 = vunpack.c.h.b16 %v343
    %v2370 = vunpack.c.l.b16 %v344
    %v2371 = vunpack.c.h.b16 %v344
    %v2372 = vunpack.c.l.b16 %v345
    %v2373 = vunpack.c.h.b16 %v345
    %v2374 = vunpack.c.l.b16 %v346
    %v2375 = vunpack.c.h.b16 %v346
    %v2376 = vunpack.c.l.b16 %v347
    %v2377 = vunpack.c.h.b16 %v347
    %v2378 = vunpack.c.l.b16 %v348
    %v2379 = vunpack.c.h.b16 %v348
    %v2380 = vunpack.c.l.b16 %v349
    %v2381 = vunpack.c.h.b16 %v349
    %v2382 = vunpack.c.l.b16 %v350
    %v2383 = vunpack.c.h.b16 %v350
    %v2384 = vunpack.c.l.b16 %v351
    %v2385 = vunpack.c.h.b16 %v351
    %v2386 = vunpack.c.l.b16 %v352
    %v2387 = vunpack.c.h.b16 %v352
    %v2388 = vunpack.c.l.b16 %v353
    %v2389 = vunpack.c.h.b16 %v353
    %v2390 = vunpack.c.l.b16 %v354
    %v2391 = vunpack.c.h.b16 %v354
    %v2392 = vunpack.c.l.b16 %v355
    %v2393 = vunpack.c.h.b16 %v355
    %v2394 = vunpack.c.l.b16 %v356
    %v2395 = vunpack.c.h.b16 %v356
    %v2396 = vunpack.c.l.b16 %v357
    %v2397 = vunpack.c.h.b16 %v357
    %v2398 = vunpack.c.l.b16 %v358
    %v2399 = vunpack.c.h.b16 %v358
    %v2400 = vunpack.c.l.b16 %v359
    %v2401 = vunpack.c.h.b16 %v359
    %v2402 = vunpack.c.l.b16 %v360
    %v2403 = vunpack.c.h.b16 %v360
    %v2404 = vunpack.c.l.b16 %v361
    %v2405 = vunpack.c.h.b16 %v361
    %v2406 = vunpack.c.l.b16 %v362
    %v2407 = vunpack.c.h.b16 %v362
    %v2408 = vunpack.c.l.b16 %v363
    %v2409 = vunpack.c.h.b16 %v363
    %v2410 = vunpack.c.l.b16 %v364
    %v2411 = vunpack.c.h.b16 %v364
    %v2412 = vunpack.c.l.b16 %v365
    %v2413 = vunpack.c.h.b16 %v365
    %v2414 = vunpack.c.l.b16 %v366
    %v2415 = vunpack.c.h.b16 %v366
    %v2416 = vunpack.c.l.b16 %v367
    %v2417 = vunpack.c.h.b16 %v367
    %v2418 = vunpack.c.l.b16 %v368
    %v2419 = vunpack.c.h.b16 %v368
    %v2420 = vunpack.c.l.b16 %v369
    %v2421 = vunpack.c.h.b16 %v369
    %v2422 = vunpack.c.l.b16 %v370
    %v2423 = vunpack.c.h.b16 %v370
    %v2424 = vunpack.c.l.b16 %v371
    %v2425 = vunpack.c.h.b16 %v371
    %v2426 = vunpack.c.l.b16 %v372
    %v2427 = vunpack.c.h.b16 %v372
    %v2428 = vunpack.c.l.b16 %v373
    %v2429 = vunpack.c.h.b16 %v373
    %v2430 = vunpack.c.l.b16 %v374
    %v2431 = vunpack.c.h.b16 %v374
    %v2432 = vunpack.c.l.b16 %v375
    %v2433 = vunpack.c.h.b16 %v375
    %v2434 = vunpack.c.l.b16 %v376
    %v2435 = vunpack.c.h.b16 %v376
    %v2436 = vunpack.c.l.b16 %v377
    %v2437 = vunpack.c.h.b16 %v377
    %v2438 = vunpack.c.l.b16 %v378
    %v2439 = vunpack.c.h.b16 %v378
    %v2440 = vunpack.c.l.b16 %v379
    %v2441 = vunpack.c.h.b16 %v379
    %v2442 = vunpack.c.l.b16 %v380
    %v2443 = vunpack.c.h.b16 %v380
    %v2444 = vunpack.c.l.b16 %v381
    %v2445 = vunpack.c.h.b16 %v381
    %v2446 = vunpack.c.l.b16 %v382
    %v2447 = vunpack.c.h.b16 %v382
    %v2448 = vunpack.c.l.b16 %v383
    %v2449 = vunpack.c.h.b16 %v383
    %v2450 = vunpack.c.l.b16 %v384
    %v2451 = vunpack.c.h.b16 %v384
    %v2452 = vunpack.c.l.b16 %v385
    %v2453 = vunpack.c.h.b16 %v385
    %v2454 = vunpack.c.l.b16 %v386
    %v2455 = vunpack.c.h.b16 %v386
    %v2456 = vunpack.c.l.b16 %v387
    %v2457 = vunpack.c.h.b16 %v387
    %v2458 = vunpack.c.l.b16 %v388
    %v2459 = vunpack.c.h.b16 %v388
    %v2460 = vunpack.c.l.b16 %v389
    %v2461 = vunpack.c.h.b16 %v389
    %v2462 = vunpack.c.l.b16 %v390
    %v2463 = vunpack.c.h.b16 %v390
    %v2464 = vunpack.c.l.b16 %v391
    %v2465 = vunpack.c.h.b16 %v391
    %v2466 = vpack.c.b16 %v2340, %v2338
    %v2467 = vpack.c.b16 %v2341, %v2339
    %v2468 = vpack.c.b16 %v2344, %v2342
    %v2469 = vpack.c.b16 %v2345, %v2343
    %v2470 = vpack.c.b16 %v2348, %v2346
    %v2471 = vpack.c.b16 %v2349, %v2347
    %v2472 = vpack.c.b16 %v2352, %v2350
    %v2473 = vpack.c.b16 %v2353, %v2351
    %v2474 = vpack.c.b16 %v2356, %v2354
    %v2475 = vpack.c.b16 %v2357, %v2355
    %v2476 = vpack.c.b16 %v2360, %v2358
    %v2477 = vpack.c.b16 %v2361, %v2359
    %v2478 = vpack.c.b16 %v2364, %v2362
    %v2479 = vpack.c.b16 %v2365, %v2363
    %v2480 = vpack.c.b16 %v2368, %v2366
    %v2481 = vpack.c.b16 %v2369, %v2367
    %v2482 = vpack.c.b16 %v2372, %v2370
    %v2483 = vpack.c.b16 %v2373, %v2371
    %v2484 = vpack.c.b16 %v2376, %v2374
    %v2485 = vpack.c.b16 %v2377, %v2375
    %v2486 = vpack.c.b16 %v2380, %v2378
    %v2487 = vpack.c.b16 %v2381, %v2379
    %v2488 = vpack.c.b16 %v2384, %v2382
    %v2489 = vpack.c.b16 %v2385, %v2383
    %v2490 = vpack.c.b16 %v2388, %v2386
    %v2491 = vpack.c.b16 %v2389, %v2387
    %v2492 = vpack.c.b16 %v2392, %v2390
    %v2493 = vpack.c.b16 %v2393, %v2391
    %v2494 = vpack.c.b16 %v2396, %v2394
    %v2495 = vpack.c.b16 %v2397, %v2395
    %v2496 = vpack.c.b16 %v2400, %v2398
    %v2497 = vpack.c.b16 %v2401, %v2399
    %v2498 = vpack.c.b16 %v2404, %v2402
    %v2499 = vpack.c.b16 %v2405, %v2403
    %v2500 = vpack.c.b16 %v2408, %v2406
    %v2501 = vpack.c.b16 %v2409, %v2407
    %v2502 = vpack.c.b16 %v2412, %v2410
    %v2503 = vpack.c.b16 %v2413, %v2411
    %v2504 = vpack.c.b16 %v2416, %v2414
    %v2505 = vpack.c.b16 %v2417, %v2415
    %v2506 = vpack.c.b16 %v2420, %v2418
    %v2507 = vpack.c.b16 %v2421, %v2419
    %v2508 = vpack.c.b16 %v2424, %v2422
    %v2509 = vpack.c.b16 %v2425, %v2423
    %v2510 = vpack.c.b16 %v2428, %v2426
    %v2511 = vpack.c.b16 %v2429, %v2427
    %v2512 = vpack.c.b16 %v2432, %v2430
    %v2513 = vpack.c.b16 %v2433, %v2431
    %v2514 = vpack.c.b16 %v2436, %v2434
    %v2515 = vpack.c.b16 %v2437, %v2435
    %v2516 = vpack.c.b16 %v2440, %v2438
    %v2517 = vpack.c.b16 %v2441, %v2439
    %v2518 = vpack.c.b16 %v2444, %v2442
    %v2519 = vpack.c.b16 %v2445, %v2443
    %v2520 = vpack.c.b16 %v2448, %v2446
    %v2521 = vpack.c.b16 %v2449, %v2447
    %v2522 = vpack.c.b16 %v2452, %v2450
    %v2523 = vpack.c.b16 %v2453, %v2451
    %v2524 = vpack.c.b16 %v2456, %v2454
    %v2525 = vpack.c.b16 %v2457, %v2455
    %v2526 = vpack.c.b16 %v2460, %v2458
    %v2527 = vpack.c.b16 %v2461, %v2459
    %v2528 = vpack.c.b16 %v2464, %v2462
    %v2529 = vpack.c.b16 %v2465, %v2463
    %2594 = vmatprep.subr.bf16.mxu0 %v2467
    %2595 = vmatpush1.bf16.msra.mxu0 %v2466
    %2596 = vmatprep.subr.bf16.mxu0 %v2469
    %2597 = vmatpush1.bf16.msra.mxu0 %v2468
    %2598 = vmatprep.subr.bf16.mxu0 %v2471
    %2599 = vmatpush1.bf16.msra.mxu0 %v2470
    %2600 = vmatprep.subr.bf16.mxu0 %v2473
    %2601 = vmatpush1.bf16.msra.mxu0 %v2472
    %2602 = vmatprep.subr.bf16.mxu0 %v2475
    %2603 = vmatpush1.bf16.msra.mxu0 %v2474
    %2604 = vmatprep.subr.bf16.mxu0 %v2477
    %2605 = vmatpush1.bf16.msra.mxu0 %v2476
    %2606 = vmatprep.subr.bf16.mxu0 %v2479
    %2607 = vmatpush1.bf16.msra.mxu0 %v2478
    %2608 = vmatprep.subr.bf16.mxu0 %v2481
    %2609 = vmatpush1.bf16.msra.mxu0 %v2480
    %2610 = vmatprep.subr.bf16.mxu0 %v2483
    %2611 = vmatpush1.bf16.msra.mxu0 %v2482
    %2612 = vmatprep.subr.bf16.mxu0 %v2485
    %2613 = vmatpush1.bf16.msra.mxu0 %v2484
    %2614 = vmatprep.subr.bf16.mxu0 %v2487
    %2615 = vmatpush1.bf16.msra.mxu0 %v2486
    %2616 = vmatprep.subr.bf16.mxu0 %v2489
    %2617 = vmatpush1.bf16.msra.mxu0 %v2488
    %2618 = vmatprep.subr.bf16.mxu0 %v2491
    %2619 = vmatpush1.bf16.msra.mxu0 %v2490
    %2620 = vmatprep.subr.bf16.mxu0 %v2493
    %2621 = vmatpush1.bf16.msra.mxu0 %v2492
    %2622 = vmatprep.subr.bf16.mxu0 %v2495
    %2623 = vmatpush1.bf16.msra.mxu0 %v2494
    %2624 = vmatprep.subr.bf16.mxu0 %v2497
    %2625 = vmatpush1.bf16.msra.mxu0 %v2496
    %2626 = vmatprep.mubr.bf16.mxu0 %v2260
    %2627 = vmatmul.mubr.bf16.gmra.mrb[0].mxu0 %v2259
    %v2628 = vpop.f32.mrb[0].mxu0
    %v2629 = vadd.f32 %v2267, %v2628
    %v2630 = vpop.f32.mrb[0].mxu0
    %v2631 = vadd.f32 %v2271, %v2630
    %v2632 = vpop.f32.mrb[0].mxu0
    %v2633 = vadd.f32 %v2267, %v2632
    %v2634 = vpop.f32.mrb[0].mxu0
    %v2635 = vadd.f32 %v2271, %v2634
    %2636 = vdwg.mxu0
    %2637 = vmatprep.subr.bf16.mxu0 %v2499
    %2638 = vmatpush1.bf16.msra.mxu0 %v2498
    %2639 = vmatprep.subr.bf16.mxu0 %v2501
    %2640 = vmatpush1.bf16.msra.mxu0 %v2500
    %2641 = vmatprep.subr.bf16.mxu0 %v2503
    %2642 = vmatpush1.bf16.msra.mxu0 %v2502
    %2643 = vmatprep.subr.bf16.mxu0 %v2505
    %2644 = vmatpush1.bf16.msra.mxu0 %v2504
    %2645 = vmatprep.subr.bf16.mxu0 %v2507
    %2646 = vmatpush1.bf16.msra.mxu0 %v2506
    %2647 = vmatprep.subr.bf16.mxu0 %v2509
    %2648 = vmatpush1.bf16.msra.mxu0 %v2508
    %2649 = vmatprep.subr.bf16.mxu0 %v2511
    %2650 = vmatpush1.bf16.msra.mxu0 %v2510
    %2651 = vmatprep.subr.bf16.mxu0 %v2513
    %2652 = vmatpush1.bf16.msra.mxu0 %v2512
    %2653 = vmatprep.subr.bf16.mxu0 %v2515
    %2654 = vmatpush1.bf16.msra.mxu0 %v2514
    %2655 = vmatprep.subr.bf16.mxu0 %v2517
    %2656 = vmatpush1.bf16.msra.mxu0 %v2516
    %2657 = vmatprep.subr.bf16.mxu0 %v2519
    %2658 = vmatpush1.bf16.msra.mxu0 %v2518
    %2659 = vmatprep.subr.bf16.mxu0 %v2521
    %2660 = vmatpush1.bf16.msra.mxu0 %v2520
    %2661 = vmatprep.subr.bf16.mxu0 %v2523
    %2662 = vmatpush1.bf16.msra.mxu0 %v2522
    %2663 = vmatprep.subr.bf16.mxu0 %v2525
    %2664 = vmatpush1.bf16.msra.mxu0 %v2524
    %2665 = vmatprep.subr.bf16.mxu0 %v2527
    %2666 = vmatpush1.bf16.msra.mxu0 %v2526
    %2667 = vmatprep.subr.bf16.mxu0 %v2529
    %2668 = vmatpush1.bf16.msra.mxu0 %v2528
    %2669 = vmatprep.mubr.bf16.mxu0 %v2262
    %2670 = vmatmul.mubr.bf16.gmra.mrb[0].mxu0 %v2261
    %v2671 = vpop.f32.mrb[0].mxu0
    %v2672 = vadd.f32 %v2629, %v2671
    %v2673 = vpop.f32.mrb[0].mxu0
    %v2674 = vadd.f32 %v2631, %v2673
    %v2675 = vpop.f32.mrb[0].mxu0
    %v2676 = vadd.f32 %v2633, %v2675
    %v2677 = vpop.f32.mrb[0].mxu0
    %v2678 = vadd.f32 %v2635, %v2677
    %2679 = vdwg.mxu0
    %v2680 = vmax.f32 %v2672, 0.0
    %v2681 = vmax.f32 %v2674, 0.0
    %v2682 = vmax.f32 %v2676, 0.0
    %v2683 = vmax.f32 %v2678, 0.0
    %2684 = vmatprep.subr.mxu0 %v71
    %2685 = vmatpush1.xpose.msra.mxu0 %v70
    %2686 = vmatprep.subr.mxu0 0.0
    %2687 = vmatpush1.xpose.msra.mxu0 0.0
    %2688 = vmatprep.subr.mxu0 0.0
    %2689 = vmatpush1.xpose.msra.mxu0 0.0
    %2690 = vmatprep.subr.mxu0 0.0
    %2691 = vmatpush1.xpose.msra.mxu0 0.0
    %2692 = vmatprep.subr.mxu0 0.0
    %2693 = vmatpush1.xpose.msra.mxu0 0.0
    %2694 = vmatprep.subr.mxu0 0.0
    %2695 = vmatpush1.xpose.msra.mxu0 0.0
    %2696 = vmatprep.subr.mxu0 0.0
    %2697 = vmatpush1.xpose.msra.mxu0 0.0
    %2698 = vmatprep.subr.mxu0 0.0
    %2699 = vmatpush1.xpose.msra.mxu0 0.0
    %2700 = vmatprep.subr.mxu0 0.0
    %2701 = vmatpush1.xpose.msra.mxu0 0.0
    %2702 = vmatprep.subr.mxu0 0.0
    %2703 = vmatpush1.xpose.msra.mxu0 0.0
    %2704 = vmatprep.subr.mxu0 0.0
    %2705 = vmatpush1.xpose.msra.mxu0 0.0
    %2706 = vmatprep.subr.mxu0 0.0
    %2707 = vmatpush1.xpose.msra.mxu0 0.0
    %2708 = vmatprep.subr.mxu0 0.0
    %2709 = vmatpush1.xpose.msra.mxu0 0.0
    %2710 = vmatprep.subr.mxu0 0.0
    %2711 = vmatpush1.xpose.msra.mxu0 0.0
    %2712 = vmatprep.subr.mxu0 0.0
    %2713 = vmatpush1.xpose.msra.mxu0 0.0
    %2714 = vmatprep.subr.mxu0 0.0
    %2715 = vmatpush1.xpose.msra.mxu0 0.0
    %2716 = vmatprep.subr.mxu0 0.0
    %2717 = vmatpush1.xpose.msra.mxu0 0.0
    %2718 = vmatprep.subr.mxu0 0.0
    %2719 = vmatpush1.xpose.msra.mxu0 0.0
    %2720 = vmatprep.subr.mxu0 0.0
    %2721 = vmatpush1.xpose.msra.mxu0 0.0
    %2722 = vmatprep.subr.mxu0 0.0
    %2723 = vmatpush1.xpose.msra.mxu0 0.0
    %2724 = vmatprep.subr.mxu0 0.0
    %2725 = vmatpush1.xpose.msra.mxu0 0.0
    %2726 = vmatprep.subr.mxu0 0.0
    %2727 = vmatpush1.xpose.msra.mxu0 0.0
    %2728 = vmatprep.subr.mxu0 0.0
    %2729 = vmatpush1.xpose.msra.mxu0 0.0
    %2730 = vmatprep.subr.mxu0 0.0
    %2731 = vmatpush1.xpose.msra.mxu0 0.0
    %2732 = vmatprep.subr.mxu0 0.0
    %2733 = vmatpush1.xpose.msra.mxu0 0.0
    %2734 = vmatprep.subr.mxu0 0.0
    %2735 = vmatpush1.xpose.msra.mxu0 0.0
    %2736 = vmatprep.subr.mxu0 0.0
    %2737 = vmatpush1.xpose.msra.mxu0 0.0
    %2738 = vmatprep.subr.mxu0 0.0
    %2739 = vmatpush1.xpose.msra.mxu0 0.0
    %2740 = vmatprep.subr.mxu0 0.0
    %2741 = vmatpush1.xpose.msra.mxu0 0.0
    %2742 = vmatprep.subr.mxu0 0.0
    %2743 = vmatpush1.xpose.msra.mxu0 0.0
    %2744 = vmatprep.subr.mxu0 0.0
    %2745 = vmatpush1.xpose.msra.mxu0 0.0
    %2746 = vmatprep.subr.mxu0 0.0
    %2747 = vmatpush1.xpose.msra.mxu0 0.0
    %2748 = vmatprep.mubr.f32.mxu0 %v2681
    %2749 = vmatmul.mubr.f32.gmra.mrb[0].mxu0 %v2680
    %v2750 = vpop.f32.mrb[0].mxu0
    %v2751 = vadd.f32 %v67, %v2750
    %v2752 = vpop.f32.mrb[0].mxu0
    %2753 = vmatprep.mubr.f32.mxu0 %v2683
    %2754 = vmatmul.mubr.f32.gmra.mrb[0].mxu0 %v2682
    %v2755 = vpop.f32.mrb[0].mxu0
    %v2756 = vadd.f32 %v67, %v2755
    %v2757 = vpop.f32.mrb[0].mxu0
    %2758 = vdwg.mxu0
    %vm2759 = vcmask 31744
    %v2760 = vsel %vm2759, %v2751, -inf
    %2761 = vmax.xlane.f32.xlu0 %v2760
    %v2762 = vpop.xlane.xlu0 %2761
    %v2763 = vsel %vm2759, %v2756, -inf
    %2764 = vmax.xlane.f32.xlu0 %v2763
    %v2765 = vpop.xlane.xlu0 %2764
    %v2766 = vsub.f32 %v2751, %v2762
    %v2767 = vsub.f32 %v2756, %v2765
    %v2768 = vmul.f32 %v2766, 1.442695
    %v2769 = vpow.pop %v2768
    %v2770 = vmul.f32 %v2767, 1.442695
    %v2771 = vpow.pop %v2770
    %v2772 = vsel %vm2759, %v2769, 0.0
    %2773 = vadd.xlane.f32.xlu0 %v2772
    %v2774 = vpop.xlane.xlu0 %2773
    %v2775 = vsel %vm2759, %v2771, 0.0
    %2776 = vadd.xlane.f32.xlu0 %v2775
    %v2777 = vpop.xlane.xlu0 %2776
    %v2778 = vrcp.pop %v2774
    %v2779 = vrcp.pop %v2777
    %v2780 = vmul.f32 %v2769, %v2778
    %v2781 = vmul.f32 %v2771, %v2779
    %v2782 = vlaneseq
    %v2783 = vand.u32 %v2782, 127
    %2784 = vset.pattern.permute.xlu0 2
    %2785 = vperm.xlu0 %2784, %v412
    %v2786 = vpop.permute.xlu0 %2785
    %2787 = vset.pattern.permute.xlu0 2
    %2788 = vperm.xlu0 %2787, %v413
    %v2789 = vpop.permute.xlu0 %2788
    %vm2790 = vcmp.eq.s32.totalorder %v2783, %v2786
    %vm2791 = vcmp.eq.s32.totalorder %v2783, %v2789
    %v2792 = vsel %vm2790, 1, 0
    %v2793 = vsel %vm2791, 1, 0
    %v2794 = vcvt.s32.f32 %v2792
    %v2795 = vcvt.s32.f32 %v2793
    %v2796 = vlog2.pop %v2774
    %v2797 = vmul.f32 %v2796, 0.6931472
    %v2798 = vlog2.pop %v2777
    %v2799 = vmul.f32 %v2798, 0.6931472
    %v2800 = vsub.f32 %v2766, %v2797
    %v2801 = vsub.f32 %v2767, %v2799
    %v2802 = vmul.f32 %v2800, %v2794
    %v2803 = vmul.f32 %v2801, %v2795
    %v2804 = vsel %vm2759, %v2802, 0.0
    %2805 = vadd.xlane.f32.xlu0 %v2804
    %v2806 = vpop.xlane.xlu0 %2805
    %v2807 = vsel %vm2759, %v2803, 0.0
    %2808 = vadd.xlane.f32.xlu0 %v2807
    %v2809 = vpop.xlane.xlu0 %2808
    %v2810 = vmul.f32 %v2806, 1.442695
    %v2811 = vpow.pop %v2810
    %v2812 = vmul.f32 %v2809, 1.442695
    %v2813 = vpow.pop %v2812
    %v2814 = vmul.f32 %v68, %v2794
    %v2815 = vmul.f32 %v68, %v2795
    %v2816 = vsel %vm2759, %v2814, 0.0
    %2817 = vadd.xlane.f32.xlu0 %v2816
    %v2818 = vpop.xlane.xlu0 %2817
    %v2819 = vsel %vm2759, %v2815, 0.0
    %2820 = vadd.xlane.f32.xlu0 %v2819
    %v2821 = vpop.xlane.xlu0 %2820
    %v2822 = vsub.f32 0.0, %v2818
    %v2823 = vsub.f32 0.0, %v2821
    %v2824 = vsub.f32 1.0, %v2811
    %v2825 = vsub.f32 1.0, %v2813
    %v2826 = vmul.f32 %v2822, %v2824
    %v2827 = vmul.f32 %v2823, %v2825
    %v2828 = vmul.f32 %v2826, %v2824
    %v2829 = vmul.f32 %v2827, %v2825
    %v2830 = vmul.f32 %v2828, %v2806
    %v2831 = vmul.f32 %v2829, %v2809
    %v2832 = vmul.f32 %v2830, %v2162
    %v2833 = vmul.f32 %v2831, %v2163
    %v2834 = vsel %vm2170, %v2832, 0.0
    %v2835 = vsel %vm2170, %v2833, 0.0
    %v2836 = vadd.f32 %v2834, %v2835
    %2837 = vadd.xlane.f32.xlu0 %v2836
    %v2838 = vpop.xlane.xlu0 %2837
    %v2839 = vrot.slane %v2838, 4
    %v2840 = vadd.f32 %v2838, %v2839
    %v2841 = vrot.slane %v2840, 2
    %v2842 = vadd.f32 %v2840, %v2841
    %v2843 = vrot.slane %v2842, 1
    %v2844 = vadd.f32 %v2842, %v2843
    %s2845 = vtos %v2844
    %v2846 = vstv %s2845
    %v2847 = vstv %s2182
    %2848 = vrot.lane.b32.xlu0 %v2148, 4
    %v2849 = vpop.permute.xlu0 %2848
    %2850 = vrot.lane.b32.xlu0 %v2150, 4
    %v2851 = vpop.permute.xlu0 %2850
    %v2854 = vsel %vm2759, %v2780, %v2849
    %v2855 = vsel %vm2759, %v2781, %v2851
    %vm2856 = vcmask 39936
    %v2857 = vsel %vm2856, %v2854, %v2846
    %v2858 = vsel %vm2856, %v2855, %v2846
    %vm2859 = vcmask 48128
    %v2860 = vsel %vm2859, %v2857, %v2847
    %v2861 = vsel %vm2859, %v2858, %v2847
    %vm2862 = vcmask 56320
    %v2863 = vsel %vm2862, %v2860, 0.0
    %v2864 = vsel %vm2862, %v2861, 0.0
    %2865 = vxpose.xlu0.b32.start [1/16] %v2863, 128
    %2866 = vxpose.xlu0.b32.cont [2/16] %v2864, 128
    %2867 = vxpose.xlu0.b32.cont [3/16] 0.0, 128
    %2868 = vxpose.xlu0.b32.cont [4/16] 0.0, 128
    %2869 = vxpose.xlu0.b32.cont [5/16] 0.0, 128
    %2870 = vxpose.xlu0.b32.cont [6/16] 0.0, 128
    %2871 = vxpose.xlu0.b32.cont [7/16] 0.0, 128
    %2872 = vxpose.xlu0.b32.cont [8/16] 0.0, 128
    %2873 = vxpose.xlu0.b32.cont [9/16] 0.0, 128
    %2874 = vxpose.xlu0.b32.cont [10/16] 0.0, 128
    %2875 = vxpose.xlu0.b32.cont [11/16] 0.0, 128
    %2876 = vxpose.xlu0.b32.cont [12/16] 0.0, 128
    %2877 = vxpose.xlu0.b32.cont [13/16] 0.0, 128
    %2878 = vxpose.xlu0.b32.cont [14/16] 0.0, 128
    %2879 = vxpose.xlu0.b32.cont [15/16] 0.0, 128
    %2880 = vxpose.xlu0.b32.end [16/16] 0.0, 128
    %v2881 = vpop.trf.xlu0
    %v2882 = vpop.trf.xlu0
    %v2883 = vpop.trf.xlu0
    %v2884 = vpop.trf.xlu0
    %v2885 = vpop.trf.xlu0
    %v2886 = vpop.trf.xlu0
    %v2887 = vpop.trf.xlu0
    %v2888 = vpop.trf.xlu0
    %v2889 = vpop.trf.xlu0
    %v2890 = vpop.trf.xlu0
    %v2891 = vpop.trf.xlu0
    %v2892 = vpop.trf.xlu0
    %v2893 = vpop.trf.xlu0
    %v2894 = vpop.trf.xlu0
    %v2895 = vpop.trf.xlu0
    %v2896 = vpop.trf.xlu0
    %vm2897 = vcmask 130048
    %2898 = vst.msk [vmem:[#allocation8] sm:$0xff] %vm2897, %v2881
    // Predicated region
    $region26: #{tpu_custom_call.1} parent=1 // pred_check
      _
    $region27: #{tpu_custom_call.1} parent=1 // pred_check_branch
      %2900 = sbr.rel (0) target = $region29
    $region28: #{tpu_custom_call.1} parent=1 // pred_region
      %s2902 = ssub.s32 128, 128
      %2903 = vsyncadd [#allocation4], %s2902
      %s2905 = sshll.u32 [#allocation8], 4
      %s2906 = int_to_ptr.vmem [resolvable:$true] %s2905
      %2908 = dma.vmem_to_hbm [thread:$0]  %s2906, 128, %s3, [#allocation4]
    $region29: #{tpu_custom_call.1} parent=1 // pred_fallthru
      _
    // Predicated region
    $region30: #{tpu_custom_call.1} parent=1 // pred_check
      _
    $region31: #{tpu_custom_call.1} parent=1 // pred_check_branch
      %2910 = sbr.rel (0) target = $region33
    $region32: #{tpu_custom_call.1} parent=1 // pred_region
      %2911 = dma.done [#allocation4], 128
    $region33: #{tpu_custom_call.1} parent=1 // pred_fallthru
      _
    %2912 = vsyncpa [#allocation3], 1
    %2913 = vsyncpa [#allocation6], 1
    %2914 = vsyncpa [#allocation4], 1

</llo_original>
